<compile_context>
chip_gen: v7x
topology: tpu7x:2x2x1
jax: 0.10.0
libtpu: 0.0.40
codegen_flags: <defaults>
</compile_context>

<pallas_src>
import math
from functools import partial

import jax
import jax.numpy as jnp
import numpy as np
from jax import lax
from jax.experimental import pallas as pl
from jax.experimental.pallas import tpu as pltpu


def _vmem_limit_bytes():
    """Scoped VMEM limit: ~3/4 of physical, capped at 64 MiB (v7x-safe <=48 MiB)."""
    try:
        cap = int(pltpu.get_tpu_info().vmem_capacity_bytes)
        return int(min(cap * 3 // 4, 64 * 1024 * 1024))
    except Exception:
        return 32 * 1024 * 1024


def _pick_block_q(n, preferred):
    # The q-tile is the lane dim of the (C, bq) output store -> keep it a
    # multiple of 128 (lane-dense, unmasked vst) or equal to the full N.
    for c in (preferred, 512, 256, 128):
        if c and c <= n and n % c == 0 and c % 128 == 0:
            return c
    if n <= 4096:          # whole-sequence block: valid layout, fits VMEM
        return n
    raise ValueError(
        f"sequence length N={n} has no 128-multiple q-tile; a padded or "
        "streaming attention path is required for this shape.")


# ------------------------- fused attention kernel --------------------------- #

def _fused_attention_kernel(xq_ref, xkv_ref, wqkv_ref, wout_ref, bout_ref,
                            o_ref, *, heads, dim_head):
    hidden = heads * dim_head

    x_q = xq_ref[0]                      # (bq, C)  f32
    x_kv = xkv_ref[0]                    # (N,  C)  f32 (resident per batch)
    w = wqkv_ref[...]                    # (C, 3*hidden), scale folded into Q cols

    # to_qkv (1x1 conv == matmul).  Contraction dim is only C, so the f32 MXU
    # multi-pass penalty is irrelevant; keep f32 here for accuracy and cast
    # K/V to bf16 once for the big attention matmuls below.
    q = jnp.dot(x_q, w[:, :hidden], preferred_element_type=jnp.float32)
    k = jnp.dot(x_kv, w[:, hidden:2 * hidden],
                preferred_element_type=jnp.float32).astype(jnp.bfloat16)
    v = jnp.dot(x_kv, w[:, 2 * hidden:],
                preferred_element_type=jnp.float32).astype(jnp.bfloat16)

    outs = []
    for h in range(heads):
        sl = slice(h * dim_head, (h + 1) * dim_head)
        q_h = q[:, sl].astype(jnp.bfloat16)          # (bq, d)
        k_h = k[:, sl]                               # (N,  d)
        v_h = v[:, sl]                               # (N,  d)

        # QK^T: contract head dims directly (no explicit k.T), f32 accumulate.
        s = lax.dot_general(q_h, k_h, (((1,), (1,)), ((), ())),
                            preferred_element_type=jnp.float32)   # (bq, N)

        # One-shot softmax over the full resident kv length.
        m = jnp.max(s, axis=-1, keepdims=True)
        p = jnp.exp(s - m)
        l = jnp.sum(p, axis=-1, keepdims=True)
        o_h = jnp.dot(p.astype(jnp.bfloat16), v_h,
                      preferred_element_type=jnp.float32)          # (bq, d)
        outs.append(o_h * pl.reciprocal(l, approx=True))           # EUP slot

    out = jnp.concatenate(outs, axis=-1)                           # (bq, hidden)

    # to_out (1x1 conv with bias), computed transposed so the output tile is
    # (C, bq): lane width bq (multiple of 128) instead of C=8.
    y_t = lax.dot_general(wout_ref[...], out, (((1,), (1,)), ((), ())),
                          preferred_element_type=jnp.float32) + bout_ref[...]
    o_ref[0] = y_t.astype(o_ref.dtype)


def _fused_attention(x_seq, w_qkv_t, w_out, b_out, *, heads, dim_head, block_q):
    B, N, C = x_seq.shape
    hidden = heads * dim_head
    bq = _pick_block_q(N, block_q)

    kern = partial(_fused_attention_kernel, heads=heads, dim_head=dim_head)
    return pl.pallas_call(
        kern,
        out_shape=jax.ShapeDtypeStruct((B, C, N), jnp.float32),
        grid=(B, N // bq),
        in_specs=[
            # q rows of x (tiled) and the full x slab for K/V (resident:
            # its block index only changes with b, so the DMA is elided
            # across q tiles of the same batch).
            pl.BlockSpec((1, bq, C), lambda b, qi: (b, qi, 0)),
            pl.BlockSpec((1, N, C), lambda b, qi: (b, 0, 0)),
            pl.BlockSpec((C, 3 * hidden), lambda b, qi: (0, 0)),
            pl.BlockSpec((C, hidden), lambda b, qi: (0, 0)),
            pl.BlockSpec((C, 1), lambda b, qi: (0, 0)),
        ],
        out_specs=pl.BlockSpec((1, C, bq), lambda b, qi: (b, 0, qi)),
        compiler_params=pltpu.CompilerParams(
            dimension_semantics=("parallel", "parallel"),
            vmem_limit_bytes=_vmem_limit_bytes()),
    )(x_seq, x_seq, w_qkv_t, w_out, b_out)


# ------------------------------ module wrapper ------------------------------ #

def attention_forward(x, params, heads, dim_head, *, block_q=128):
    """x: (B, C, H, W) NCHW.  params = (w_qkv, w_out, b_out) with PyTorch conv
    weight shapes: w_qkv (3*hidden, C), w_out (C, hidden), b_out (C,)."""
    w_qkv, w_out, b_out = params
    B, C, H, W = x.shape
    N = H * W
    hidden = heads * dim_head
    scale = dim_head ** (-0.5)

    # Fold the softmax scale into the Q columns of the qkv projection weight.
    col_scale = jnp.concatenate([jnp.full((hidden,), scale, jnp.float32),
                                 jnp.ones((2 * hidden,), jnp.float32)])
    w_qkv_t = (w_qkv.T * col_scale[None, :]).astype(jnp.float32)   # (C, 3*hidden)

    # NCHW -> (B, N, C).  This tiny transpose is the only wrapper-side layout
    # op; the kernel emits (B, C, N) directly, so the output side is free.
    x_seq = jnp.transpose(x, (0, 2, 3, 1)).reshape(B, N, C).astype(jnp.float32)

    y = _fused_attention(x_seq, w_qkv_t,
                         w_out.astype(jnp.float32),
                         b_out.reshape(C, 1).astype(jnp.float32),
                         heads=heads, dim_head=dim_head, block_q=block_q)
    return y.reshape(B, C, H, W)


# ------------------------------ pure-JAX reference --------------------------- #

def _reference(x, params, heads, dim_head):
    w_qkv, w_out, b_out = params
    B, C, H, W = x.shape
    hidden = heads * dim_head
    scale = dim_head ** (-0.5)
    qkv = jnp.einsum('bchw,oc->bohw', x, w_qkv)                # to_qkv
    q, k, v = jnp.split(qkv, 3, axis=1)
    rearr = lambda t: t.reshape(B, heads, dim_head, H * W)     # b (h c) x y -> b h c (xy)
    q, k, v = map(rearr, (q, k, v))
    q = q * scale
    sim = jnp.einsum('bhdi,bhdj->bhij', q, k)
    attn = jax.nn.softmax(sim, axis=-1)
    out = jnp.einsum('bhij,bhdj->bhid', attn, v)
    out = jnp.transpose(out, (0, 1, 3, 2)).reshape(B, hidden, H, W)  # b h (xy) d -> b (h d) x y
    y = jnp.einsum('bchw,oc->bohw', out, w_out) + b_out.reshape(1, -1, 1, 1)
    return y


# ----------------------------------- main ----------------------------------- #

if __name__ == "__main__":
    key = jax.random.PRNGKey(0)
    B, dim, H, W = 2, 8, 16, 16        # N = 256 -> 2 q-tiles per batch
    heads, dim_head = 4, 32
    hidden = heads * dim_head

    k1, k2, k3, k4 = jax.random.split(key, 4)
    x = jax.random.normal(k1, (B, dim, H, W), jnp.float32)

    # Deterministic parameter init mirroring nn.Conv2d defaults (uniform ±1/sqrt(fan_in)).
    b_qkv = 1.0 / math.sqrt(dim)
    w_qkv = jax.random.uniform(k2, (3 * hidden, dim), jnp.float32, -b_qkv, b_qkv)
    b_o = 1.0 / math.sqrt(hidden)
    w_out = jax.random.uniform(k3, (dim, hidden), jnp.float32, -b_o, b_o)
    b_out = jax.random.uniform(k4, (dim,), jnp.float32, -b_o, b_o)
    params = (w_qkv, w_out, b_out)

    fwd = jax.jit(attention_forward, static_argnums=(2, 3))
    y = jax.block_until_ready(fwd(x, params, heads, dim_head))

    y_ref = _reference(x, params, heads, dim_head)
    # bf16 MXU operands (f32 accumulation) inside the attention core -> a
    # slightly looser tolerance than pure-f32.
    np.testing.assert_allclose(np.asarray(y), np.asarray(y_ref), rtol=5e-3, atol=5e-3)
    print("KERNEL_OK")
</pallas_src>

<mosaic_0001>
module attributes {stable_mosaic.version = 11 : i64} {
  func.func @_fused_attention_kernel(%arg0: i32, %arg1: i32, %arg2: memref<1x128x8xf32, #tpu.memory_space<vmem>>, %arg3: memref<1x256x8xf32, #tpu.memory_space<vmem>>, %arg4: memref<8x384xf32, #tpu.memory_space<vmem>>, %arg5: memref<8x128xf32, #tpu.memory_space<vmem>>, %arg6: memref<8x1xf32, #tpu.memory_space<vmem>>, %arg7: memref<1x8x128xf32, #tpu.memory_space<vmem>>) attributes {dimension_semantics = [#tpu.dimension_semantics<parallel>, #tpu.dimension_semantics<parallel>], iteration_bounds = array<i64: 2, 2>, scalar_prefetch = 0 : i64, scratch_operands = 0 : i64, tpu.core_type = #tpu.core_type<tc>, window_params = [{transform_indices = @transform_0, window_bounds = array<i64: 1, 128, 8>}, {transform_indices = @transform_1, window_bounds = array<i64: 1, 256, 8>}, {pipeline_mode = #tpu.pipeline_mode<synchronous>, transform_indices = @transform_2, window_bounds = array<i64: 8, 384>}, {pipeline_mode = #tpu.pipeline_mode<synchronous>, transform_indices = @transform_3, window_bounds = array<i64: 8, 128>}, {pipeline_mode = #tpu.pipeline_mode<synchronous>, transform_indices = @transform_4, window_bounds = array<i64: 8, 1>}, {transform_indices = @transform_5, window_bounds = array<i64: 1, 8, 128>}]} {
    %c0 = arith.constant 0 : index
    %c0_0 = arith.constant 0 : index
    %c0_1 = arith.constant 0 : index
    %0 = vector.load %arg2[%c0, %c0_0, %c0_1] : memref<1x128x8xf32, #tpu.memory_space<vmem>>, vector<1x128x8xf32>
    %1 = vector.shape_cast %0 : vector<1x128x8xf32> to vector<128x8xf32>
    %c0_2 = arith.constant 0 : index
    %c0_3 = arith.constant 0 : index
    %c0_4 = arith.constant 0 : index
    %2 = vector.load %arg3[%c0_2, %c0_3, %c0_4] : memref<1x256x8xf32, #tpu.memory_space<vmem>>, vector<1x256x8xf32>
    %3 = vector.shape_cast %2 : vector<1x256x8xf32> to vector<256x8xf32>
    %c0_5 = arith.constant 0 : index
    %c0_6 = arith.constant 0 : index
    %4 = vector.load %arg4[%c0_5, %c0_6] : memref<8x384xf32, #tpu.memory_space<vmem>>, vector<8x384xf32>
    %5 = vector.extract_strided_slice %4 {offsets = [0, 0], sizes = [8, 128], strides = [1, 1]} : vector<8x384xf32> to vector<8x128xf32>
    %cst = arith.constant dense<0.000000e+00> : vector<128x128xf32>
    %6 = tpu.matmul %1, %5, %cst {dimension_numbers = #tpu.dot_dimension_numbers<[1], [0], [0], [1], [0, 0, 1, 1], [], []>} : vector<128x8xf32>, vector<8x128xf32>, vector<128x128xf32> -> vector<128x128xf32>
    %7 = vector.extract_strided_slice %4 {offsets = [0, 128], sizes = [8, 128], strides = [1, 1]} : vector<8x384xf32> to vector<8x128xf32>
    %cst_7 = arith.constant dense<0.000000e+00> : vector<256x128xf32>
    %8 = tpu.matmul %3, %7, %cst_7 {dimension_numbers = #tpu.dot_dimension_numbers<[1], [0], [0], [1], [0, 0, 1, 1], [], []>} : vector<256x8xf32>, vector<8x128xf32>, vector<256x128xf32> -> vector<256x128xf32>
    %9 = arith.truncf %8 : vector<256x128xf32> to vector<256x128xbf16>
    %10 = vector.extract_strided_slice %4 {offsets = [0, 256], sizes = [8, 128], strides = [1, 1]} : vector<8x384xf32> to vector<8x128xf32>
    %cst_8 = arith.constant dense<0.000000e+00> : vector<256x128xf32>
    %11 = tpu.matmul %3, %10, %cst_8 {dimension_numbers = #tpu.dot_dimension_numbers<[1], [0], [0], [1], [0, 0, 1, 1], [], []>} : vector<256x8xf32>, vector<8x128xf32>, vector<256x128xf32> -> vector<256x128xf32>
    %12 = arith.truncf %11 : vector<256x128xf32> to vector<256x128xbf16>
    %13 = vector.extract_strided_slice %6 {offsets = [0, 0], sizes = [128, 32], strides = [1, 1]} : vector<128x128xf32> to vector<128x32xf32>
    %14 = arith.truncf %13 : vector<128x32xf32> to vector<128x32xbf16>
    %15 = vector.extract_strided_slice %9 {offsets = [0, 0], sizes = [256, 32], strides = [1, 1]} : vector<256x128xbf16> to vector<256x32xbf16>
    %16 = vector.extract_strided_slice %12 {offsets = [0, 0], sizes = [256, 32], strides = [1, 1]} : vector<256x128xbf16> to vector<256x32xbf16>
    %cst_9 = arith.constant dense<0.000000e+00> : vector<128x256xf32>
    %17 = tpu.matmul %14, %15, %cst_9 {dimension_numbers = #tpu.dot_dimension_numbers<[1], [1], [0], [0], [0, 0, 1, 0], [], []>} : vector<128x32xbf16>, vector<256x32xbf16>, vector<128x256xf32> -> vector<128x256xf32>
    %cst_10 = arith.constant dense<0xFF800000> : vector<128xf32>
    %18 = vector.multi_reduction <maximumf>, %17, %cst_10 [1] : vector<128x256xf32> to vector<128xf32>
    %19 = vector.shape_cast %18 : vector<128xf32> to vector<128x1xf32>
    %20 = vector.broadcast %19 : vector<128x1xf32> to vector<128x256xf32>
    %21 = arith.subf %17, %20 : vector<128x256xf32>
    %22 = math.exp %21 : vector<128x256xf32>
    %cst_11 = arith.constant dense<0.000000e+00> : vector<128xf32>
    %23 = vector.multi_reduction <add>, %22, %cst_11 [1] : vector<128x256xf32> to vector<128xf32>
    %24 = vector.shape_cast %23 : vector<128xf32> to vector<128x1xf32>
    %25 = arith.truncf %22 : vector<128x256xf32> to vector<128x256xbf16>
    %cst_12 = arith.constant dense<0.000000e+00> : vector<128x32xf32>
    %26 = tpu.matmul %25, %16, %cst_12 {dimension_numbers = #tpu.dot_dimension_numbers<[1], [0], [0], [1], [0, 0, 1, 1], [], []>} : vector<128x256xbf16>, vector<256x32xbf16>, vector<128x32xf32> -> vector<128x32xf32>
    %27 = tpu.reciprocal %24 {approx = true} : vector<128x1xf32> -> vector<128x1xf32>
    %28 = vector.broadcast %27 : vector<128x1xf32> to vector<128x32xf32>
    %29 = arith.mulf %26, %28 : vector<128x32xf32>
    %30 = vector.extract_strided_slice %6 {offsets = [0, 32], sizes = [128, 32], strides = [1, 1]} : vector<128x128xf32> to vector<128x32xf32>
    %31 = arith.truncf %30 : vector<128x32xf32> to vector<128x32xbf16>
    %32 = vector.extract_strided_slice %9 {offsets = [0, 32], sizes = [256, 32], strides = [1, 1]} : vector<256x128xbf16> to vector<256x32xbf16>
    %33 = vector.extract_strided_slice %12 {offsets = [0, 32], sizes = [256, 32], strides = [1, 1]} : vector<256x128xbf16> to vector<256x32xbf16>
    %cst_13 = arith.constant dense<0.000000e+00> : vector<128x256xf32>
    %34 = tpu.matmul %31, %32, %cst_13 {dimension_numbers = #tpu.dot_dimension_numbers<[1], [1], [0], [0], [0, 0, 1, 0], [], []>} : vector<128x32xbf16>, vector<256x32xbf16>, vector<128x256xf32> -> vector<128x256xf32>
    %cst_14 = arith.constant dense<0xFF800000> : vector<128xf32>
    %35 = vector.multi_reduction <maximumf>, %34, %cst_14 [1] : vector<128x256xf32> to vector<128xf32>
    %36 = vector.shape_cast %35 : vector<128xf32> to vector<128x1xf32>
    %37 = vector.broadcast %36 : vector<128x1xf32> to vector<128x256xf32>
    %38 = arith.subf %34, %37 : vector<128x256xf32>
    %39 = math.exp %38 : vector<128x256xf32>
    %cst_15 = arith.constant dense<0.000000e+00> : vector<128xf32>
    %40 = vector.multi_reduction <add>, %39, %cst_15 [1] : vector<128x256xf32> to vector<128xf32>
    %41 = vector.shape_cast %40 : vector<128xf32> to vector<128x1xf32>
    %42 = arith.truncf %39 : vector<128x256xf32> to vector<128x256xbf16>
    %cst_16 = arith.constant dense<0.000000e+00> : vector<128x32xf32>
    %43 = tpu.matmul %42, %33, %cst_16 {dimension_numbers = #tpu.dot_dimension_numbers<[1], [0], [0], [1], [0, 0, 1, 1], [], []>} : vector<128x256xbf16>, vector<256x32xbf16>, vector<128x32xf32> -> vector<128x32xf32>
    %44 = tpu.reciprocal %41 {approx = true} : vector<128x1xf32> -> vector<128x1xf32>
    %45 = vector.broadcast %44 : vector<128x1xf32> to vector<128x32xf32>
    %46 = arith.mulf %43, %45 : vector<128x32xf32>
    %47 = vector.extract_strided_slice %6 {offsets = [0, 64], sizes = [128, 32], strides = [1, 1]} : vector<128x128xf32> to vector<128x32xf32>
    %48 = arith.truncf %47 : vector<128x32xf32> to vector<128x32xbf16>
    %49 = vector.extract_strided_slice %9 {offsets = [0, 64], sizes = [256, 32], strides = [1, 1]} : vector<256x128xbf16> to vector<256x32xbf16>
    %50 = vector.extract_strided_slice %12 {offsets = [0, 64], sizes = [256, 32], strides = [1, 1]} : vector<256x128xbf16> to vector<256x32xbf16>
    %cst_17 = arith.constant dense<0.000000e+00> : vector<128x256xf32>
    %51 = tpu.matmul %48, %49, %cst_17 {dimension_numbers = #tpu.dot_dimension_numbers<[1], [1], [0], [0], [0, 0, 1, 0], [], []>} : vector<128x32xbf16>, vector<256x32xbf16>, vector<128x256xf32> -> vector<128x256xf32>
    %cst_18 = arith.constant dense<0xFF800000> : vector<128xf32>
    %52 = vector.multi_reduction <maximumf>, %51, %cst_18 [1] : vector<128x256xf32> to vector<128xf32>
    %53 = vector.shape_cast %52 : vector<128xf32> to vector<128x1xf32>
    %54 = vector.broadcast %53 : vector<128x1xf32> to vector<128x256xf32>
    %55 = arith.subf %51, %54 : vector<128x256xf32>
    %56 = math.exp %55 : vector<128x256xf32>
    %cst_19 = arith.constant dense<0.000000e+00> : vector<128xf32>
    %57 = vector.multi_reduction <add>, %56, %cst_19 [1] : vector<128x256xf32> to vector<128xf32>
    %58 = vector.shape_cast %57 : vector<128xf32> to vector<128x1xf32>
    %59 = arith.truncf %56 : vector<128x256xf32> to vector<128x256xbf16>
    %cst_20 = arith.constant dense<0.000000e+00> : vector<128x32xf32>
    %60 = tpu.matmul %59, %50, %cst_20 {dimension_numbers = #tpu.dot_dimension_numbers<[1], [0], [0], [1], [0, 0, 1, 1], [], []>} : vector<128x256xbf16>, vector<256x32xbf16>, vector<128x32xf32> -> vector<128x32xf32>
    %61 = tpu.reciprocal %58 {approx = true} : vector<128x1xf32> -> vector<128x1xf32>
    %62 = vector.broadcast %61 : vector<128x1xf32> to vector<128x32xf32>
    %63 = arith.mulf %60, %62 : vector<128x32xf32>
    %64 = vector.extract_strided_slice %6 {offsets = [0, 96], sizes = [128, 32], strides = [1, 1]} : vector<128x128xf32> to vector<128x32xf32>
    %65 = arith.truncf %64 : vector<128x32xf32> to vector<128x32xbf16>
    %66 = vector.extract_strided_slice %9 {offsets = [0, 96], sizes = [256, 32], strides = [1, 1]} : vector<256x128xbf16> to vector<256x32xbf16>
    %67 = vector.extract_strided_slice %12 {offsets = [0, 96], sizes = [256, 32], strides = [1, 1]} : vector<256x128xbf16> to vector<256x32xbf16>
    %cst_21 = arith.constant dense<0.000000e+00> : vector<128x256xf32>
    %68 = tpu.matmul %65, %66, %cst_21 {dimension_numbers = #tpu.dot_dimension_numbers<[1], [1], [0], [0], [0, 0, 1, 0], [], []>} : vector<128x32xbf16>, vector<256x32xbf16>, vector<128x256xf32> -> vector<128x256xf32>
    %cst_22 = arith.constant dense<0xFF800000> : vector<128xf32>
    %69 = vector.multi_reduction <maximumf>, %68, %cst_22 [1] : vector<128x256xf32> to vector<128xf32>
    %70 = vector.shape_cast %69 : vector<128xf32> to vector<128x1xf32>
    %71 = vector.broadcast %70 : vector<128x1xf32> to vector<128x256xf32>
    %72 = arith.subf %68, %71 : vector<128x256xf32>
    %73 = math.exp %72 : vector<128x256xf32>
    %cst_23 = arith.constant dense<0.000000e+00> : vector<128xf32>
    %74 = vector.multi_reduction <add>, %73, %cst_23 [1] : vector<128x256xf32> to vector<128xf32>
    %75 = vector.shape_cast %74 : vector<128xf32> to vector<128x1xf32>
    %76 = arith.truncf %73 : vector<128x256xf32> to vector<128x256xbf16>
    %cst_24 = arith.constant dense<0.000000e+00> : vector<128x32xf32>
    %77 = tpu.matmul %76, %67, %cst_24 {dimension_numbers = #tpu.dot_dimension_numbers<[1], [0], [0], [1], [0, 0, 1, 1], [], []>} : vector<128x256xbf16>, vector<256x32xbf16>, vector<128x32xf32> -> vector<128x32xf32>
    %78 = tpu.reciprocal %75 {approx = true} : vector<128x1xf32> -> vector<128x1xf32>
    %79 = vector.broadcast %78 : vector<128x1xf32> to vector<128x32xf32>
    %80 = arith.mulf %77, %79 : vector<128x32xf32>
    %81 = tpu.concatenate %29, %46, %63, %80 in 1 : vector<128x32xf32>, vector<128x32xf32>, vector<128x32xf32>, vector<128x32xf32> -> vector<128x128xf32>
    %c0_25 = arith.constant 0 : index
    %c0_26 = arith.constant 0 : index
    %82 = vector.load %arg5[%c0_25, %c0_26] : memref<8x128xf32, #tpu.memory_space<vmem>>, vector<8x128xf32>
    %cst_27 = arith.constant dense<0.000000e+00> : vector<8x128xf32>
    %83 = tpu.matmul %82, %81, %cst_27 {dimension_numbers = #tpu.dot_dimension_numbers<[1], [1], [0], [0], [0, 0, 1, 0], [], []>} : vector<8x128xf32>, vector<128x128xf32>, vector<8x128xf32> -> vector<8x128xf32>
    %c0_28 = arith.constant 0 : index
    %c0_29 = arith.constant 0 : index
    %84 = vector.load %arg6[%c0_28, %c0_29] : memref<8x1xf32, #tpu.memory_space<vmem>>, vector<8x1xf32>
    %85 = vector.broadcast %84 : vector<8x1xf32> to vector<8x128xf32>
    %86 = arith.addf %83, %85 : vector<8x128xf32>
    %c0_30 = arith.constant 0 : index
    %c0_31 = arith.constant 0 : index
    %c0_32 = arith.constant 0 : index
    %87 = vector.load %arg7[%c0_30, %c0_31, %c0_32] : memref<1x8x128xf32, #tpu.memory_space<vmem>>, vector<1x8x128xf32>
    %88 = vector.shape_cast %87 : vector<1x8x128xf32> to vector<8x128xf32>
    %89 = vector.shape_cast %86 : vector<8x128xf32> to vector<1x8x128xf32>
    tpu.vector_store %arg7[%c0_30, %c0_31, %c0_32], %89 {strides = array<i32>} : memref<1x8x128xf32, #tpu.memory_space<vmem>>, vector<1x8x128xf32>,
    return
  }
  func.func @transform_0(%arg0: i32, %arg1: i32) -> (i32, i32, i32) {
    %c0_i32 = arith.constant 0 : i32
    %c0_i32_0 = arith.constant 0 : i32
    return %arg0, %arg1, %c0_i32 : i32, i32, i32
  }
  func.func @transform_1(%arg0: i32, %arg1: i32) -> (i32, i32, i32) {
    %c0_i32 = arith.constant 0 : i32
    %c0_i32_0 = arith.constant 0 : i32
    %c0_i32_1 = arith.constant 0 : i32
    return %arg0, %c0_i32, %c0_i32_0 : i32, i32, i32
  }
  func.func @transform_2(%arg0: i32, %arg1: i32) -> (i32, i32) {
    %c0_i32 = arith.constant 0 : i32
    %c0_i32_0 = arith.constant 0 : i32
    %c0_i32_1 = arith.constant 0 : i32
    return %c0_i32, %c0_i32_0 : i32, i32
  }
  func.func @transform_3(%arg0: i32, %arg1: i32) -> (i32, i32) {
    %c0_i32 = arith.constant 0 : i32
    %c0_i32_0 = arith.constant 0 : i32
    %c0_i32_1 = arith.constant 0 : i32
    return %c0_i32, %c0_i32_0 : i32, i32
  }
  func.func @transform_4(%arg0: i32, %arg1: i32) -> (i32, i32) {
    %c0_i32 = arith.constant 0 : i32
    %c0_i32_0 = arith.constant 0 : i32
    %c0_i32_1 = arith.constant 0 : i32
    return %c0_i32, %c0_i32_0 : i32, i32
  }
  func.func @transform_5(%arg0: i32, %arg1: i32) -> (i32, i32, i32) {
    %c0_i32 = arith.constant 0 : i32
    %c0_i32_0 = arith.constant 0 : i32
    return %arg0, %c0_i32, %arg1 : i32, i32, i32
  }
}

</mosaic_0001>

<llo_original>
// kernel: attention_forward.1
$region0: #{attention_forward.1}
  #allocation0 [shape = 'u32[]', space=smem, size = 0x4, offset = 0x4, fixed_abs, tag = 'smem constant byte address 0x4 - core index']
  #allocation1 [shape = 'u32[144,128]{1,0:T(1,128)}', space=vmem, size = 0x12000, scoped, tag = 'internal scratch']
  %s0 = inlined_call_operand.vmem [shape: f32[2,256,8], index: 0, kind: input, shape index: {}, may-alias: {0,1}]
  %s1 = inlined_call_operand.vmem [shape: f32[2,256,8], index: 1, kind: input, shape index: {}, may-alias: {0,1}]
  %s2 = inlined_call_operand.vmem [shape: f32[8,384], index: 2, kind: input, shape index: {}]
  %s3 = inlined_call_operand.vmem [shape: f32[8,128], index: 3, kind: input, shape index: {}]
  %s4 = inlined_call_operand.vmem [shape: f32[8,1], index: 4, kind: input, shape index: {}]
  %s5 = inlined_call_operand.vmem [shape: f32[2,8,256], index: 5, kind: output, shape index: {}]
  %s6 = sld [smem:[#allocation0]]
  $region53: #{attention_forward.1} parent=0
    _
  %s8 = ssub.s32 1, %s6
  %s9 = scalar_select 0, %s8, %s6
  loop: start=0, step=1, limit=6
  $region2: #{attention_forward.1} parent=0 // loop_pre_header
    _
  $region3: #{attention_forward.1} parent=0 // loop_header
    %s11 = sphi 0, %s15
    %p12 = scmp.ge.s32.totalorder %s11, 6
    %s18 = sphi 0, %s30
    %s19 = sphi 0, %s26
    %s20 = sphi 0, %s18
    %s21 = sphi 0, %s19
    %s22 = sphi 0, %s20
    %s23 = sphi 0, %s21
    %s35 = sphi 0, %s37
    %s38 = sphi 0, %s35
    %s39 = sphi 0, %s38
    %s55 = sphi 0, %s39
    %s61 = sphi 0, %s63
    %s64 = sphi 0, %s61
    %s65 = sphi 0, %s64
    %s81 = sphi 0, %s65
    %s85 = sphi 0, %s85
    %s87 = sphi 0, %s85
    %s88 = sphi 0, %s87
    %s102 = sphi 0, %s88
    %s106 = sphi 0, %s106
    %s108 = sphi 0, %s106
    %s109 = sphi 0, %s108
    %s123 = sphi 0, %s109
    %s127 = sphi 0, %s127
    %s129 = sphi 0, %s127
    %s130 = sphi 0, %s129
    %s144 = sphi 0, %s130
    %s152 = sphi 0, %s154
    %s155 = sphi 0, %s152
    %s156 = sphi 0, %s155
    %s172 = sphi 0, %s156
  $region4: #{attention_forward.1} parent=0 // loop_header_branch
    %14 = sbr.rel (%p12) target = $region8
  $region5: #{attention_forward.1} parent=0 // loop_body
    %s16 = ssub.s32 %s11, 1
    %s17 = ssub.s32 %s11, 2
    %s24 = sadd.s32 1, %s19
    %p25 = scmp.ge.s32.totalorder %s24, 2
    %s26 = scalar_select %p25, 0, %s24
    %s27 = sadd.s32 1, %s18
    %s28 = scalar_select %p25, %s27, %s18
    %p29 = scmp.ge.s32.totalorder %s28, 2
    %s30 = scalar_select %p29, 0, %s28
    %s31 = ssub.s32 %s18, %s30
    %s32 = ssub.s32 %s19, %s26
    %s33 = sor.u32 %s31, %s32
    %p34 = scmp.eq.s32.totalorder %s33, 0
    %s36 = sadd.s32 %s35, 1
    %s37 = scalar_select %p34, %s35, %s36
    %p40 = pneg %p34
    %p41 = scmp.eq.s32.totalorder %s11, 3
    %p42 = por %p40, %p41
    %p43 = scmp.ne.s32.totalorder %s35, %s38
    %p44 = scmp.eq.s32.totalorder %s11, 0
    %p45 = por %p43, %p44
    %p46 = scmp.ne.s32.totalorder %s35, %s38
    %p47 = scmp.eq.s32.totalorder %s16, 3
    %p48 = por %p46, %p47
    %p49 = scmp.ne.s32.totalorder %s38, %s39
    %p50 = scmp.eq.s32.totalorder %s16, 0
    %p51 = por %p49, %p50
    %p52 = scmp.ne.s32.totalorder %s38, %s39
    %p53 = scmp.eq.s32.totalorder %s17, 3
    %p54 = por %p52, %p53
    %p56 = scmp.ne.s32.totalorder %s39, %s55
    %p57 = scmp.eq.s32.totalorder %s17, 0
    %p58 = por %p56, %p57
    %s59 = ssub.s32 %s18, %s30
    %p60 = scmp.eq.s32.totalorder %s59, 0
    %s62 = sadd.s32 %s61, 1
    %s63 = scalar_select %p60, %s61, %s62
    %p66 = pneg %p60
    %p67 = scmp.eq.s32.totalorder %s11, 3
    %p68 = por %p66, %p67
    %p69 = scmp.ne.s32.totalorder %s61, %s64
    %p70 = scmp.eq.s32.totalorder %s11, 0
    %p71 = por %p69, %p70
    %p72 = scmp.ne.s32.totalorder %s61, %s64
    %p73 = scmp.eq.s32.totalorder %s16, 3
    %p74 = por %p72, %p73
    %p75 = scmp.ne.s32.totalorder %s64, %s65
    %p76 = scmp.eq.s32.totalorder %s16, 0
    %p77 = por %p75, %p76
    %p78 = scmp.ne.s32.totalorder %s64, %s65
    %p79 = scmp.eq.s32.totalorder %s17, 3
    %p80 = por %p78, %p79
    %p82 = scmp.ne.s32.totalorder %s65, %s81
    %p83 = scmp.eq.s32.totalorder %s17, 0
    %p84 = por %p82, %p83
    %s86 = sadd.s32 %s85, 1
    %p89 = scmp.eq.s32.totalorder %s11, 3
    %p90 = scmp.ne.s32.totalorder %s85, %s87
    %p91 = scmp.eq.s32.totalorder %s11, 0
    %p92 = por %p90, %p91
    %p93 = scmp.ne.s32.totalorder %s85, %s87
    %p94 = scmp.eq.s32.totalorder %s16, 3
    %p95 = por %p93, %p94
    %p96 = scmp.ne.s32.totalorder %s87, %s88
    %p97 = scmp.eq.s32.totalorder %s16, 0
    %p98 = por %p96, %p97
    %p99 = scmp.ne.s32.totalorder %s87, %s88
    %p100 = scmp.eq.s32.totalorder %s17, 3
    %p101 = por %p99, %p100
    %p103 = scmp.ne.s32.totalorder %s88, %s102
    %p104 = scmp.eq.s32.totalorder %s17, 0
    %p105 = por %p103, %p104
    %s107 = sadd.s32 %s106, 1
    %p110 = scmp.eq.s32.totalorder %s11, 3
    %p111 = scmp.ne.s32.totalorder %s106, %s108
    %p112 = scmp.eq.s32.totalorder %s11, 0
    %p113 = por %p111, %p112
    %p114 = scmp.ne.s32.totalorder %s106, %s108
    %p115 = scmp.eq.s32.totalorder %s16, 3
    %p116 = por %p114, %p115
    %p117 = scmp.ne.s32.totalorder %s108, %s109
    %p118 = scmp.eq.s32.totalorder %s16, 0
    %p119 = por %p117, %p118
    %p120 = scmp.ne.s32.totalorder %s108, %s109
    %p121 = scmp.eq.s32.totalorder %s17, 3
    %p122 = por %p120, %p121
    %p124 = scmp.ne.s32.totalorder %s109, %s123
    %p125 = scmp.eq.s32.totalorder %s17, 0
    %p126 = por %p124, %p125
    %s128 = sadd.s32 %s127, 1
    %p131 = scmp.eq.s32.totalorder %s11, 3
    %p132 = scmp.ne.s32.totalorder %s127, %s129
    %p133 = scmp.eq.s32.totalorder %s11, 0
    %p134 = por %p132, %p133
    %p135 = scmp.ne.s32.totalorder %s127, %s129
    %p136 = scmp.eq.s32.totalorder %s16, 3
    %p137 = por %p135, %p136
    %p138 = scmp.ne.s32.totalorder %s129, %s130
    %p139 = scmp.eq.s32.totalorder %s16, 0
    %p140 = por %p138, %p139
    %p141 = scmp.ne.s32.totalorder %s129, %s130
    %p142 = scmp.eq.s32.totalorder %s17, 3
    %p143 = por %p141, %p142
    %p145 = scmp.ne.s32.totalorder %s130, %s144
    %p146 = scmp.eq.s32.totalorder %s17, 0
    %p147 = por %p145, %p146
    %s148 = ssub.s32 %s18, %s30
    %s149 = ssub.s32 %s19, %s26
    %s150 = sor.u32 %s148, %s149
    %p151 = scmp.eq.s32.totalorder %s150, 0
    %s153 = sadd.s32 %s152, 1
    %s154 = scalar_select %p151, %s152, %s153
    %p157 = pneg %p151
    %p158 = scmp.eq.s32.totalorder %s11, 3
    %p159 = por %p157, %p158
    %p160 = scmp.ne.s32.totalorder %s152, %s155
    %p161 = scmp.eq.s32.totalorder %s11, 0
    %p162 = por %p160, %p161
    %p163 = scmp.ne.s32.totalorder %s152, %s155
    %p164 = scmp.eq.s32.totalorder %s16, 3
    %p165 = por %p163, %p164
    %p166 = scmp.ne.s32.totalorder %s155, %s156
    %p167 = scmp.eq.s32.totalorder %s16, 0
    %p168 = por %p166, %p167
    %p169 = scmp.ne.s32.totalorder %s155, %s156
    %p170 = scmp.eq.s32.totalorder %s17, 3
    %p171 = por %p169, %p170
    %p173 = scmp.ne.s32.totalorder %s156, %s172
    %p174 = scmp.eq.s32.totalorder %s17, 0
    %p175 = por %p173, %p174
    %p176 = scmp.le.s32.totalorder 1, %s11
    %p177 = scmp.lt.s32.totalorder %s11, 5
    %p178 = pnand %p176, %p177
    %p179 = pneg %p178
    // Predicated region
    $region9: #{attention_forward.1} parent=5 // pred_check
      _
    $region10: #{attention_forward.1} parent=5 // pred_check_branch
      %181 = sbr.rel (%p178) target = $region12
    $region11: #{attention_forward.1} parent=5 // pred_region
      %s182 = ssub.s32 %s11, 1
      // Predicated region
      $region13: #{attention_forward.1} parent=11 // pred_check
        %p183 = pneg %p98
      $region14: #{attention_forward.1} parent=11 // pred_check_branch
        %185 = sbr.rel (%p183) target = $region16
      $region15: #{attention_forward.1} parent=11 // pred_region
        _
      $region16: #{attention_forward.1} parent=11 // pred_fallthru
        _
      // Predicated region
      $region17: #{attention_forward.1} parent=11 // pred_check
        %p186 = pneg %p119
      $region18: #{attention_forward.1} parent=11 // pred_check_branch
        %188 = sbr.rel (%p186) target = $region20
      $region19: #{attention_forward.1} parent=11 // pred_region
        _
      $region20: #{attention_forward.1} parent=11 // pred_fallthru
        _
      // Predicated region
      $region21: #{attention_forward.1} parent=11 // pred_check
        %p189 = pneg %p140
      $region22: #{attention_forward.1} parent=11 // pred_check_branch
        %191 = sbr.rel (%p189) target = $region24
      $region23: #{attention_forward.1} parent=11 // pred_region
        _
      $region24: #{attention_forward.1} parent=11 // pred_fallthru
        _
    $region12: #{attention_forward.1} parent=5 // pred_fallthru
      _
    %p192 = scmp.lt.s32.totalorder %s11, 4
    // Predicated region
    $region25: #{attention_forward.1} parent=5 // pred_check
      %p193 = pneg %p192
    $region26: #{attention_forward.1} parent=5 // pred_check_branch
      %195 = sbr.rel (%p193) target = $region28
    $region27: #{attention_forward.1} parent=5 // pred_region
      // Predicated region
      $region29: #{attention_forward.1} parent=27 // pred_check
        %p196 = pneg %p45
      $region30: #{attention_forward.1} parent=27 // pred_check_branch
        %198 = sbr.rel (%p196) target = $region32
      $region31: #{attention_forward.1} parent=27 // pred_region
        %s199 = smul.u32 16, %s19
        %p200 = scmp.lt.s32.totalorder %s18, 1
        %s201 = scalar_select %p200, %s18, 1
        %p202 = scmp.lt.s32.totalorder %s199, 31
        %s203 = scalar_select %p202, %s199, 31
        %s204 = smul.addr %s201, 32
        %s205 = sadd.s32 %s203, %s204
        %s206 = smul.addr %s205, 8
        %s207 = scalar_lea.vmem %s0, %s206
        %s208 = smul.u32 16, %s19
      $region32: #{attention_forward.1} parent=27 // pred_fallthru
        _
      // Predicated region
      $region33: #{attention_forward.1} parent=27 // pred_check
        %p209 = pneg %p71
      $region34: #{attention_forward.1} parent=27 // pred_check_branch
        %211 = sbr.rel (%p209) target = $region36
      $region35: #{attention_forward.1} parent=27 // pred_region
        %p212 = scmp.lt.s32.totalorder %s18, 1
        %s213 = scalar_select %p212, %s18, 1
        %s214 = smul.addr %s213, 32
        %s215 = smul.addr %s214, 8
        %s216 = scalar_lea.vmem %s1, %s215
      $region36: #{attention_forward.1} parent=27 // pred_fallthru
        _
    $region28: #{attention_forward.1} parent=5 // pred_fallthru
      _
    %p217 = scmp.le.s32.totalorder 1, %s11
    %p218 = scmp.lt.s32.totalorder %s11, 5
    %p219 = pnand %p217, %p218
    %p220 = pneg %p219
    // Predicated region
    $region37: #{attention_forward.1} parent=5 // pred_check
      _
    $region38: #{attention_forward.1} parent=5 // pred_check_branch
      %222 = sbr.rel (%p219) target = $region40
    $region39: #{attention_forward.1} parent=5 // pred_region
      %s223 = ssub.s32 %s11, 1
      %s224 = smul.u32 16, %s21
      %p225 = scmp.lt.s32.totalorder %s20, 1
      %s226 = scalar_select %p225, %s20, 1
      %p227 = scmp.lt.s32.totalorder %s224, 31
      %s228 = scalar_select %p227, %s224, 31
      %s229 = smul.addr %s226, 32
      %s230 = sadd.s32 %s228, %s229
      %s231 = smul.addr %s230, 8
      %s232 = scalar_lea.vmem %s0, %s231
      %p233 = pneg %p51
      %p234 = pneg %p48
      %p235 = scmp.lt.s32.totalorder %s20, 1
      %s236 = scalar_select %p235, %s20, 1
      %s237 = smul.addr %s236, 32
      %s238 = smul.addr %s237, 8
      %s239 = scalar_lea.vmem %s1, %s238
      %p240 = pneg %p77
      %p241 = pneg %p74
      %p242 = pneg %p98
      %p243 = pneg %p95
      %p244 = pneg %p119
      %p245 = pneg %p116
      %p246 = pneg %p140
      %p247 = pneg %p137
      %p248 = pneg %p168
      %p249 = pneg %p165
      %p250 = scmp.lt.s32.totalorder %s20, 1
      %s251 = scalar_select %p250, %s20, 1
      %p252 = scmp.lt.s32.totalorder %s21, 1
      %s253 = scalar_select %p252, %s21, 1
      %s254 = smul.addr %s251, 2
      %s255 = sadd.s32 %s253, %s254
      %s256 = smul.addr %s255, 8
      %s257 = scalar_lea.vmem %s5, %s256
      %s258 = smul.u32 16, %s21
      %p259 = scmp.lt.s32.totalorder %s20, 1
      %s260 = scalar_select %p259, %s20, 1
      %p261 = scmp.lt.s32.totalorder %s258, 31
      %s262 = scalar_select %p261, %s258, 31
      %s263 = smul.addr %s260, 32
      %s264 = sadd.s32 %s262, %s263
      %s265 = smul.addr %s264, 8
      %s266 = scalar_lea.vmem %s0, %s265
      %s267 = smul.u32 16, %s21
      %p268 = scmp.lt.s32.totalorder %s20, 1
      %s269 = scalar_select %p268, %s20, 1
      %s270 = smul.addr %s269, 32
      %s271 = smul.addr %s270, 8
      %s272 = scalar_lea.vmem %s1, %s271
      %p273 = scmp.lt.s32.totalorder %s20, 1
      %s274 = scalar_select %p273, %s20, 1
      %p275 = scmp.lt.s32.totalorder %s21, 1
      %s276 = scalar_select %p275, %s21, 1
      %s277 = smul.addr %s274, 2
      %s278 = sadd.s32 %s276, %s277
      %s279 = smul.addr %s278, 8
      %s280 = scalar_lea.vmem %s5, %s279
      %v282 = vld [vmem:[%s266] sm:$0xff]
      %v283 = vld [vmem:[%s266 + $0x8] sm:$0xff]
      %v284 = vld [vmem:[%s266 + $0x10] sm:$0xff]
      %v285 = vld [vmem:[%s266 + $0x18] sm:$0xff]
      %v286 = vld [vmem:[%s266 + $0x20] sm:$0xff]
      %v287 = vld [vmem:[%s266 + $0x28] sm:$0xff]
      %v288 = vld [vmem:[%s266 + $0x30] sm:$0xff]
      %v289 = vld [vmem:[%s266 + $0x38] sm:$0xff]
      %v290 = vld [vmem:[%s266 + $0x40] sm:$0xff]
      %v291 = vld [vmem:[%s266 + $0x48] sm:$0xff]
      %v292 = vld [vmem:[%s266 + $0x50] sm:$0xff]
      %v293 = vld [vmem:[%s266 + $0x58] sm:$0xff]
      %v294 = vld [vmem:[%s266 + $0x60] sm:$0xff]
      %v295 = vld [vmem:[%s266 + $0x68] sm:$0xff]
      %v296 = vld [vmem:[%s266 + $0x70] sm:$0xff]
      %v297 = vld [vmem:[%s266 + $0x78] sm:$0xff]
      %v298 = vld [vmem:[%s272] sm:$0xff]
      %v299 = vld [vmem:[%s272 + $0x8] sm:$0xff]
      %v300 = vld [vmem:[%s272 + $0x10] sm:$0xff]
      %v301 = vld [vmem:[%s272 + $0x18] sm:$0xff]
      %v302 = vld [vmem:[%s272 + $0x20] sm:$0xff]
      %v303 = vld [vmem:[%s272 + $0x28] sm:$0xff]
      %v304 = vld [vmem:[%s272 + $0x30] sm:$0xff]
      %v305 = vld [vmem:[%s272 + $0x38] sm:$0xff]
      %v306 = vld [vmem:[%s272 + $0x40] sm:$0xff]
      %v307 = vld [vmem:[%s272 + $0x48] sm:$0xff]
      %v308 = vld [vmem:[%s272 + $0x50] sm:$0xff]
      %v309 = vld [vmem:[%s272 + $0x58] sm:$0xff]
      %v310 = vld [vmem:[%s272 + $0x60] sm:$0xff]
      %v311 = vld [vmem:[%s272 + $0x68] sm:$0xff]
      %v312 = vld [vmem:[%s272 + $0x70] sm:$0xff]
      %v313 = vld [vmem:[%s272 + $0x78] sm:$0xff]
      %v314 = vld [vmem:[%s272 + $0x80] sm:$0xff]
      %v315 = vld [vmem:[%s272 + $0x88] sm:$0xff]
      %v316 = vld [vmem:[%s272 + $0x90] sm:$0xff]
      %v317 = vld [vmem:[%s272 + $0x98] sm:$0xff]
      %v318 = vld [vmem:[%s272 + $0xa0] sm:$0xff]
      %v319 = vld [vmem:[%s272 + $0xa8] sm:$0xff]
      %v320 = vld [vmem:[%s272 + $0xb0] sm:$0xff]
      %v321 = vld [vmem:[%s272 + $0xb8] sm:$0xff]
      %v322 = vld [vmem:[%s272 + $0xc0] sm:$0xff]
      %v323 = vld [vmem:[%s272 + $0xc8] sm:$0xff]
      %v324 = vld [vmem:[%s272 + $0xd0] sm:$0xff]
      %v325 = vld [vmem:[%s272 + $0xd8] sm:$0xff]
      %v326 = vld [vmem:[%s272 + $0xe0] sm:$0xff]
      %v327 = vld [vmem:[%s272 + $0xe8] sm:$0xff]
      %v328 = vld [vmem:[%s272 + $0xf0] sm:$0xff]
      %v329 = vld [vmem:[%s272 + $0xf8] sm:$0xff]
      %v330 = vld [vmem:[%s2] sm:$0xff]
      %v331 = vld [vmem:[%s2 + $0x8] sm:$0xff]
      %v332 = vld [vmem:[%s2 + $0x10] sm:$0xff]
      %vm333 = vcmask 64512
      %v335 = vsel %vm333, %v282, 0
      %v338 = vsel %vm333, %v283, 0
      %v341 = vsel %vm333, %v284, 0
      %v344 = vsel %vm333, %v285, 0
      %v347 = vsel %vm333, %v286, 0
      %v350 = vsel %vm333, %v287, 0
      %v353 = vsel %vm333, %v288, 0
      %v356 = vsel %vm333, %v289, 0
      %v359 = vsel %vm333, %v290, 0
      %v362 = vsel %vm333, %v291, 0
      %v365 = vsel %vm333, %v292, 0
      %v368 = vsel %vm333, %v293, 0
      %v371 = vsel %vm333, %v294, 0
      %v374 = vsel %vm333, %v295, 0
      %v377 = vsel %vm333, %v296, 0
      %v380 = vsel %vm333, %v297, 0
      %382 = vmatprep.subr.mxu0 0.0
      %383 = vmatpush1.msra.mxu0 %v330
      %384 = vmatprep.subr.mxu0 0.0
      %385 = vmatpush1.msra.mxu0 0.0
      %386 = vmatprep.subr.mxu0 0.0
      %387 = vmatpush1.msra.mxu0 0.0
      %388 = vmatprep.subr.mxu0 0.0
      %389 = vmatpush1.msra.mxu0 0.0
      %390 = vmatprep.subr.mxu0 0.0
      %391 = vmatpush1.msra.mxu0 0.0
      %392 = vmatprep.subr.mxu0 0.0
      %393 = vmatpush1.msra.mxu0 0.0
      %394 = vmatprep.subr.mxu0 0.0
      %395 = vmatpush1.msra.mxu0 0.0
      %396 = vmatprep.subr.mxu0 0.0
      %397 = vmatpush1.msra.mxu0 0.0
      %398 = vmatprep.subr.mxu0 0.0
      %399 = vmatpush1.msra.mxu0 0.0
      %400 = vmatprep.subr.mxu0 0.0
      %401 = vmatpush1.msra.mxu0 0.0
      %402 = vmatprep.subr.mxu0 0.0
      %403 = vmatpush1.msra.mxu0 0.0
      %404 = vmatprep.subr.mxu0 0.0
      %405 = vmatpush1.msra.mxu0 0.0
      %406 = vmatprep.subr.mxu0 0.0
      %407 = vmatpush1.msra.mxu0 0.0
      %408 = vmatprep.subr.mxu0 0.0
      %409 = vmatpush1.msra.mxu0 0.0
      %410 = vmatprep.subr.mxu0 0.0
      %411 = vmatpush1.msra.mxu0 0.0
      %412 = vmatprep.subr.mxu0 0.0
      %413 = vmatpush1.msra.mxu0 0.0
      %414 = vmatprep.subr.mxu0 0.0
      %415 = vmatpush1.msra.mxu0 0.0
      %416 = vmatprep.subr.mxu0 0.0
      %417 = vmatpush1.msra.mxu0 0.0
      %418 = vmatprep.subr.mxu0 0.0
      %419 = vmatpush1.msra.mxu0 0.0
      %420 = vmatprep.subr.mxu0 0.0
      %421 = vmatpush1.msra.mxu0 0.0
      %422 = vmatprep.subr.mxu0 0.0
      %423 = vmatpush1.msra.mxu0 0.0
      %424 = vmatprep.subr.mxu0 0.0
      %425 = vmatpush1.msra.mxu0 0.0
      %426 = vmatprep.subr.mxu0 0.0
      %427 = vmatpush1.msra.mxu0 0.0
      %428 = vmatprep.subr.mxu0 0.0
      %429 = vmatpush1.msra.mxu0 0.0
      %430 = vmatprep.subr.mxu0 0.0
      %431 = vmatpush1.msra.mxu0 0.0
      %432 = vmatprep.subr.mxu0 0.0
      %433 = vmatpush1.msra.mxu0 0.0
      %434 = vmatprep.subr.mxu0 0.0
      %435 = vmatpush1.msra.mxu0 0.0
      %436 = vmatprep.subr.mxu0 0.0
      %437 = vmatpush1.msra.mxu0 0.0
      %438 = vmatprep.subr.mxu0 0.0
      %439 = vmatpush1.msra.mxu0 0.0
      %440 = vmatprep.subr.mxu0 0.0
      %441 = vmatpush1.msra.mxu0 0.0
      %442 = vmatprep.subr.mxu0 0.0
      %443 = vmatpush1.msra.mxu0 0.0
      %444 = vmatprep.subr.mxu0 0.0
      %445 = vmatpush1.msra.mxu0 0.0
      %446 = vmatprep.mubr.f32.mxu0 0.0
      %447 = vmatmul.mubr.f32.gmra.mrb[0].mxu0 %v335
      %v448 = vpop.f32.mrb[0].mxu0
      %v449 = vadd.f32 0.0, %v448
      %v450 = vpop.f32.mrb[0].mxu0
      %451 = vmatprep.mubr.f32.mxu0 0.0
      %452 = vmatmul.mubr.f32.gmra.mrb[0].mxu0 %v338
      %v453 = vpop.f32.mrb[0].mxu0
      %v454 = vadd.f32 0.0, %v453
      %v455 = vpop.f32.mrb[0].mxu0
      %456 = vmatprep.mubr.f32.mxu0 0.0
      %457 = vmatmul.mubr.f32.gmra.mrb[0].mxu0 %v341
      %v458 = vpop.f32.mrb[0].mxu0
      %v459 = vadd.f32 0.0, %v458
      %v460 = vpop.f32.mrb[0].mxu0
      %461 = vmatprep.mubr.f32.mxu0 0.0
      %462 = vmatmul.mubr.f32.gmra.mrb[0].mxu0 %v344
      %v463 = vpop.f32.mrb[0].mxu0
      %v464 = vadd.f32 0.0, %v463
      %v465 = vpop.f32.mrb[0].mxu0
      %466 = vmatprep.mubr.f32.mxu0 0.0
      %467 = vmatmul.mubr.f32.gmra.mrb[0].mxu0 %v347
      %v468 = vpop.f32.mrb[0].mxu0
      %v469 = vadd.f32 0.0, %v468
      %v470 = vpop.f32.mrb[0].mxu0
      %471 = vmatprep.mubr.f32.mxu0 0.0
      %472 = vmatmul.mubr.f32.gmra.mrb[0].mxu0 %v350
      %v473 = vpop.f32.mrb[0].mxu0
      %v474 = vadd.f32 0.0, %v473
      %v475 = vpop.f32.mrb[0].mxu0
      %476 = vmatprep.mubr.f32.mxu0 0.0
      %477 = vmatmul.mubr.f32.gmra.mrb[0].mxu0 %v353
      %v478 = vpop.f32.mrb[0].mxu0
      %v479 = vadd.f32 0.0, %v478
      %v480 = vpop.f32.mrb[0].mxu0
      %481 = vmatprep.mubr.f32.mxu0 0.0
      %482 = vmatmul.mubr.f32.gmra.mrb[0].mxu0 %v356
      %v483 = vpop.f32.mrb[0].mxu0
      %v484 = vadd.f32 0.0, %v483
      %v485 = vpop.f32.mrb[0].mxu0
      %486 = vmatprep.mubr.f32.mxu0 0.0
      %487 = vmatmul.mubr.f32.gmra.mrb[0].mxu0 %v359
      %v488 = vpop.f32.mrb[0].mxu0
      %v489 = vadd.f32 0.0, %v488
      %v490 = vpop.f32.mrb[0].mxu0
      %491 = vmatprep.mubr.f32.mxu0 0.0
      %492 = vmatmul.mubr.f32.gmra.mrb[0].mxu0 %v362
      %v493 = vpop.f32.mrb[0].mxu0
      %v494 = vadd.f32 0.0, %v493
      %v495 = vpop.f32.mrb[0].mxu0
      %496 = vmatprep.mubr.f32.mxu0 0.0
      %497 = vmatmul.mubr.f32.gmra.mrb[0].mxu0 %v365
      %v498 = vpop.f32.mrb[0].mxu0
      %v499 = vadd.f32 0.0, %v498
      %v500 = vpop.f32.mrb[0].mxu0
      %501 = vmatprep.mubr.f32.mxu0 0.0
      %502 = vmatmul.mubr.f32.gmra.mrb[0].mxu0 %v368
      %v503 = vpop.f32.mrb[0].mxu0
      %v504 = vadd.f32 0.0, %v503
      %v505 = vpop.f32.mrb[0].mxu0
      %506 = vmatprep.mubr.f32.mxu0 0.0
      %507 = vmatmul.mubr.f32.gmra.mrb[0].mxu0 %v371
      %v508 = vpop.f32.mrb[0].mxu0
      %v509 = vadd.f32 0.0, %v508
      %v510 = vpop.f32.mrb[0].mxu0
      %511 = vmatprep.mubr.f32.mxu0 0.0
      %512 = vmatmul.mubr.f32.gmra.mrb[0].mxu0 %v374
      %v513 = vpop.f32.mrb[0].mxu0
      %v514 = vadd.f32 0.0, %v513
      %v515 = vpop.f32.mrb[0].mxu0
      %516 = vmatprep.mubr.f32.mxu0 0.0
      %517 = vmatmul.mubr.f32.gmra.mrb[0].mxu0 %v377
      %v518 = vpop.f32.mrb[0].mxu0
      %v519 = vadd.f32 0.0, %v518
      %v520 = vpop.f32.mrb[0].mxu0
      %521 = vmatprep.mubr.f32.mxu0 0.0
      %522 = vmatmul.mubr.f32.gmra.mrb[0].mxu0 %v380
      %v523 = vpop.f32.mrb[0].mxu0
      %v524 = vadd.f32 0.0, %v523
      %v525 = vpop.f32.mrb[0].mxu0
      %526 = vdwg.mxu0
      %v528 = vsel %vm333, %v298, 0
      %v531 = vsel %vm333, %v299, 0
      %v534 = vsel %vm333, %v300, 0
      %v537 = vsel %vm333, %v301, 0
      %v540 = vsel %vm333, %v302, 0
      %v543 = vsel %vm333, %v303, 0
      %v546 = vsel %vm333, %v304, 0
      %v549 = vsel %vm333, %v305, 0
      %v552 = vsel %vm333, %v306, 0
      %v555 = vsel %vm333, %v307, 0
      %v558 = vsel %vm333, %v308, 0
      %v561 = vsel %vm333, %v309, 0
      %v564 = vsel %vm333, %v310, 0
      %v567 = vsel %vm333, %v311, 0
      %v570 = vsel %vm333, %v312, 0
      %v573 = vsel %vm333, %v313, 0
      %v576 = vsel %vm333, %v314, 0
      %v579 = vsel %vm333, %v315, 0
      %v582 = vsel %vm333, %v316, 0
      %v585 = vsel %vm333, %v317, 0
      %v588 = vsel %vm333, %v318, 0
      %v591 = vsel %vm333, %v319, 0
      %v594 = vsel %vm333, %v320, 0
      %v597 = vsel %vm333, %v321, 0
      %v600 = vsel %vm333, %v322, 0
      %v603 = vsel %vm333, %v323, 0
      %v606 = vsel %vm333, %v324, 0
      %v609 = vsel %vm333, %v325, 0
      %v612 = vsel %vm333, %v326, 0
      %v615 = vsel %vm333, %v327, 0
      %v618 = vsel %vm333, %v328, 0
      %v621 = vsel %vm333, %v329, 0
      %623 = vmatprep.subr.mxu0 0.0
      %624 = vmatpush1.msra.mxu0 %v331
      %625 = vmatprep.subr.mxu0 0.0
      %626 = vmatpush1.msra.mxu0 0.0
      %627 = vmatprep.subr.mxu0 0.0
      %628 = vmatpush1.msra.mxu0 0.0
      %629 = vmatprep.subr.mxu0 0.0
      %630 = vmatpush1.msra.mxu0 0.0
      %631 = vmatprep.subr.mxu0 0.0
      %632 = vmatpush1.msra.mxu0 0.0
      %633 = vmatprep.subr.mxu0 0.0
      %634 = vmatpush1.msra.mxu0 0.0
      %635 = vmatprep.subr.mxu0 0.0
      %636 = vmatpush1.msra.mxu0 0.0
      %637 = vmatprep.subr.mxu0 0.0
      %638 = vmatpush1.msra.mxu0 0.0
      %639 = vmatprep.subr.mxu0 0.0
      %640 = vmatpush1.msra.mxu0 0.0
      %641 = vmatprep.subr.mxu0 0.0
      %642 = vmatpush1.msra.mxu0 0.0
      %643 = vmatprep.subr.mxu0 0.0
      %644 = vmatpush1.msra.mxu0 0.0
      %645 = vmatprep.subr.mxu0 0.0
      %646 = vmatpush1.msra.mxu0 0.0
      %647 = vmatprep.subr.mxu0 0.0
      %648 = vmatpush1.msra.mxu0 0.0
      %649 = vmatprep.subr.mxu0 0.0
      %650 = vmatpush1.msra.mxu0 0.0
      %651 = vmatprep.subr.mxu0 0.0
      %652 = vmatpush1.msra.mxu0 0.0
      %653 = vmatprep.subr.mxu0 0.0
      %654 = vmatpush1.msra.mxu0 0.0
      %655 = vmatprep.subr.mxu0 0.0
      %656 = vmatpush1.msra.mxu0 0.0
      %657 = vmatprep.subr.mxu0 0.0
      %658 = vmatpush1.msra.mxu0 0.0
      %659 = vmatprep.subr.mxu0 0.0
      %660 = vmatpush1.msra.mxu0 0.0
      %661 = vmatprep.subr.mxu0 0.0
      %662 = vmatpush1.msra.mxu0 0.0
      %663 = vmatprep.subr.mxu0 0.0
      %664 = vmatpush1.msra.mxu0 0.0
      %665 = vmatprep.subr.mxu0 0.0
      %666 = vmatpush1.msra.mxu0 0.0
      %667 = vmatprep.subr.mxu0 0.0
      %668 = vmatpush1.msra.mxu0 0.0
      %669 = vmatprep.subr.mxu0 0.0
      %670 = vmatpush1.msra.mxu0 0.0
      %671 = vmatprep.subr.mxu0 0.0
      %672 = vmatpush1.msra.mxu0 0.0
      %673 = vmatprep.subr.mxu0 0.0
      %674 = vmatpush1.msra.mxu0 0.0
      %675 = vmatprep.subr.mxu0 0.0
      %676 = vmatpush1.msra.mxu0 0.0
      %677 = vmatprep.subr.mxu0 0.0
      %678 = vmatpush1.msra.mxu0 0.0
      %679 = vmatprep.subr.mxu0 0.0
      %680 = vmatpush1.msra.mxu0 0.0
      %681 = vmatprep.subr.mxu0 0.0
      %682 = vmatpush1.msra.mxu0 0.0
      %683 = vmatprep.subr.mxu0 0.0
      %684 = vmatpush1.msra.mxu0 0.0
      %685 = vmatprep.subr.mxu0 0.0
      %686 = vmatpush1.msra.mxu0 0.0
      %687 = vmatprep.mubr.f32.mxu0 0.0
      %688 = vmatmul.mubr.f32.gmra.mrb[0].mxu0 %v528
      %v689 = vpop.f32.mrb[0].mxu0
      %v690 = vadd.f32 0.0, %v689
      %v691 = vpop.f32.mrb[0].mxu0
      %692 = vmatprep.mubr.f32.mxu0 0.0
      %693 = vmatmul.mubr.f32.gmra.mrb[0].mxu0 %v531
      %v694 = vpop.f32.mrb[0].mxu0
      %v695 = vadd.f32 0.0, %v694
      %v696 = vpop.f32.mrb[0].mxu0
      %697 = vmatprep.mubr.f32.mxu0 0.0
      %698 = vmatmul.mubr.f32.gmra.mrb[0].mxu0 %v534
      %v699 = vpop.f32.mrb[0].mxu0
      %v700 = vadd.f32 0.0, %v699
      %v701 = vpop.f32.mrb[0].mxu0
      %702 = vmatprep.mubr.f32.mxu0 0.0
      %703 = vmatmul.mubr.f32.gmra.mrb[0].mxu0 %v537
      %v704 = vpop.f32.mrb[0].mxu0
      %v705 = vadd.f32 0.0, %v704
      %v706 = vpop.f32.mrb[0].mxu0
      %707 = vmatprep.mubr.f32.mxu0 0.0
      %708 = vmatmul.mubr.f32.gmra.mrb[0].mxu0 %v540
      %v709 = vpop.f32.mrb[0].mxu0
      %v710 = vadd.f32 0.0, %v709
      %v711 = vpop.f32.mrb[0].mxu0
      %712 = vmatprep.mubr.f32.mxu0 0.0
      %713 = vmatmul.mubr.f32.gmra.mrb[0].mxu0 %v543
      %v714 = vpop.f32.mrb[0].mxu0
      %v715 = vadd.f32 0.0, %v714
      %v716 = vpop.f32.mrb[0].mxu0
      %717 = vmatprep.mubr.f32.mxu0 0.0
      %718 = vmatmul.mubr.f32.gmra.mrb[0].mxu0 %v546
      %v719 = vpop.f32.mrb[0].mxu0
      %v720 = vadd.f32 0.0, %v719
      %v721 = vpop.f32.mrb[0].mxu0
      %722 = vmatprep.mubr.f32.mxu0 0.0
      %723 = vmatmul.mubr.f32.gmra.mrb[0].mxu0 %v549
      %v724 = vpop.f32.mrb[0].mxu0
      %v725 = vadd.f32 0.0, %v724
      %v726 = vpop.f32.mrb[0].mxu0
      %727 = vmatprep.mubr.f32.mxu0 0.0
      %728 = vmatmul.mubr.f32.gmra.mrb[0].mxu0 %v552
      %v729 = vpop.f32.mrb[0].mxu0
      %v730 = vadd.f32 0.0, %v729
      %v731 = vpop.f32.mrb[0].mxu0
      %732 = vmatprep.mubr.f32.mxu0 0.0
      %733 = vmatmul.mubr.f32.gmra.mrb[0].mxu0 %v555
      %v734 = vpop.f32.mrb[0].mxu0
      %v735 = vadd.f32 0.0, %v734
      %v736 = vpop.f32.mrb[0].mxu0
      %737 = vmatprep.mubr.f32.mxu0 0.0
      %738 = vmatmul.mubr.f32.gmra.mrb[0].mxu0 %v558
      %v739 = vpop.f32.mrb[0].mxu0
      %v740 = vadd.f32 0.0, %v739
      %v741 = vpop.f32.mrb[0].mxu0
      %742 = vmatprep.mubr.f32.mxu0 0.0
      %743 = vmatmul.mubr.f32.gmra.mrb[0].mxu0 %v561
      %v744 = vpop.f32.mrb[0].mxu0
      %v745 = vadd.f32 0.0, %v744
      %v746 = vpop.f32.mrb[0].mxu0
      %747 = vmatprep.mubr.f32.mxu0 0.0
      %748 = vmatmul.mubr.f32.gmra.mrb[0].mxu0 %v564
      %v749 = vpop.f32.mrb[0].mxu0
      %v750 = vadd.f32 0.0, %v749
      %v751 = vpop.f32.mrb[0].mxu0
      %752 = vmatprep.mubr.f32.mxu0 0.0
      %753 = vmatmul.mubr.f32.gmra.mrb[0].mxu0 %v567
      %v754 = vpop.f32.mrb[0].mxu0
      %v755 = vadd.f32 0.0, %v754
      %v756 = vpop.f32.mrb[0].mxu0
      %757 = vmatprep.mubr.f32.mxu0 0.0
      %758 = vmatmul.mubr.f32.gmra.mrb[0].mxu0 %v570
      %v759 = vpop.f32.mrb[0].mxu0
      %v760 = vadd.f32 0.0, %v759
      %v761 = vpop.f32.mrb[0].mxu0
      %762 = vmatprep.mubr.f32.mxu0 0.0
      %763 = vmatmul.mubr.f32.gmra.mrb[0].mxu0 %v573
      %v764 = vpop.f32.mrb[0].mxu0
      %v765 = vadd.f32 0.0, %v764
      %v766 = vpop.f32.mrb[0].mxu0
      %767 = vmatprep.mubr.f32.mxu0 0.0
      %768 = vmatmul.mubr.f32.gmra.mrb[0].mxu0 %v576
      %v769 = vpop.f32.mrb[0].mxu0
      %v770 = vadd.f32 0.0, %v769
      %v771 = vpop.f32.mrb[0].mxu0
      %772 = vmatprep.mubr.f32.mxu0 0.0
      %773 = vmatmul.mubr.f32.gmra.mrb[0].mxu0 %v579
      %v774 = vpop.f32.mrb[0].mxu0
      %v775 = vadd.f32 0.0, %v774
      %v776 = vpop.f32.mrb[0].mxu0
      %777 = vmatprep.mubr.f32.mxu0 0.0
      %778 = vmatmul.mubr.f32.gmra.mrb[0].mxu0 %v582
      %v779 = vpop.f32.mrb[0].mxu0
      %v780 = vadd.f32 0.0, %v779
      %v781 = vpop.f32.mrb[0].mxu0
      %782 = vmatprep.mubr.f32.mxu0 0.0
      %783 = vmatmul.mubr.f32.gmra.mrb[0].mxu0 %v585
      %v784 = vpop.f32.mrb[0].mxu0
      %v785 = vadd.f32 0.0, %v784
      %v786 = vpop.f32.mrb[0].mxu0
      %787 = vmatprep.mubr.f32.mxu0 0.0
      %788 = vmatmul.mubr.f32.gmra.mrb[0].mxu0 %v588
      %v789 = vpop.f32.mrb[0].mxu0
      %v790 = vadd.f32 0.0, %v789
      %v791 = vpop.f32.mrb[0].mxu0
      %792 = vmatprep.mubr.f32.mxu0 0.0
      %793 = vmatmul.mubr.f32.gmra.mrb[0].mxu0 %v591
      %v794 = vpop.f32.mrb[0].mxu0
      %v795 = vadd.f32 0.0, %v794
      %v796 = vpop.f32.mrb[0].mxu0
      %797 = vmatprep.mubr.f32.mxu0 0.0
      %798 = vmatmul.mubr.f32.gmra.mrb[0].mxu0 %v594
      %v799 = vpop.f32.mrb[0].mxu0
      %v800 = vadd.f32 0.0, %v799
      %v801 = vpop.f32.mrb[0].mxu0
      %802 = vmatprep.mubr.f32.mxu0 0.0
      %803 = vmatmul.mubr.f32.gmra.mrb[0].mxu0 %v597
      %v804 = vpop.f32.mrb[0].mxu0
      %v805 = vadd.f32 0.0, %v804
      %v806 = vpop.f32.mrb[0].mxu0
      %807 = vmatprep.mubr.f32.mxu0 0.0
      %808 = vmatmul.mubr.f32.gmra.mrb[0].mxu0 %v600
      %v809 = vpop.f32.mrb[0].mxu0
      %v810 = vadd.f32 0.0, %v809
      %v811 = vpop.f32.mrb[0].mxu0
      %812 = vmatprep.mubr.f32.mxu0 0.0
      %813 = vmatmul.mubr.f32.gmra.mrb[0].mxu0 %v603
      %v814 = vpop.f32.mrb[0].mxu0
      %v815 = vadd.f32 0.0, %v814
      %v816 = vpop.f32.mrb[0].mxu0
      %817 = vmatprep.mubr.f32.mxu0 0.0
      %818 = vmatmul.mubr.f32.gmra.mrb[0].mxu0 %v606
      %v819 = vpop.f32.mrb[0].mxu0
      %v820 = vadd.f32 0.0, %v819
      %v821 = vpop.f32.mrb[0].mxu0
      %822 = vmatprep.mubr.f32.mxu0 0.0
      %823 = vmatmul.mubr.f32.gmra.mrb[0].mxu0 %v609
      %v824 = vpop.f32.mrb[0].mxu0
      %v825 = vadd.f32 0.0, %v824
      %v826 = vpop.f32.mrb[0].mxu0
      %827 = vmatprep.mubr.f32.mxu0 0.0
      %828 = vmatmul.mubr.f32.gmra.mrb[0].mxu0 %v612
      %v829 = vpop.f32.mrb[0].mxu0
      %v830 = vadd.f32 0.0, %v829
      %v831 = vpop.f32.mrb[0].mxu0
      %832 = vmatprep.mubr.f32.mxu0 0.0
      %833 = vmatmul.mubr.f32.gmra.mrb[0].mxu0 %v615
      %v834 = vpop.f32.mrb[0].mxu0
      %v835 = vadd.f32 0.0, %v834
      %v836 = vpop.f32.mrb[0].mxu0
      %837 = vmatprep.mubr.f32.mxu0 0.0
      %838 = vmatmul.mubr.f32.gmra.mrb[0].mxu0 %v618
      %v839 = vpop.f32.mrb[0].mxu0
      %v840 = vadd.f32 0.0, %v839
      %v841 = vpop.f32.mrb[0].mxu0
      %842 = vmatprep.mubr.f32.mxu0 0.0
      %843 = vmatmul.mubr.f32.gmra.mrb[0].mxu0 %v621
      %v844 = vpop.f32.mrb[0].mxu0
      %v845 = vadd.f32 0.0, %v844
      %v846 = vpop.f32.mrb[0].mxu0
      %847 = vdwg.mxu0
      %v848 = vpack.c.bf16 %v695, %v690
      %v849 = vpack.c.bf16 %v705, %v700
      %v850 = vpack.c.bf16 %v715, %v710
      %v851 = vpack.c.bf16 %v725, %v720
      %v852 = vpack.c.bf16 %v735, %v730
      %v853 = vpack.c.bf16 %v745, %v740
      %v854 = vpack.c.bf16 %v755, %v750
      %v855 = vpack.c.bf16 %v765, %v760
      %v856 = vpack.c.bf16 %v775, %v770
      %v857 = vpack.c.bf16 %v785, %v780
      %v858 = vpack.c.bf16 %v795, %v790
      %v859 = vpack.c.bf16 %v805, %v800
      %v860 = vpack.c.bf16 %v815, %v810
      %v861 = vpack.c.bf16 %v825, %v820
      %v862 = vpack.c.bf16 %v835, %v830
      %v863 = vpack.c.bf16 %v845, %v840
      %864 = vmatprep.subr.mxu0 0.0
      %865 = vmatpush1.msra.mxu0 %v332
      %866 = vmatprep.subr.mxu0 0.0
      %867 = vmatpush1.msra.mxu0 0.0
      %868 = vmatprep.subr.mxu0 0.0
      %869 = vmatpush1.msra.mxu0 0.0
      %870 = vmatprep.subr.mxu0 0.0
      %871 = vmatpush1.msra.mxu0 0.0
      %872 = vmatprep.subr.mxu0 0.0
      %873 = vmatpush1.msra.mxu0 0.0
      %874 = vmatprep.subr.mxu0 0.0
      %875 = vmatpush1.msra.mxu0 0.0
      %876 = vmatprep.subr.mxu0 0.0
      %877 = vmatpush1.msra.mxu0 0.0
      %878 = vmatprep.subr.mxu0 0.0
      %879 = vmatpush1.msra.mxu0 0.0
      %880 = vmatprep.subr.mxu0 0.0
      %881 = vmatpush1.msra.mxu0 0.0
      %882 = vmatprep.subr.mxu0 0.0
      %883 = vmatpush1.msra.mxu0 0.0
      %884 = vmatprep.subr.mxu0 0.0
      %885 = vmatpush1.msra.mxu0 0.0
      %886 = vmatprep.subr.mxu0 0.0
      %887 = vmatpush1.msra.mxu0 0.0
      %888 = vmatprep.subr.mxu0 0.0
      %889 = vmatpush1.msra.mxu0 0.0
      %890 = vmatprep.subr.mxu0 0.0
      %891 = vmatpush1.msra.mxu0 0.0
      %892 = vmatprep.subr.mxu0 0.0
      %893 = vmatpush1.msra.mxu0 0.0
      %894 = vmatprep.subr.mxu0 0.0
      %895 = vmatpush1.msra.mxu0 0.0
      %896 = vmatprep.subr.mxu0 0.0
      %897 = vmatpush1.msra.mxu0 0.0
      %898 = vmatprep.subr.mxu0 0.0
      %899 = vmatpush1.msra.mxu0 0.0
      %900 = vmatprep.subr.mxu0 0.0
      %901 = vmatpush1.msra.mxu0 0.0
      %902 = vmatprep.subr.mxu0 0.0
      %903 = vmatpush1.msra.mxu0 0.0
      %904 = vmatprep.subr.mxu0 0.0
      %905 = vmatpush1.msra.mxu0 0.0
      %906 = vmatprep.subr.mxu0 0.0
      %907 = vmatpush1.msra.mxu0 0.0
      %908 = vmatprep.subr.mxu0 0.0
      %909 = vmatpush1.msra.mxu0 0.0
      %910 = vmatprep.subr.mxu0 0.0
      %911 = vmatpush1.msra.mxu0 0.0
      %912 = vmatprep.subr.mxu0 0.0
      %913 = vmatpush1.msra.mxu0 0.0
      %914 = vmatprep.subr.mxu0 0.0
      %915 = vmatpush1.msra.mxu0 0.0
      %916 = vmatprep.subr.mxu0 0.0
      %917 = vmatpush1.msra.mxu0 0.0
      %918 = vmatprep.subr.mxu0 0.0
      %919 = vmatpush1.msra.mxu0 0.0
      %920 = vmatprep.subr.mxu0 0.0
      %921 = vmatpush1.msra.mxu0 0.0
      %922 = vmatprep.subr.mxu0 0.0
      %923 = vmatpush1.msra.mxu0 0.0
      %924 = vmatprep.subr.mxu0 0.0
      %925 = vmatpush1.msra.mxu0 0.0
      %926 = vmatprep.subr.mxu0 0.0
      %927 = vmatpush1.msra.mxu0 0.0
      %928 = vmatprep.mubr.f32.mxu0 0.0
      %929 = vmatmul.mubr.f32.gmra.mrb[0].mxu0 %v528
      %v930 = vpop.f32.mrb[0].mxu0
      %v931 = vadd.f32 0.0, %v930
      %v932 = vpop.f32.mrb[0].mxu0
      %933 = vmatprep.mubr.f32.mxu0 0.0
      %934 = vmatmul.mubr.f32.gmra.mrb[0].mxu0 %v531
      %v935 = vpop.f32.mrb[0].mxu0
      %v936 = vadd.f32 0.0, %v935
      %v937 = vpop.f32.mrb[0].mxu0
      %938 = vmatprep.mubr.f32.mxu0 0.0
      %939 = vmatmul.mubr.f32.gmra.mrb[0].mxu0 %v534
      %v940 = vpop.f32.mrb[0].mxu0
      %v941 = vadd.f32 0.0, %v940
      %v942 = vpop.f32.mrb[0].mxu0
      %943 = vmatprep.mubr.f32.mxu0 0.0
      %944 = vmatmul.mubr.f32.gmra.mrb[0].mxu0 %v537
      %v945 = vpop.f32.mrb[0].mxu0
      %v946 = vadd.f32 0.0, %v945
      %v947 = vpop.f32.mrb[0].mxu0
      %948 = vmatprep.mubr.f32.mxu0 0.0
      %949 = vmatmul.mubr.f32.gmra.mrb[0].mxu0 %v540
      %v950 = vpop.f32.mrb[0].mxu0
      %v951 = vadd.f32 0.0, %v950
      %v952 = vpop.f32.mrb[0].mxu0
      %953 = vmatprep.mubr.f32.mxu0 0.0
      %954 = vmatmul.mubr.f32.gmra.mrb[0].mxu0 %v543
      %v955 = vpop.f32.mrb[0].mxu0
      %v956 = vadd.f32 0.0, %v955
      %v957 = vpop.f32.mrb[0].mxu0
      %958 = vmatprep.mubr.f32.mxu0 0.0
      %959 = vmatmul.mubr.f32.gmra.mrb[0].mxu0 %v546
      %v960 = vpop.f32.mrb[0].mxu0
      %v961 = vadd.f32 0.0, %v960
      %v962 = vpop.f32.mrb[0].mxu0
      %963 = vmatprep.mubr.f32.mxu0 0.0
      %964 = vmatmul.mubr.f32.gmra.mrb[0].mxu0 %v549
      %v965 = vpop.f32.mrb[0].mxu0
      %v966 = vadd.f32 0.0, %v965
      %v967 = vpop.f32.mrb[0].mxu0
      %968 = vmatprep.mubr.f32.mxu0 0.0
      %969 = vmatmul.mubr.f32.gmra.mrb[0].mxu0 %v552
      %v970 = vpop.f32.mrb[0].mxu0
      %v971 = vadd.f32 0.0, %v970
      %v972 = vpop.f32.mrb[0].mxu0
      %973 = vmatprep.mubr.f32.mxu0 0.0
      %974 = vmatmul.mubr.f32.gmra.mrb[0].mxu0 %v555
      %v975 = vpop.f32.mrb[0].mxu0
      %v976 = vadd.f32 0.0, %v975
      %v977 = vpop.f32.mrb[0].mxu0
      %978 = vmatprep.mubr.f32.mxu0 0.0
      %979 = vmatmul.mubr.f32.gmra.mrb[0].mxu0 %v558
      %v980 = vpop.f32.mrb[0].mxu0
      %v981 = vadd.f32 0.0, %v980
      %v982 = vpop.f32.mrb[0].mxu0
      %983 = vmatprep.mubr.f32.mxu0 0.0
      %984 = vmatmul.mubr.f32.gmra.mrb[0].mxu0 %v561
      %v985 = vpop.f32.mrb[0].mxu0
      %v986 = vadd.f32 0.0, %v985
      %v987 = vpop.f32.mrb[0].mxu0
      %988 = vmatprep.mubr.f32.mxu0 0.0
      %989 = vmatmul.mubr.f32.gmra.mrb[0].mxu0 %v564
      %v990 = vpop.f32.mrb[0].mxu0
      %v991 = vadd.f32 0.0, %v990
      %v992 = vpop.f32.mrb[0].mxu0
      %993 = vmatprep.mubr.f32.mxu0 0.0
      %994 = vmatmul.mubr.f32.gmra.mrb[0].mxu0 %v567
      %v995 = vpop.f32.mrb[0].mxu0
      %v996 = vadd.f32 0.0, %v995
      %v997 = vpop.f32.mrb[0].mxu0
      %998 = vmatprep.mubr.f32.mxu0 0.0
      %999 = vmatmul.mubr.f32.gmra.mrb[0].mxu0 %v570
      %v1000 = vpop.f32.mrb[0].mxu0
      %v1001 = vadd.f32 0.0, %v1000
      %v1002 = vpop.f32.mrb[0].mxu0
      %1003 = vmatprep.mubr.f32.mxu0 0.0
      %1004 = vmatmul.mubr.f32.gmra.mrb[0].mxu0 %v573
      %v1005 = vpop.f32.mrb[0].mxu0
      %v1006 = vadd.f32 0.0, %v1005
      %v1007 = vpop.f32.mrb[0].mxu0
      %1008 = vmatprep.mubr.f32.mxu0 0.0
      %1009 = vmatmul.mubr.f32.gmra.mrb[0].mxu0 %v576
      %v1010 = vpop.f32.mrb[0].mxu0
      %v1011 = vadd.f32 0.0, %v1010
      %v1012 = vpop.f32.mrb[0].mxu0
      %1013 = vmatprep.mubr.f32.mxu0 0.0
      %1014 = vmatmul.mubr.f32.gmra.mrb[0].mxu0 %v579
      %v1015 = vpop.f32.mrb[0].mxu0
      %v1016 = vadd.f32 0.0, %v1015
      %v1017 = vpop.f32.mrb[0].mxu0
      %1018 = vmatprep.mubr.f32.mxu0 0.0
      %1019 = vmatmul.mubr.f32.gmra.mrb[0].mxu0 %v582
      %v1020 = vpop.f32.mrb[0].mxu0
      %v1021 = vadd.f32 0.0, %v1020
      %v1022 = vpop.f32.mrb[0].mxu0
      %1023 = vmatprep.mubr.f32.mxu0 0.0
      %1024 = vmatmul.mubr.f32.gmra.mrb[0].mxu0 %v585
      %v1025 = vpop.f32.mrb[0].mxu0
      %v1026 = vadd.f32 0.0, %v1025
      %v1027 = vpop.f32.mrb[0].mxu0
      %1028 = vmatprep.mubr.f32.mxu0 0.0
      %1029 = vmatmul.mubr.f32.gmra.mrb[0].mxu0 %v588
      %v1030 = vpop.f32.mrb[0].mxu0
      %v1031 = vadd.f32 0.0, %v1030
      %v1032 = vpop.f32.mrb[0].mxu0
      %1033 = vmatprep.mubr.f32.mxu0 0.0
      %1034 = vmatmul.mubr.f32.gmra.mrb[0].mxu0 %v591
      %v1035 = vpop.f32.mrb[0].mxu0
      %v1036 = vadd.f32 0.0, %v1035
      %v1037 = vpop.f32.mrb[0].mxu0
      %1038 = vmatprep.mubr.f32.mxu0 0.0
      %1039 = vmatmul.mubr.f32.gmra.mrb[0].mxu0 %v594
      %v1040 = vpop.f32.mrb[0].mxu0
      %v1041 = vadd.f32 0.0, %v1040
      %v1042 = vpop.f32.mrb[0].mxu0
      %1043 = vmatprep.mubr.f32.mxu0 0.0
      %1044 = vmatmul.mubr.f32.gmra.mrb[0].mxu0 %v597
      %v1045 = vpop.f32.mrb[0].mxu0
      %v1046 = vadd.f32 0.0, %v1045
      %v1047 = vpop.f32.mrb[0].mxu0
      %1048 = vmatprep.mubr.f32.mxu0 0.0
      %1049 = vmatmul.mubr.f32.gmra.mrb[0].mxu0 %v600
      %v1050 = vpop.f32.mrb[0].mxu0
      %v1051 = vadd.f32 0.0, %v1050
      %v1052 = vpop.f32.mrb[0].mxu0
      %1053 = vmatprep.mubr.f32.mxu0 0.0
      %1054 = vmatmul.mubr.f32.gmra.mrb[0].mxu0 %v603
      %v1055 = vpop.f32.mrb[0].mxu0
      %v1056 = vadd.f32 0.0, %v1055
      %v1057 = vpop.f32.mrb[0].mxu0
      %1058 = vmatprep.mubr.f32.mxu0 0.0
      %1059 = vmatmul.mubr.f32.gmra.mrb[0].mxu0 %v606
      %v1060 = vpop.f32.mrb[0].mxu0
      %v1061 = vadd.f32 0.0, %v1060
      %v1062 = vpop.f32.mrb[0].mxu0
      %1063 = vmatprep.mubr.f32.mxu0 0.0
      %1064 = vmatmul.mubr.f32.gmra.mrb[0].mxu0 %v609
      %v1065 = vpop.f32.mrb[0].mxu0
      %v1066 = vadd.f32 0.0, %v1065
      %v1067 = vpop.f32.mrb[0].mxu0
      %1068 = vmatprep.mubr.f32.mxu0 0.0
      %1069 = vmatmul.mubr.f32.gmra.mrb[0].mxu0 %v612
      %v1070 = vpop.f32.mrb[0].mxu0
      %v1071 = vadd.f32 0.0, %v1070
      %v1072 = vpop.f32.mrb[0].mxu0
      %1073 = vmatprep.mubr.f32.mxu0 0.0
      %1074 = vmatmul.mubr.f32.gmra.mrb[0].mxu0 %v615
      %v1075 = vpop.f32.mrb[0].mxu0
      %v1076 = vadd.f32 0.0, %v1075
      %v1077 = vpop.f32.mrb[0].mxu0
      %1078 = vmatprep.mubr.f32.mxu0 0.0
      %1079 = vmatmul.mubr.f32.gmra.mrb[0].mxu0 %v618
      %v1080 = vpop.f32.mrb[0].mxu0
      %v1081 = vadd.f32 0.0, %v1080
      %v1082 = vpop.f32.mrb[0].mxu0
      %1083 = vmatprep.mubr.f32.mxu0 0.0
      %1084 = vmatmul.mubr.f32.gmra.mrb[0].mxu0 %v621
      %v1085 = vpop.f32.mrb[0].mxu0
      %v1086 = vadd.f32 0.0, %v1085
      %v1087 = vpop.f32.mrb[0].mxu0
      %1088 = vdwg.mxu0
      %v1089 = vpack.c.bf16 %v936, %v931
      %v1090 = vpack.c.bf16 %v946, %v941
      %v1091 = vpack.c.bf16 %v956, %v951
      %v1092 = vpack.c.bf16 %v966, %v961
      %v1093 = vpack.c.bf16 %v976, %v971
      %v1094 = vpack.c.bf16 %v986, %v981
      %v1095 = vpack.c.bf16 %v996, %v991
      %v1096 = vpack.c.bf16 %v1006, %v1001
      %v1097 = vpack.c.bf16 %v1016, %v1011
      %v1098 = vpack.c.bf16 %v1026, %v1021
      %v1099 = vpack.c.bf16 %v1036, %v1031
      %v1100 = vpack.c.bf16 %v1046, %v1041
      %v1101 = vpack.c.bf16 %v1056, %v1051
      %v1102 = vpack.c.bf16 %v1066, %v1061
      %v1103 = vpack.c.bf16 %v1076, %v1071
      %v1104 = vpack.c.bf16 %v1086, %v1081
      %v1105 = vpack.c.bf16 %v454, %v449
      %v1106 = vpack.c.bf16 %v464, %v459
      %v1107 = vpack.c.bf16 %v474, %v469
      %v1108 = vpack.c.bf16 %v484, %v479
      %v1109 = vpack.c.bf16 %v494, %v489
      %v1110 = vpack.c.bf16 %v504, %v499
      %v1111 = vpack.c.bf16 %v514, %v509
      %v1112 = vpack.c.bf16 %v524, %v519
      %vm1113 = vcmask 261120
      %v1115 = vsel %vm1113, %v1105, 0
      %v1118 = vsel %vm1113, %v1106, 0
      %v1121 = vsel %vm1113, %v1107, 0
      %v1124 = vsel %vm1113, %v1108, 0
      %v1127 = vsel %vm1113, %v1109, 0
      %v1130 = vsel %vm1113, %v1110, 0
      %v1133 = vsel %vm1113, %v1111, 0
      %v1136 = vsel %vm1113, %v1112, 0
      %v1139 = vsel %vm1113, %v848, 0
      %v1142 = vsel %vm1113, %v849, 0
      %v1145 = vsel %vm1113, %v850, 0
      %v1148 = vsel %vm1113, %v851, 0
      %v1151 = vsel %vm1113, %v852, 0
      %v1154 = vsel %vm1113, %v853, 0
      %v1157 = vsel %vm1113, %v854, 0
      %v1160 = vsel %vm1113, %v855, 0
      %v1163 = vsel %vm1113, %v856, 0
      %v1166 = vsel %vm1113, %v857, 0
      %v1169 = vsel %vm1113, %v858, 0
      %v1172 = vsel %vm1113, %v859, 0
      %v1175 = vsel %vm1113, %v860, 0
      %v1178 = vsel %vm1113, %v861, 0
      %v1181 = vsel %vm1113, %v862, 0
      %v1184 = vsel %vm1113, %v863, 0
      %1186 = vmatprep.subr.bf16.mxu0 0
      %1187 = vmatpush1.bf16.xpose.msra.mxu0 %v1139
      %1188 = vmatprep.subr.bf16.mxu0 0
      %1189 = vmatpush1.bf16.xpose.msra.mxu0 %v1142
      %1190 = vmatprep.subr.bf16.mxu0 0
      %1191 = vmatpush1.bf16.xpose.msra.mxu0 %v1145
      %1192 = vmatprep.subr.bf16.mxu0 0
      %1193 = vmatpush1.bf16.xpose.msra.mxu0 %v1148
      %1194 = vmatprep.subr.bf16.mxu0 0
      %1195 = vmatpush1.bf16.xpose.msra.mxu0 %v1151
      %1196 = vmatprep.subr.bf16.mxu0 0
      %1197 = vmatpush1.bf16.xpose.msra.mxu0 %v1154
      %1198 = vmatprep.subr.bf16.mxu0 0
      %1199 = vmatpush1.bf16.xpose.msra.mxu0 %v1157
      %1200 = vmatprep.subr.bf16.mxu0 0
      %1201 = vmatpush1.bf16.xpose.msra.mxu0 %v1160
      %1202 = vmatprep.subr.bf16.mxu0 0
      %1203 = vmatpush1.bf16.xpose.msra.mxu0 %v1163
      %1204 = vmatprep.subr.bf16.mxu0 0
      %1205 = vmatpush1.bf16.xpose.msra.mxu0 %v1166
      %1206 = vmatprep.subr.bf16.mxu0 0
      %1207 = vmatpush1.bf16.xpose.msra.mxu0 %v1169
      %1208 = vmatprep.subr.bf16.mxu0 0
      %1209 = vmatpush1.bf16.xpose.msra.mxu0 %v1172
      %1210 = vmatprep.subr.bf16.mxu0 0
      %1211 = vmatpush1.bf16.xpose.msra.mxu0 %v1175
      %1212 = vmatprep.subr.bf16.mxu0 0
      %1213 = vmatpush1.bf16.xpose.msra.mxu0 %v1178
      %1214 = vmatprep.subr.bf16.mxu0 0
      %1215 = vmatpush1.bf16.xpose.msra.mxu0 %v1181
      %1216 = vmatprep.subr.bf16.mxu0 0
      %1217 = vmatpush1.bf16.xpose.msra.mxu0 %v1184
      %1218 = vmatprep.mubr.bf16.mxu0 0
      %1219 = vmatmul.mubr.bf16.gmra.mrb[0].mxu0 %v1115
      %v1220 = vpop.f32.mrb[0].mxu0
      %v1221 = vadd.f32 0.0, %v1220
      %v1222 = vpop.f32.mrb[0].mxu0
      %v1223 = vadd.f32 0.0, %v1222
      %v1224 = vpop.f32.mrb[0].mxu0
      %v1225 = vadd.f32 0.0, %v1224
      %v1226 = vpop.f32.mrb[0].mxu0
      %v1227 = vadd.f32 0.0, %v1226
      %1228 = vmatprep.mubr.bf16.mxu0 0
      %1229 = vmatmul.mubr.bf16.gmra.mrb[0].mxu0 %v1118
      %v1230 = vpop.f32.mrb[0].mxu0
      %v1231 = vadd.f32 0.0, %v1230
      %v1232 = vpop.f32.mrb[0].mxu0
      %v1233 = vadd.f32 0.0, %v1232
      %v1234 = vpop.f32.mrb[0].mxu0
      %v1235 = vadd.f32 0.0, %v1234
      %v1236 = vpop.f32.mrb[0].mxu0
      %v1237 = vadd.f32 0.0, %v1236
      %1238 = vmatprep.mubr.bf16.mxu0 0
      %1239 = vmatmul.mubr.bf16.gmra.mrb[0].mxu0 %v1121
      %v1240 = vpop.f32.mrb[0].mxu0
      %v1241 = vadd.f32 0.0, %v1240
      %v1242 = vpop.f32.mrb[0].mxu0
      %v1243 = vadd.f32 0.0, %v1242
      %v1244 = vpop.f32.mrb[0].mxu0
      %v1245 = vadd.f32 0.0, %v1244
      %v1246 = vpop.f32.mrb[0].mxu0
      %v1247 = vadd.f32 0.0, %v1246
      %1248 = vmatprep.mubr.bf16.mxu0 0
      %1249 = vmatmul.mubr.bf16.gmra.mrb[0].mxu0 %v1124
      %v1250 = vpop.f32.mrb[0].mxu0
      %v1251 = vadd.f32 0.0, %v1250
      %v1252 = vpop.f32.mrb[0].mxu0
      %v1253 = vadd.f32 0.0, %v1252
      %v1254 = vpop.f32.mrb[0].mxu0
      %v1255 = vadd.f32 0.0, %v1254
      %v1256 = vpop.f32.mrb[0].mxu0
      %v1257 = vadd.f32 0.0, %v1256
      %1258 = vmatprep.mubr.bf16.mxu0 0
      %1259 = vmatmul.mubr.bf16.gmra.mrb[0].mxu0 %v1127
      %v1260 = vpop.f32.mrb[0].mxu0
      %v1261 = vadd.f32 0.0, %v1260
      %v1262 = vpop.f32.mrb[0].mxu0
      %v1263 = vadd.f32 0.0, %v1262
      %v1264 = vpop.f32.mrb[0].mxu0
      %v1265 = vadd.f32 0.0, %v1264
      %v1266 = vpop.f32.mrb[0].mxu0
      %v1267 = vadd.f32 0.0, %v1266
      %1268 = vmatprep.mubr.bf16.mxu0 0
      %1269 = vmatmul.mubr.bf16.gmra.mrb[0].mxu0 %v1130
      %v1270 = vpop.f32.mrb[0].mxu0
      %v1271 = vadd.f32 0.0, %v1270
      %v1272 = vpop.f32.mrb[0].mxu0
      %v1273 = vadd.f32 0.0, %v1272
      %v1274 = vpop.f32.mrb[0].mxu0
      %v1275 = vadd.f32 0.0, %v1274
      %v1276 = vpop.f32.mrb[0].mxu0
      %v1277 = vadd.f32 0.0, %v1276
      %1278 = vmatprep.mubr.bf16.mxu0 0
      %1279 = vmatmul.mubr.bf16.gmra.mrb[0].mxu0 %v1133
      %v1280 = vpop.f32.mrb[0].mxu0
      %v1281 = vadd.f32 0.0, %v1280
      %v1282 = vpop.f32.mrb[0].mxu0
      %v1283 = vadd.f32 0.0, %v1282
      %v1284 = vpop.f32.mrb[0].mxu0
      %v1285 = vadd.f32 0.0, %v1284
      %v1286 = vpop.f32.mrb[0].mxu0
      %v1287 = vadd.f32 0.0, %v1286
      %1288 = vmatprep.mubr.bf16.mxu0 0
      %1289 = vmatmul.mubr.bf16.gmra.mrb[0].mxu0 %v1136
      %v1290 = vpop.f32.mrb[0].mxu0
      %v1291 = vadd.f32 0.0, %v1290
      %v1292 = vpop.f32.mrb[0].mxu0
      %v1293 = vadd.f32 0.0, %v1292
      %v1294 = vpop.f32.mrb[0].mxu0
      %v1295 = vadd.f32 0.0, %v1294
      %v1296 = vpop.f32.mrb[0].mxu0
      %v1297 = vadd.f32 0.0, %v1296
      %1298 = vdwg.mxu0
      %v1299 = vmax.f32 %v1221, %v1223
      %1300 = vmax.xlane.f32.xlu0 %v1299
      %v1301 = vpop.xlane.xlu0 %1300
      %v1302 = vmax.f32 %v1225, %v1227
      %1303 = vmax.xlane.f32.xlu0 %v1302
      %v1304 = vpop.xlane.xlu0 %1303
      %v1305 = vmax.f32 %v1231, %v1233
      %1306 = vmax.xlane.f32.xlu0 %v1305
      %v1307 = vpop.xlane.xlu0 %1306
      %v1308 = vmax.f32 %v1235, %v1237
      %1309 = vmax.xlane.f32.xlu0 %v1308
      %v1310 = vpop.xlane.xlu0 %1309
      %v1311 = vmax.f32 %v1241, %v1243
      %1312 = vmax.xlane.f32.xlu0 %v1311
      %v1313 = vpop.xlane.xlu0 %1312
      %v1314 = vmax.f32 %v1245, %v1247
      %1315 = vmax.xlane.f32.xlu0 %v1314
      %v1316 = vpop.xlane.xlu0 %1315
      %v1317 = vmax.f32 %v1251, %v1253
      %1318 = vmax.xlane.f32.xlu0 %v1317
      %v1319 = vpop.xlane.xlu0 %1318
      %v1320 = vmax.f32 %v1255, %v1257
      %1321 = vmax.xlane.f32.xlu0 %v1320
      %v1322 = vpop.xlane.xlu0 %1321
      %v1323 = vmax.f32 %v1261, %v1263
      %1324 = vmax.xlane.f32.xlu0 %v1323
      %v1325 = vpop.xlane.xlu0 %1324
      %v1326 = vmax.f32 %v1265, %v1267
      %1327 = vmax.xlane.f32.xlu0 %v1326
      %v1328 = vpop.xlane.xlu0 %1327
      %v1329 = vmax.f32 %v1271, %v1273
      %1330 = vmax.xlane.f32.xlu0 %v1329
      %v1331 = vpop.xlane.xlu0 %1330
      %v1332 = vmax.f32 %v1275, %v1277
      %1333 = vmax.xlane.f32.xlu0 %v1332
      %v1334 = vpop.xlane.xlu0 %1333
      %v1335 = vmax.f32 %v1281, %v1283
      %1336 = vmax.xlane.f32.xlu0 %v1335
      %v1337 = vpop.xlane.xlu0 %1336
      %v1338 = vmax.f32 %v1285, %v1287
      %1339 = vmax.xlane.f32.xlu0 %v1338
      %v1340 = vpop.xlane.xlu0 %1339
      %v1341 = vmax.f32 %v1291, %v1293
      %1342 = vmax.xlane.f32.xlu0 %v1341
      %v1343 = vpop.xlane.xlu0 %1342
      %v1344 = vmax.f32 %v1295, %v1297
      %1345 = vmax.xlane.f32.xlu0 %v1344
      %v1346 = vpop.xlane.xlu0 %1345
      %v1347 = vsub.f32 %v1221, %v1301
      %v1348 = vsub.f32 %v1223, %v1301
      %v1349 = vsub.f32 %v1225, %v1304
      %v1350 = vsub.f32 %v1227, %v1304
      %v1351 = vsub.f32 %v1231, %v1307
      %v1352 = vsub.f32 %v1233, %v1307
      %v1353 = vsub.f32 %v1235, %v1310
      %v1354 = vsub.f32 %v1237, %v1310
      %v1355 = vsub.f32 %v1241, %v1313
      %v1356 = vsub.f32 %v1243, %v1313
      %v1357 = vsub.f32 %v1245, %v1316
      %v1358 = vsub.f32 %v1247, %v1316
      %v1359 = vsub.f32 %v1251, %v1319
      %v1360 = vsub.f32 %v1253, %v1319
      %v1361 = vsub.f32 %v1255, %v1322
      %v1362 = vsub.f32 %v1257, %v1322
      %v1363 = vsub.f32 %v1261, %v1325
      %v1364 = vsub.f32 %v1263, %v1325
      %v1365 = vsub.f32 %v1265, %v1328
      %v1366 = vsub.f32 %v1267, %v1328
      %v1367 = vsub.f32 %v1271, %v1331
      %v1368 = vsub.f32 %v1273, %v1331
      %v1369 = vsub.f32 %v1275, %v1334
      %v1370 = vsub.f32 %v1277, %v1334
      %v1371 = vsub.f32 %v1281, %v1337
      %v1372 = vsub.f32 %v1283, %v1337
      %v1373 = vsub.f32 %v1285, %v1340
      %v1374 = vsub.f32 %v1287, %v1340
      %v1375 = vsub.f32 %v1291, %v1343
      %v1376 = vsub.f32 %v1293, %v1343
      %v1377 = vsub.f32 %v1295, %v1346
      %v1378 = vsub.f32 %v1297, %v1346
      %v1379 = vmul.f32 %v1347, 1.442695
      %v1380 = vpow.pop %v1379
      %v1381 = vmul.f32 %v1348, 1.442695
      %v1382 = vpow.pop %v1381
      %v1383 = vmul.f32 %v1349, 1.442695
      %v1384 = vpow.pop %v1383
      %v1385 = vmul.f32 %v1350, 1.442695
      %v1386 = vpow.pop %v1385
      %v1387 = vmul.f32 %v1351, 1.442695
      %v1388 = vpow.pop %v1387
      %v1389 = vmul.f32 %v1352, 1.442695
      %v1390 = vpow.pop %v1389
      %v1391 = vmul.f32 %v1353, 1.442695
      %v1392 = vpow.pop %v1391
      %v1393 = vmul.f32 %v1354, 1.442695
      %v1394 = vpow.pop %v1393
      %v1395 = vmul.f32 %v1355, 1.442695
      %v1396 = vpow.pop %v1395
      %v1397 = vmul.f32 %v1356, 1.442695
      %v1398 = vpow.pop %v1397
      %v1399 = vmul.f32 %v1357, 1.442695
      %v1400 = vpow.pop %v1399
      %v1401 = vmul.f32 %v1358, 1.442695
      %v1402 = vpow.pop %v1401
      %v1403 = vmul.f32 %v1359, 1.442695
      %v1404 = vpow.pop %v1403
      %v1405 = vmul.f32 %v1360, 1.442695
      %v1406 = vpow.pop %v1405
      %v1407 = vmul.f32 %v1361, 1.442695
      %v1408 = vpow.pop %v1407
      %v1409 = vmul.f32 %v1362, 1.442695
      %v1410 = vpow.pop %v1409
      %v1411 = vmul.f32 %v1363, 1.442695
      %v1412 = vpow.pop %v1411
      %v1413 = vmul.f32 %v1364, 1.442695
      %v1414 = vpow.pop %v1413
      %v1415 = vmul.f32 %v1365, 1.442695
      %v1416 = vpow.pop %v1415
      %v1417 = vmul.f32 %v1366, 1.442695
      %v1418 = vpow.pop %v1417
      %v1419 = vmul.f32 %v1367, 1.442695
      %v1420 = vpow.pop %v1419
      %v1421 = vmul.f32 %v1368, 1.442695
      %v1422 = vpow.pop %v1421
      %v1423 = vmul.f32 %v1369, 1.442695
      %v1424 = vpow.pop %v1423
      %v1425 = vmul.f32 %v1370, 1.442695
      %v1426 = vpow.pop %v1425
      %v1427 = vmul.f32 %v1371, 1.442695
      %v1428 = vpow.pop %v1427
      %v1429 = vmul.f32 %v1372, 1.442695
      %v1430 = vpow.pop %v1429
      %v1431 = vmul.f32 %v1373, 1.442695
      %v1432 = vpow.pop %v1431
      %v1433 = vmul.f32 %v1374, 1.442695
      %v1434 = vpow.pop %v1433
      %v1435 = vmul.f32 %v1375, 1.442695
      %v1436 = vpow.pop %v1435
      %v1437 = vmul.f32 %v1376, 1.442695
      %v1438 = vpow.pop %v1437
      %v1439 = vmul.f32 %v1377, 1.442695
      %v1440 = vpow.pop %v1439
      %v1441 = vmul.f32 %v1378, 1.442695
      %v1442 = vpow.pop %v1441
      %v1443 = vadd.f32 %v1380, %v1382
      %1444 = vadd.xlane.f32.xlu0 %v1443
      %v1445 = vpop.xlane.xlu0 %1444
      %v1446 = vadd.f32 %v1384, %v1386
      %1447 = vadd.xlane.f32.xlu0 %v1446
      %v1448 = vpop.xlane.xlu0 %1447
      %v1449 = vadd.f32 %v1388, %v1390
      %1450 = vadd.xlane.f32.xlu0 %v1449
      %v1451 = vpop.xlane.xlu0 %1450
      %v1452 = vadd.f32 %v1392, %v1394
      %1453 = vadd.xlane.f32.xlu0 %v1452
      %v1454 = vpop.xlane.xlu0 %1453
      %v1455 = vadd.f32 %v1396, %v1398
      %1456 = vadd.xlane.f32.xlu0 %v1455
      %v1457 = vpop.xlane.xlu0 %1456
      %v1458 = vadd.f32 %v1400, %v1402
      %1459 = vadd.xlane.f32.xlu0 %v1458
      %v1460 = vpop.xlane.xlu0 %1459
      %v1461 = vadd.f32 %v1404, %v1406
      %1462 = vadd.xlane.f32.xlu0 %v1461
      %v1463 = vpop.xlane.xlu0 %1462
      %v1464 = vadd.f32 %v1408, %v1410
      %1465 = vadd.xlane.f32.xlu0 %v1464
      %v1466 = vpop.xlane.xlu0 %1465
      %v1467 = vadd.f32 %v1412, %v1414
      %1468 = vadd.xlane.f32.xlu0 %v1467
      %v1469 = vpop.xlane.xlu0 %1468
      %v1470 = vadd.f32 %v1416, %v1418
      %1471 = vadd.xlane.f32.xlu0 %v1470
      %v1472 = vpop.xlane.xlu0 %1471
      %v1473 = vadd.f32 %v1420, %v1422
      %1474 = vadd.xlane.f32.xlu0 %v1473
      %v1475 = vpop.xlane.xlu0 %1474
      %v1476 = vadd.f32 %v1424, %v1426
      %1477 = vadd.xlane.f32.xlu0 %v1476
      %v1478 = vpop.xlane.xlu0 %1477
      %v1479 = vadd.f32 %v1428, %v1430
      %1480 = vadd.xlane.f32.xlu0 %v1479
      %v1481 = vpop.xlane.xlu0 %1480
      %v1482 = vadd.f32 %v1432, %v1434
      %1483 = vadd.xlane.f32.xlu0 %v1482
      %v1484 = vpop.xlane.xlu0 %1483
      %v1485 = vadd.f32 %v1436, %v1438
      %1486 = vadd.xlane.f32.xlu0 %v1485
      %v1487 = vpop.xlane.xlu0 %1486
      %v1488 = vadd.f32 %v1440, %v1442
      %1489 = vadd.xlane.f32.xlu0 %v1488
      %v1490 = vpop.xlane.xlu0 %1489
      %v1491 = vpack.c.bf16 %v1384, %v1380
      %v1492 = vpack.c.bf16 %v1386, %v1382
      %v1493 = vpack.c.bf16 %v1392, %v1388
      %v1494 = vpack.c.bf16 %v1394, %v1390
      %v1495 = vpack.c.bf16 %v1400, %v1396
      %v1496 = vpack.c.bf16 %v1402, %v1398
      %v1497 = vpack.c.bf16 %v1408, %v1404
      %v1498 = vpack.c.bf16 %v1410, %v1406
      %v1499 = vpack.c.bf16 %v1416, %v1412
      %v1500 = vpack.c.bf16 %v1418, %v1414
      %v1501 = vpack.c.bf16 %v1424, %v1420
      %v1502 = vpack.c.bf16 %v1426, %v1422
      %v1503 = vpack.c.bf16 %v1432, %v1428
      %v1504 = vpack.c.bf16 %v1434, %v1430
      %v1505 = vpack.c.bf16 %v1440, %v1436
      %v1506 = vpack.c.bf16 %v1442, %v1438
      %1507 = vmatprep.subr.bf16.mxu0 0
      %1508 = vmatpush1.bf16.msra.mxu0 %v1089
      %1509 = vmatprep.subr.bf16.mxu0 0
      %1510 = vmatpush1.bf16.msra.mxu0 %v1090
      %1511 = vmatprep.subr.bf16.mxu0 0
      %1512 = vmatpush1.bf16.msra.mxu0 %v1091
      %1513 = vmatprep.subr.bf16.mxu0 0
      %1514 = vmatpush1.bf16.msra.mxu0 %v1092
      %1515 = vmatprep.subr.bf16.mxu0 0
      %1516 = vmatpush1.bf16.msra.mxu0 %v1093
      %1517 = vmatprep.subr.bf16.mxu0 0
      %1518 = vmatpush1.bf16.msra.mxu0 %v1094
      %1519 = vmatprep.subr.bf16.mxu0 0
      %1520 = vmatpush1.bf16.msra.mxu0 %v1095
      %1521 = vmatprep.subr.bf16.mxu0 0
      %1522 = vmatpush1.bf16.msra.mxu0 %v1096
      %1523 = vmatprep.subr.bf16.mxu0 0
      %1524 = vmatpush1.bf16.msra.mxu0 %v1097
      %1525 = vmatprep.subr.bf16.mxu0 0
      %1526 = vmatpush1.bf16.msra.mxu0 %v1098
      %1527 = vmatprep.subr.bf16.mxu0 0
      %1528 = vmatpush1.bf16.msra.mxu0 %v1099
      %1529 = vmatprep.subr.bf16.mxu0 0
      %1530 = vmatpush1.bf16.msra.mxu0 %v1100
      %1531 = vmatprep.subr.bf16.mxu0 0
      %1532 = vmatpush1.bf16.msra.mxu0 %v1101
      %1533 = vmatprep.subr.bf16.mxu0 0
      %1534 = vmatpush1.bf16.msra.mxu0 %v1102
      %1535 = vmatprep.subr.bf16.mxu0 0
      %1536 = vmatpush1.bf16.msra.mxu0 %v1103
      %1537 = vmatprep.subr.bf16.mxu0 0
      %1538 = vmatpush1.bf16.msra.mxu0 %v1104
      %1539 = vmatprep.mubr.bf16.mxu0 %v1492
      %1540 = vmatmul.mubr.bf16.gmra.mrb[0].mxu0 %v1491
      %v1541 = vpop.f32.mrb[0].mxu0
      %v1542 = vadd.f32 0.0, %v1541
      %v1543 = vpop.f32.mrb[0].mxu0
      %v1544 = vpop.f32.mrb[0].mxu0
      %v1545 = vadd.f32 0.0, %v1544
      %v1546 = vpop.f32.mrb[0].mxu0
      %1547 = vmatprep.mubr.bf16.mxu0 %v1494
      %1548 = vmatmul.mubr.bf16.gmra.mrb[0].mxu0 %v1493
      %v1549 = vpop.f32.mrb[0].mxu0
      %v1550 = vadd.f32 0.0, %v1549
      %v1551 = vpop.f32.mrb[0].mxu0
      %v1552 = vpop.f32.mrb[0].mxu0
      %v1553 = vadd.f32 0.0, %v1552
      %v1554 = vpop.f32.mrb[0].mxu0
      %1555 = vmatprep.mubr.bf16.mxu0 %v1496
      %1556 = vmatmul.mubr.bf16.gmra.mrb[0].mxu0 %v1495
      %v1557 = vpop.f32.mrb[0].mxu0
      %v1558 = vadd.f32 0.0, %v1557
      %v1559 = vpop.f32.mrb[0].mxu0
      %v1560 = vpop.f32.mrb[0].mxu0
      %v1561 = vadd.f32 0.0, %v1560
      %v1562 = vpop.f32.mrb[0].mxu0
      %1563 = vmatprep.mubr.bf16.mxu0 %v1498
      %1564 = vmatmul.mubr.bf16.gmra.mrb[0].mxu0 %v1497
      %v1565 = vpop.f32.mrb[0].mxu0
      %v1566 = vadd.f32 0.0, %v1565
      %v1567 = vpop.f32.mrb[0].mxu0
      %v1568 = vpop.f32.mrb[0].mxu0
      %v1569 = vadd.f32 0.0, %v1568
      %v1570 = vpop.f32.mrb[0].mxu0
      %1571 = vmatprep.mubr.bf16.mxu0 %v1500
      %1572 = vmatmul.mubr.bf16.gmra.mrb[0].mxu0 %v1499
      %v1573 = vpop.f32.mrb[0].mxu0
      %v1574 = vadd.f32 0.0, %v1573
      %v1575 = vpop.f32.mrb[0].mxu0
      %v1576 = vpop.f32.mrb[0].mxu0
      %v1577 = vadd.f32 0.0, %v1576
      %v1578 = vpop.f32.mrb[0].mxu0
      %1579 = vmatprep.mubr.bf16.mxu0 %v1502
      %1580 = vmatmul.mubr.bf16.gmra.mrb[0].mxu0 %v1501
      %v1581 = vpop.f32.mrb[0].mxu0
      %v1582 = vadd.f32 0.0, %v1581
      %v1583 = vpop.f32.mrb[0].mxu0
      %v1584 = vpop.f32.mrb[0].mxu0
      %v1585 = vadd.f32 0.0, %v1584
      %v1586 = vpop.f32.mrb[0].mxu0
      %1587 = vmatprep.mubr.bf16.mxu0 %v1504
      %1588 = vmatmul.mubr.bf16.gmra.mrb[0].mxu0 %v1503
      %v1589 = vpop.f32.mrb[0].mxu0
      %v1590 = vadd.f32 0.0, %v1589
      %v1591 = vpop.f32.mrb[0].mxu0
      %v1592 = vpop.f32.mrb[0].mxu0
      %v1593 = vadd.f32 0.0, %v1592
      %v1594 = vpop.f32.mrb[0].mxu0
      %1595 = vmatprep.mubr.bf16.mxu0 %v1506
      %1596 = vmatmul.mubr.bf16.gmra.mrb[0].mxu0 %v1505
      %v1597 = vpop.f32.mrb[0].mxu0
      %v1598 = vadd.f32 0.0, %v1597
      %v1599 = vpop.f32.mrb[0].mxu0
      %v1600 = vpop.f32.mrb[0].mxu0
      %v1601 = vadd.f32 0.0, %v1600
      %v1602 = vpop.f32.mrb[0].mxu0
      %1603 = vdwg.mxu0
      %v1604 = vrcp.pop %v1445
      %v1605 = vrcp.pop %v1448
      %v1606 = vrcp.pop %v1451
      %v1607 = vrcp.pop %v1454
      %v1608 = vrcp.pop %v1457
      %v1609 = vrcp.pop %v1460
      %v1610 = vrcp.pop %v1463
      %v1611 = vrcp.pop %v1466
      %v1612 = vrcp.pop %v1469
      %v1613 = vrcp.pop %v1472
      %v1614 = vrcp.pop %v1475
      %v1615 = vrcp.pop %v1478
      %v1616 = vrcp.pop %v1481
      %v1617 = vrcp.pop %v1484
      %v1618 = vrcp.pop %v1487
      %v1619 = vrcp.pop %v1490
      %v1620 = vmul.f32 %v1542, %v1604
      %v1621 = vmul.f32 %v1545, %v1605
      %v1622 = vmul.f32 %v1550, %v1606
      %v1623 = vmul.f32 %v1553, %v1607
      %v1624 = vmul.f32 %v1558, %v1608
      %v1625 = vmul.f32 %v1561, %v1609
      %v1626 = vmul.f32 %v1566, %v1610
      %v1627 = vmul.f32 %v1569, %v1611
      %v1628 = vmul.f32 %v1574, %v1612
      %v1629 = vmul.f32 %v1577, %v1613
      %v1630 = vmul.f32 %v1582, %v1614
      %v1631 = vmul.f32 %v1585, %v1615
      %v1632 = vmul.f32 %v1590, %v1616
      %v1633 = vmul.f32 %v1593, %v1617
      %v1634 = vmul.f32 %v1598, %v1618
      %v1635 = vmul.f32 %v1601, %v1619
      %1644 = vrot.lane.b32.xlu0 %v1105, 96
      %v1645 = vpop.permute.xlu0 %1644
      %1646 = vrot.lane.b32.xlu0 %v1106, 96
      %v1647 = vpop.permute.xlu0 %1646
      %1648 = vrot.lane.b32.xlu0 %v1107, 96
      %v1649 = vpop.permute.xlu0 %1648
      %1650 = vrot.lane.b32.xlu0 %v1108, 96
      %v1651 = vpop.permute.xlu0 %1650
      %1652 = vrot.lane.b32.xlu0 %v1109, 96
      %v1653 = vpop.permute.xlu0 %1652
      %1654 = vrot.lane.b32.xlu0 %v1110, 96
      %v1655 = vpop.permute.xlu0 %1654
      %1656 = vrot.lane.b32.xlu0 %v1111, 96
      %v1657 = vpop.permute.xlu0 %1656
      %1658 = vrot.lane.b32.xlu0 %v1112, 96
      %v1659 = vpop.permute.xlu0 %1658
      %1676 = vrot.lane.b32.xlu0 %v848, 96
      %v1677 = vpop.permute.xlu0 %1676
      %1678 = vrot.lane.b32.xlu0 %v849, 96
      %v1679 = vpop.permute.xlu0 %1678
      %1680 = vrot.lane.b32.xlu0 %v850, 96
      %v1681 = vpop.permute.xlu0 %1680
      %1682 = vrot.lane.b32.xlu0 %v851, 96
      %v1683 = vpop.permute.xlu0 %1682
      %1684 = vrot.lane.b32.xlu0 %v852, 96
      %v1685 = vpop.permute.xlu0 %1684
      %1686 = vrot.lane.b32.xlu0 %v853, 96
      %v1687 = vpop.permute.xlu0 %1686
      %1688 = vrot.lane.b32.xlu0 %v854, 96
      %v1689 = vpop.permute.xlu0 %1688
      %1690 = vrot.lane.b32.xlu0 %v855, 96
      %v1691 = vpop.permute.xlu0 %1690
      %1692 = vrot.lane.b32.xlu0 %v856, 96
      %v1693 = vpop.permute.xlu0 %1692
      %1694 = vrot.lane.b32.xlu0 %v857, 96
      %v1695 = vpop.permute.xlu0 %1694
      %1696 = vrot.lane.b32.xlu0 %v858, 96
      %v1697 = vpop.permute.xlu0 %1696
      %1698 = vrot.lane.b32.xlu0 %v859, 96
      %v1699 = vpop.permute.xlu0 %1698
      %1700 = vrot.lane.b32.xlu0 %v860, 96
      %v1701 = vpop.permute.xlu0 %1700
      %1702 = vrot.lane.b32.xlu0 %v861, 96
      %v1703 = vpop.permute.xlu0 %1702
      %1704 = vrot.lane.b32.xlu0 %v862, 96
      %v1705 = vpop.permute.xlu0 %1704
      %1706 = vrot.lane.b32.xlu0 %v863, 96
      %v1707 = vpop.permute.xlu0 %1706
      %v1709 = vsel %vm1113, %v1645, 0
      %v1712 = vsel %vm1113, %v1647, 0
      %v1715 = vsel %vm1113, %v1649, 0
      %v1718 = vsel %vm1113, %v1651, 0
      %v1721 = vsel %vm1113, %v1653, 0
      %v1724 = vsel %vm1113, %v1655, 0
      %v1727 = vsel %vm1113, %v1657, 0
      %v1730 = vsel %vm1113, %v1659, 0
      %v1733 = vsel %vm1113, %v1677, 0
      %v1736 = vsel %vm1113, %v1679, 0
      %v1739 = vsel %vm1113, %v1681, 0
      %v1742 = vsel %vm1113, %v1683, 0
      %v1745 = vsel %vm1113, %v1685, 0
      %v1748 = vsel %vm1113, %v1687, 0
      %v1751 = vsel %vm1113, %v1689, 0
      %v1754 = vsel %vm1113, %v1691, 0
      %v1757 = vsel %vm1113, %v1693, 0
      %v1760 = vsel %vm1113, %v1695, 0
      %v1763 = vsel %vm1113, %v1697, 0
      %v1766 = vsel %vm1113, %v1699, 0
      %v1769 = vsel %vm1113, %v1701, 0
      %v1772 = vsel %vm1113, %v1703, 0
      %v1775 = vsel %vm1113, %v1705, 0
      %v1778 = vsel %vm1113, %v1707, 0
      %1780 = vmatprep.subr.bf16.mxu0 0
      %1781 = vmatpush1.bf16.xpose.msra.mxu0 %v1733
      %1782 = vmatprep.subr.bf16.mxu0 0
      %1783 = vmatpush1.bf16.xpose.msra.mxu0 %v1736
      %1784 = vmatprep.subr.bf16.mxu0 0
      %1785 = vmatpush1.bf16.xpose.msra.mxu0 %v1739
      %1786 = vmatprep.subr.bf16.mxu0 0
      %1787 = vmatpush1.bf16.xpose.msra.mxu0 %v1742
      %1788 = vmatprep.subr.bf16.mxu0 0
      %1789 = vmatpush1.bf16.xpose.msra.mxu0 %v1745
      %1790 = vmatprep.subr.bf16.mxu0 0
      %1791 = vmatpush1.bf16.xpose.msra.mxu0 %v1748
      %1792 = vmatprep.subr.bf16.mxu0 0
      %1793 = vmatpush1.bf16.xpose.msra.mxu0 %v1751
      %1794 = vmatprep.subr.bf16.mxu0 0
      %1795 = vmatpush1.bf16.xpose.msra.mxu0 %v1754
      %1796 = vmatprep.subr.bf16.mxu0 0
      %1797 = vmatpush1.bf16.xpose.msra.mxu0 %v1757
      %1798 = vmatprep.subr.bf16.mxu0 0
      %1799 = vmatpush1.bf16.xpose.msra.mxu0 %v1760
      %1800 = vmatprep.subr.bf16.mxu0 0
      %1801 = vmatpush1.bf16.xpose.msra.mxu0 %v1763
      %1802 = vmatprep.subr.bf16.mxu0 0
      %1803 = vmatpush1.bf16.xpose.msra.mxu0 %v1766
      %1804 = vmatprep.subr.bf16.mxu0 0
      %1805 = vmatpush1.bf16.xpose.msra.mxu0 %v1769
      %1806 = vmatprep.subr.bf16.mxu0 0
      %1807 = vmatpush1.bf16.xpose.msra.mxu0 %v1772
      %1808 = vmatprep.subr.bf16.mxu0 0
      %1809 = vmatpush1.bf16.xpose.msra.mxu0 %v1775
      %1810 = vmatprep.subr.bf16.mxu0 0
      %1811 = vmatpush1.bf16.xpose.msra.mxu0 %v1778
      %1812 = vmatprep.mubr.bf16.mxu0 0
      %1813 = vmatmul.mubr.bf16.gmra.mrb[0].mxu0 %v1709
      %v1814 = vpop.f32.mrb[0].mxu0
      %v1815 = vadd.f32 0.0, %v1814
      %v1816 = vpop.f32.mrb[0].mxu0
      %v1817 = vadd.f32 0.0, %v1816
      %v1818 = vpop.f32.mrb[0].mxu0
      %v1819 = vadd.f32 0.0, %v1818
      %v1820 = vpop.f32.mrb[0].mxu0
      %v1821 = vadd.f32 0.0, %v1820
      %1822 = vmatprep.mubr.bf16.mxu0 0
      %1823 = vmatmul.mubr.bf16.gmra.mrb[0].mxu0 %v1712
      %v1824 = vpop.f32.mrb[0].mxu0
      %v1825 = vadd.f32 0.0, %v1824
      %v1826 = vpop.f32.mrb[0].mxu0
      %v1827 = vadd.f32 0.0, %v1826
      %v1828 = vpop.f32.mrb[0].mxu0
      %v1829 = vadd.f32 0.0, %v1828
      %v1830 = vpop.f32.mrb[0].mxu0
      %v1831 = vadd.f32 0.0, %v1830
      %1832 = vmatprep.mubr.bf16.mxu0 0
      %1833 = vmatmul.mubr.bf16.gmra.mrb[0].mxu0 %v1715
      %v1834 = vpop.f32.mrb[0].mxu0
      %v1835 = vadd.f32 0.0, %v1834
      %v1836 = vpop.f32.mrb[0].mxu0
      %v1837 = vadd.f32 0.0, %v1836
      %v1838 = vpop.f32.mrb[0].mxu0
      %v1839 = vadd.f32 0.0, %v1838
      %v1840 = vpop.f32.mrb[0].mxu0
      %v1841 = vadd.f32 0.0, %v1840
      %1842 = vmatprep.mubr.bf16.mxu0 0
      %1843 = vmatmul.mubr.bf16.gmra.mrb[0].mxu0 %v1718
      %v1844 = vpop.f32.mrb[0].mxu0
      %v1845 = vadd.f32 0.0, %v1844
      %v1846 = vpop.f32.mrb[0].mxu0
      %v1847 = vadd.f32 0.0, %v1846
      %v1848 = vpop.f32.mrb[0].mxu0
      %v1849 = vadd.f32 0.0, %v1848
      %v1850 = vpop.f32.mrb[0].mxu0
      %v1851 = vadd.f32 0.0, %v1850
      %1852 = vmatprep.mubr.bf16.mxu0 0
      %1853 = vmatmul.mubr.bf16.gmra.mrb[0].mxu0 %v1721
      %v1854 = vpop.f32.mrb[0].mxu0
      %v1855 = vadd.f32 0.0, %v1854
      %v1856 = vpop.f32.mrb[0].mxu0
      %v1857 = vadd.f32 0.0, %v1856
      %v1858 = vpop.f32.mrb[0].mxu0
      %v1859 = vadd.f32 0.0, %v1858
      %v1860 = vpop.f32.mrb[0].mxu0
      %v1861 = vadd.f32 0.0, %v1860
      %1862 = vmatprep.mubr.bf16.mxu0 0
      %1863 = vmatmul.mubr.bf16.gmra.mrb[0].mxu0 %v1724
      %v1864 = vpop.f32.mrb[0].mxu0
      %v1865 = vadd.f32 0.0, %v1864
      %v1866 = vpop.f32.mrb[0].mxu0
      %v1867 = vadd.f32 0.0, %v1866
      %v1868 = vpop.f32.mrb[0].mxu0
      %v1869 = vadd.f32 0.0, %v1868
      %v1870 = vpop.f32.mrb[0].mxu0
      %v1871 = vadd.f32 0.0, %v1870
      %1872 = vmatprep.mubr.bf16.mxu0 0
      %1873 = vmatmul.mubr.bf16.gmra.mrb[0].mxu0 %v1727
      %v1874 = vpop.f32.mrb[0].mxu0
      %v1875 = vadd.f32 0.0, %v1874
      %v1876 = vpop.f32.mrb[0].mxu0
      %v1877 = vadd.f32 0.0, %v1876
      %v1878 = vpop.f32.mrb[0].mxu0
      %v1879 = vadd.f32 0.0, %v1878
      %v1880 = vpop.f32.mrb[0].mxu0
      %v1881 = vadd.f32 0.0, %v1880
      %1882 = vmatprep.mubr.bf16.mxu0 0
      %1883 = vmatmul.mubr.bf16.gmra.mrb[0].mxu0 %v1730
      %v1884 = vpop.f32.mrb[0].mxu0
      %v1885 = vadd.f32 0.0, %v1884
      %v1886 = vpop.f32.mrb[0].mxu0
      %v1887 = vadd.f32 0.0, %v1886
      %v1888 = vpop.f32.mrb[0].mxu0
      %v1889 = vadd.f32 0.0, %v1888
      %v1890 = vpop.f32.mrb[0].mxu0
      %v1891 = vadd.f32 0.0, %v1890
      %1892 = vdwg.mxu0
      %v1893 = vmax.f32 %v1815, %v1817
      %1894 = vmax.xlane.f32.xlu0 %v1893
      %v1895 = vpop.xlane.xlu0 %1894
      %v1896 = vmax.f32 %v1819, %v1821
      %1897 = vmax.xlane.f32.xlu0 %v1896
      %v1898 = vpop.xlane.xlu0 %1897
      %v1899 = vmax.f32 %v1825, %v1827
      %1900 = vmax.xlane.f32.xlu0 %v1899
      %v1901 = vpop.xlane.xlu0 %1900
      %v1902 = vmax.f32 %v1829, %v1831
      %1903 = vmax.xlane.f32.xlu0 %v1902
      %v1904 = vpop.xlane.xlu0 %1903
      %v1905 = vmax.f32 %v1835, %v1837
      %1906 = vmax.xlane.f32.xlu0 %v1905
      %v1907 = vpop.xlane.xlu0 %1906
      %v1908 = vmax.f32 %v1839, %v1841
      %1909 = vmax.xlane.f32.xlu0 %v1908
      %v1910 = vpop.xlane.xlu0 %1909
      %v1911 = vmax.f32 %v1845, %v1847
      %1912 = vmax.xlane.f32.xlu0 %v1911
      %v1913 = vpop.xlane.xlu0 %1912
      %v1914 = vmax.f32 %v1849, %v1851
      %1915 = vmax.xlane.f32.xlu0 %v1914
      %v1916 = vpop.xlane.xlu0 %1915
      %v1917 = vmax.f32 %v1855, %v1857
      %1918 = vmax.xlane.f32.xlu0 %v1917
      %v1919 = vpop.xlane.xlu0 %1918
      %v1920 = vmax.f32 %v1859, %v1861
      %1921 = vmax.xlane.f32.xlu0 %v1920
      %v1922 = vpop.xlane.xlu0 %1921
      %v1923 = vmax.f32 %v1865, %v1867
      %1924 = vmax.xlane.f32.xlu0 %v1923
      %v1925 = vpop.xlane.xlu0 %1924
      %v1926 = vmax.f32 %v1869, %v1871
      %1927 = vmax.xlane.f32.xlu0 %v1926
      %v1928 = vpop.xlane.xlu0 %1927
      %v1929 = vmax.f32 %v1875, %v1877
      %1930 = vmax.xlane.f32.xlu0 %v1929
      %v1931 = vpop.xlane.xlu0 %1930
      %v1932 = vmax.f32 %v1879, %v1881
      %1933 = vmax.xlane.f32.xlu0 %v1932
      %v1934 = vpop.xlane.xlu0 %1933
      %v1935 = vmax.f32 %v1885, %v1887
      %1936 = vmax.xlane.f32.xlu0 %v1935
      %v1937 = vpop.xlane.xlu0 %1936
      %v1938 = vmax.f32 %v1889, %v1891
      %1939 = vmax.xlane.f32.xlu0 %v1938
      %v1940 = vpop.xlane.xlu0 %1939
      %v1941 = vsub.f32 %v1815, %v1895
      %v1942 = vsub.f32 %v1817, %v1895
      %v1943 = vsub.f32 %v1819, %v1898
      %v1944 = vsub.f32 %v1821, %v1898
      %v1945 = vsub.f32 %v1825, %v1901
      %v1946 = vsub.f32 %v1827, %v1901
      %v1947 = vsub.f32 %v1829, %v1904
      %v1948 = vsub.f32 %v1831, %v1904
      %v1949 = vsub.f32 %v1835, %v1907
      %v1950 = vsub.f32 %v1837, %v1907
      %v1951 = vsub.f32 %v1839, %v1910
      %v1952 = vsub.f32 %v1841, %v1910
      %v1953 = vsub.f32 %v1845, %v1913
      %v1954 = vsub.f32 %v1847, %v1913
      %v1955 = vsub.f32 %v1849, %v1916
      %v1956 = vsub.f32 %v1851, %v1916
      %v1957 = vsub.f32 %v1855, %v1919
      %v1958 = vsub.f32 %v1857, %v1919
      %v1959 = vsub.f32 %v1859, %v1922
      %v1960 = vsub.f32 %v1861, %v1922
      %v1961 = vsub.f32 %v1865, %v1925
      %v1962 = vsub.f32 %v1867, %v1925
      %v1963 = vsub.f32 %v1869, %v1928
      %v1964 = vsub.f32 %v1871, %v1928
      %v1965 = vsub.f32 %v1875, %v1931
      %v1966 = vsub.f32 %v1877, %v1931
      %v1967 = vsub.f32 %v1879, %v1934
      %v1968 = vsub.f32 %v1881, %v1934
      %v1969 = vsub.f32 %v1885, %v1937
      %v1970 = vsub.f32 %v1887, %v1937
      %v1971 = vsub.f32 %v1889, %v1940
      %v1972 = vsub.f32 %v1891, %v1940
      %v1973 = vmul.f32 %v1941, 1.442695
      %v1974 = vpow.pop %v1973
      %v1975 = vmul.f32 %v1942, 1.442695
      %v1976 = vpow.pop %v1975
      %v1977 = vmul.f32 %v1943, 1.442695
      %v1978 = vpow.pop %v1977
      %v1979 = vmul.f32 %v1944, 1.442695
      %v1980 = vpow.pop %v1979
      %v1981 = vmul.f32 %v1945, 1.442695
      %v1982 = vpow.pop %v1981
      %v1983 = vmul.f32 %v1946, 1.442695
      %v1984 = vpow.pop %v1983
      %v1985 = vmul.f32 %v1947, 1.442695
      %v1986 = vpow.pop %v1985
      %v1987 = vmul.f32 %v1948, 1.442695
      %v1988 = vpow.pop %v1987
      %v1989 = vmul.f32 %v1949, 1.442695
      %v1990 = vpow.pop %v1989
      %v1991 = vmul.f32 %v1950, 1.442695
      %v1992 = vpow.pop %v1991
      %v1993 = vmul.f32 %v1951, 1.442695
      %v1994 = vpow.pop %v1993
      %v1995 = vmul.f32 %v1952, 1.442695
      %v1996 = vpow.pop %v1995
      %v1997 = vmul.f32 %v1953, 1.442695
      %v1998 = vpow.pop %v1997
      %v1999 = vmul.f32 %v1954, 1.442695
      %v2000 = vpow.pop %v1999
      %v2001 = vmul.f32 %v1955, 1.442695
      %v2002 = vpow.pop %v2001
      %v2003 = vmul.f32 %v1956, 1.442695
      %v2004 = vpow.pop %v2003
      %v2005 = vmul.f32 %v1957, 1.442695
      %v2006 = vpow.pop %v2005
      %v2007 = vmul.f32 %v1958, 1.442695
      %v2008 = vpow.pop %v2007
      %v2009 = vmul.f32 %v1959, 1.442695
      %v2010 = vpow.pop %v2009
      %v2011 = vmul.f32 %v1960, 1.442695
      %v2012 = vpow.pop %v2011
      %v2013 = vmul.f32 %v1961, 1.442695
      %v2014 = vpow.pop %v2013
      %v2015 = vmul.f32 %v1962, 1.442695
      %v2016 = vpow.pop %v2015
      %v2017 = vmul.f32 %v1963, 1.442695
      %v2018 = vpow.pop %v2017
      %v2019 = vmul.f32 %v1964, 1.442695
      %v2020 = vpow.pop %v2019
      %v2021 = vmul.f32 %v1965, 1.442695
      %v2022 = vpow.pop %v2021
      %v2023 = vmul.f32 %v1966, 1.442695
      %v2024 = vpow.pop %v2023
      %v2025 = vmul.f32 %v1967, 1.442695
      %v2026 = vpow.pop %v2025
      %v2027 = vmul.f32 %v1968, 1.442695
      %v2028 = vpow.pop %v2027
      %v2029 = vmul.f32 %v1969, 1.442695
      %v2030 = vpow.pop %v2029
      %v2031 = vmul.f32 %v1970, 1.442695
      %v2032 = vpow.pop %v2031
      %v2033 = vmul.f32 %v1971, 1.442695
      %v2034 = vpow.pop %v2033
      %v2035 = vmul.f32 %v1972, 1.442695
      %v2036 = vpow.pop %v2035
      %v2037 = vadd.f32 %v1974, %v1976
      %2038 = vadd.xlane.f32.xlu0 %v2037
      %v2039 = vpop.xlane.xlu0 %2038
      %v2040 = vadd.f32 %v1978, %v1980
      %2041 = vadd.xlane.f32.xlu0 %v2040
      %v2042 = vpop.xlane.xlu0 %2041
      %v2043 = vadd.f32 %v1982, %v1984
      %2044 = vadd.xlane.f32.xlu0 %v2043
      %v2045 = vpop.xlane.xlu0 %2044
      %v2046 = vadd.f32 %v1986, %v1988
      %2047 = vadd.xlane.f32.xlu0 %v2046
      %v2048 = vpop.xlane.xlu0 %2047
      %v2049 = vadd.f32 %v1990, %v1992
      %2050 = vadd.xlane.f32.xlu0 %v2049
      %v2051 = vpop.xlane.xlu0 %2050
      %v2052 = vadd.f32 %v1994, %v1996
      %2053 = vadd.xlane.f32.xlu0 %v2052
      %v2054 = vpop.xlane.xlu0 %2053
      %v2055 = vadd.f32 %v1998, %v2000
      %2056 = vadd.xlane.f32.xlu0 %v2055
      %v2057 = vpop.xlane.xlu0 %2056
      %v2058 = vadd.f32 %v2002, %v2004
      %2059 = vadd.xlane.f32.xlu0 %v2058
      %v2060 = vpop.xlane.xlu0 %2059
      %v2061 = vadd.f32 %v2006, %v2008
      %2062 = vadd.xlane.f32.xlu0 %v2061
      %v2063 = vpop.xlane.xlu0 %2062
      %v2064 = vadd.f32 %v2010, %v2012
      %2065 = vadd.xlane.f32.xlu0 %v2064
      %v2066 = vpop.xlane.xlu0 %2065
      %v2067 = vadd.f32 %v2014, %v2016
      %2068 = vadd.xlane.f32.xlu0 %v2067
      %v2069 = vpop.xlane.xlu0 %2068
      %v2070 = vadd.f32 %v2018, %v2020
      %2071 = vadd.xlane.f32.xlu0 %v2070
      %v2072 = vpop.xlane.xlu0 %2071
      %v2073 = vadd.f32 %v2022, %v2024
      %2074 = vadd.xlane.f32.xlu0 %v2073
      %v2075 = vpop.xlane.xlu0 %2074
      %v2076 = vadd.f32 %v2026, %v2028
      %2077 = vadd.xlane.f32.xlu0 %v2076
      %v2078 = vpop.xlane.xlu0 %2077
      %v2079 = vadd.f32 %v2030, %v2032
      %2080 = vadd.xlane.f32.xlu0 %v2079
      %v2081 = vpop.xlane.xlu0 %2080
      %v2082 = vadd.f32 %v2034, %v2036
      %2083 = vadd.xlane.f32.xlu0 %v2082
      %v2084 = vpop.xlane.xlu0 %2083
      %v2085 = vpack.c.bf16 %v1978, %v1974
      %v2086 = vpack.c.bf16 %v1980, %v1976
      %v2087 = vpack.c.bf16 %v1986, %v1982
      %v2088 = vpack.c.bf16 %v1988, %v1984
      %v2089 = vpack.c.bf16 %v1994, %v1990
      %v2090 = vpack.c.bf16 %v1996, %v1992
      %v2091 = vpack.c.bf16 %v2002, %v1998
      %v2092 = vpack.c.bf16 %v2004, %v2000
      %v2093 = vpack.c.bf16 %v2010, %v2006
      %v2094 = vpack.c.bf16 %v2012, %v2008
      %v2095 = vpack.c.bf16 %v2018, %v2014
      %v2096 = vpack.c.bf16 %v2020, %v2016
      %v2097 = vpack.c.bf16 %v2026, %v2022
      %v2098 = vpack.c.bf16 %v2028, %v2024
      %v2099 = vpack.c.bf16 %v2034, %v2030
      %v2100 = vpack.c.bf16 %v2036, %v2032
      %2117 = vrot.lane.b32.xlu0 %v1089, 96
      %v2118 = vpop.permute.xlu0 %2117
      %2119 = vrot.lane.b32.xlu0 %v1090, 96
      %v2120 = vpop.permute.xlu0 %2119
      %2121 = vrot.lane.b32.xlu0 %v1091, 96
      %v2122 = vpop.permute.xlu0 %2121
      %2123 = vrot.lane.b32.xlu0 %v1092, 96
      %v2124 = vpop.permute.xlu0 %2123
      %2125 = vrot.lane.b32.xlu0 %v1093, 96
      %v2126 = vpop.permute.xlu0 %2125
      %2127 = vrot.lane.b32.xlu0 %v1094, 96
      %v2128 = vpop.permute.xlu0 %2127
      %2129 = vrot.lane.b32.xlu0 %v1095, 96
      %v2130 = vpop.permute.xlu0 %2129
      %2131 = vrot.lane.b32.xlu0 %v1096, 96
      %v2132 = vpop.permute.xlu0 %2131
      %2133 = vrot.lane.b32.xlu0 %v1097, 96
      %v2134 = vpop.permute.xlu0 %2133
      %2135 = vrot.lane.b32.xlu0 %v1098, 96
      %v2136 = vpop.permute.xlu0 %2135
      %2137 = vrot.lane.b32.xlu0 %v1099, 96
      %v2138 = vpop.permute.xlu0 %2137
      %2139 = vrot.lane.b32.xlu0 %v1100, 96
      %v2140 = vpop.permute.xlu0 %2139
      %2141 = vrot.lane.b32.xlu0 %v1101, 96
      %v2142 = vpop.permute.xlu0 %2141
      %2143 = vrot.lane.b32.xlu0 %v1102, 96
      %v2144 = vpop.permute.xlu0 %2143
      %2145 = vrot.lane.b32.xlu0 %v1103, 96
      %v2146 = vpop.permute.xlu0 %2145
      %2147 = vrot.lane.b32.xlu0 %v1104, 96
      %v2148 = vpop.permute.xlu0 %2147
      %2165 = vmatprep.subr.bf16.mxu0 0
      %2166 = vmatpush1.bf16.msra.mxu0 %v2118
      %2167 = vmatprep.subr.bf16.mxu0 0
      %2168 = vmatpush1.bf16.msra.mxu0 %v2120
      %2169 = vmatprep.subr.bf16.mxu0 0
      %2170 = vmatpush1.bf16.msra.mxu0 %v2122
      %2171 = vmatprep.subr.bf16.mxu0 0
      %2172 = vmatpush1.bf16.msra.mxu0 %v2124
      %2173 = vmatprep.subr.bf16.mxu0 0
      %2174 = vmatpush1.bf16.msra.mxu0 %v2126
      %2175 = vmatprep.subr.bf16.mxu0 0
      %2176 = vmatpush1.bf16.msra.mxu0 %v2128
      %2177 = vmatprep.subr.bf16.mxu0 0
      %2178 = vmatpush1.bf16.msra.mxu0 %v2130
      %2179 = vmatprep.subr.bf16.mxu0 0
      %2180 = vmatpush1.bf16.msra.mxu0 %v2132
      %2181 = vmatprep.subr.bf16.mxu0 0
      %2182 = vmatpush1.bf16.msra.mxu0 %v2134
      %2183 = vmatprep.subr.bf16.mxu0 0
      %2184 = vmatpush1.bf16.msra.mxu0 %v2136
      %2185 = vmatprep.subr.bf16.mxu0 0
      %2186 = vmatpush1.bf16.msra.mxu0 %v2138
      %2187 = vmatprep.subr.bf16.mxu0 0
      %2188 = vmatpush1.bf16.msra.mxu0 %v2140
      %2189 = vmatprep.subr.bf16.mxu0 0
      %2190 = vmatpush1.bf16.msra.mxu0 %v2142
      %2191 = vmatprep.subr.bf16.mxu0 0
      %2192 = vmatpush1.bf16.msra.mxu0 %v2144
      %2193 = vmatprep.subr.bf16.mxu0 0
      %2194 = vmatpush1.bf16.msra.mxu0 %v2146
      %2195 = vmatprep.subr.bf16.mxu0 0
      %2196 = vmatpush1.bf16.msra.mxu0 %v2148
      %2197 = vmatprep.mubr.bf16.mxu0 %v2086
      %2198 = vmatmul.mubr.bf16.gmra.mrb[0].mxu0 %v2085
      %v2199 = vpop.f32.mrb[0].mxu0
      %v2200 = vadd.f32 0.0, %v2199
      %v2201 = vpop.f32.mrb[0].mxu0
      %v2202 = vpop.f32.mrb[0].mxu0
      %v2203 = vadd.f32 0.0, %v2202
      %v2204 = vpop.f32.mrb[0].mxu0
      %2205 = vmatprep.mubr.bf16.mxu0 %v2088
      %2206 = vmatmul.mubr.bf16.gmra.mrb[0].mxu0 %v2087
      %v2207 = vpop.f32.mrb[0].mxu0
      %v2208 = vadd.f32 0.0, %v2207
      %v2209 = vpop.f32.mrb[0].mxu0
      %v2210 = vpop.f32.mrb[0].mxu0
      %v2211 = vadd.f32 0.0, %v2210
      %v2212 = vpop.f32.mrb[0].mxu0
      %2213 = vmatprep.mubr.bf16.mxu0 %v2090
      %2214 = vmatmul.mubr.bf16.gmra.mrb[0].mxu0 %v2089
      %v2215 = vpop.f32.mrb[0].mxu0
      %v2216 = vadd.f32 0.0, %v2215
      %v2217 = vpop.f32.mrb[0].mxu0
      %v2218 = vpop.f32.mrb[0].mxu0
      %v2219 = vadd.f32 0.0, %v2218
      %v2220 = vpop.f32.mrb[0].mxu0
      %2221 = vmatprep.mubr.bf16.mxu0 %v2092
      %2222 = vmatmul.mubr.bf16.gmra.mrb[0].mxu0 %v2091
      %v2223 = vpop.f32.mrb[0].mxu0
      %v2224 = vadd.f32 0.0, %v2223
      %v2225 = vpop.f32.mrb[0].mxu0
      %v2226 = vpop.f32.mrb[0].mxu0
      %v2227 = vadd.f32 0.0, %v2226
      %v2228 = vpop.f32.mrb[0].mxu0
      %2229 = vmatprep.mubr.bf16.mxu0 %v2094
      %2230 = vmatmul.mubr.bf16.gmra.mrb[0].mxu0 %v2093
      %v2231 = vpop.f32.mrb[0].mxu0
      %v2232 = vadd.f32 0.0, %v2231
      %v2233 = vpop.f32.mrb[0].mxu0
      %v2234 = vpop.f32.mrb[0].mxu0
      %v2235 = vadd.f32 0.0, %v2234
      %v2236 = vpop.f32.mrb[0].mxu0
      %2237 = vmatprep.mubr.bf16.mxu0 %v2096
      %2238 = vmatmul.mubr.bf16.gmra.mrb[0].mxu0 %v2095
      %v2239 = vpop.f32.mrb[0].mxu0
      %v2240 = vadd.f32 0.0, %v2239
      %v2241 = vpop.f32.mrb[0].mxu0
      %v2242 = vpop.f32.mrb[0].mxu0
      %v2243 = vadd.f32 0.0, %v2242
      %v2244 = vpop.f32.mrb[0].mxu0
      %2245 = vmatprep.mubr.bf16.mxu0 %v2098
      %2246 = vmatmul.mubr.bf16.gmra.mrb[0].mxu0 %v2097
      %v2247 = vpop.f32.mrb[0].mxu0
      %v2248 = vadd.f32 0.0, %v2247
      %v2249 = vpop.f32.mrb[0].mxu0
      %v2250 = vpop.f32.mrb[0].mxu0
      %v2251 = vadd.f32 0.0, %v2250
      %v2252 = vpop.f32.mrb[0].mxu0
      %2253 = vmatprep.mubr.bf16.mxu0 %v2100
      %2254 = vmatmul.mubr.bf16.gmra.mrb[0].mxu0 %v2099
      %v2255 = vpop.f32.mrb[0].mxu0
      %v2256 = vadd.f32 0.0, %v2255
      %v2257 = vpop.f32.mrb[0].mxu0
      %v2258 = vpop.f32.mrb[0].mxu0
      %v2259 = vadd.f32 0.0, %v2258
      %v2260 = vpop.f32.mrb[0].mxu0
      %2261 = vdwg.mxu0
      %v2262 = vrcp.pop %v2039
      %v2263 = vrcp.pop %v2042
      %v2264 = vrcp.pop %v2045
      %v2265 = vrcp.pop %v2048
      %v2266 = vrcp.pop %v2051
      %v2267 = vrcp.pop %v2054
      %v2268 = vrcp.pop %v2057
      %v2269 = vrcp.pop %v2060
      %v2270 = vrcp.pop %v2063
      %v2271 = vrcp.pop %v2066
      %v2272 = vrcp.pop %v2069
      %v2273 = vrcp.pop %v2072
      %v2274 = vrcp.pop %v2075
      %v2275 = vrcp.pop %v2078
      %v2276 = vrcp.pop %v2081
      %v2277 = vrcp.pop %v2084
      %v2278 = vmul.f32 %v2200, %v2262
      %v2279 = vmul.f32 %v2203, %v2263
      %v2280 = vmul.f32 %v2208, %v2264
      %v2281 = vmul.f32 %v2211, %v2265
      %v2282 = vmul.f32 %v2216, %v2266
      %v2283 = vmul.f32 %v2219, %v2267
      %v2284 = vmul.f32 %v2224, %v2268
      %v2285 = vmul.f32 %v2227, %v2269
      %v2286 = vmul.f32 %v2232, %v2270
      %v2287 = vmul.f32 %v2235, %v2271
      %v2288 = vmul.f32 %v2240, %v2272
      %v2289 = vmul.f32 %v2243, %v2273
      %v2290 = vmul.f32 %v2248, %v2274
      %v2291 = vmul.f32 %v2251, %v2275
      %v2292 = vmul.f32 %v2256, %v2276
      %v2293 = vmul.f32 %v2259, %v2277
      %2294 = vrot.lane.b32.xlu0 %v1105, 64
      %v2295 = vpop.permute.xlu0 %2294
      %2296 = vrot.lane.b32.xlu0 %v1106, 64
      %v2297 = vpop.permute.xlu0 %2296
      %2298 = vrot.lane.b32.xlu0 %v1107, 64
      %v2299 = vpop.permute.xlu0 %2298
      %2300 = vrot.lane.b32.xlu0 %v1108, 64
      %v2301 = vpop.permute.xlu0 %2300
      %2302 = vrot.lane.b32.xlu0 %v1109, 64
      %v2303 = vpop.permute.xlu0 %2302
      %2304 = vrot.lane.b32.xlu0 %v1110, 64
      %v2305 = vpop.permute.xlu0 %2304
      %2306 = vrot.lane.b32.xlu0 %v1111, 64
      %v2307 = vpop.permute.xlu0 %2306
      %2308 = vrot.lane.b32.xlu0 %v1112, 64
      %v2309 = vpop.permute.xlu0 %2308
      %2310 = vrot.lane.b32.xlu0 %v848, 64
      %v2311 = vpop.permute.xlu0 %2310
      %2312 = vrot.lane.b32.xlu0 %v849, 64
      %v2313 = vpop.permute.xlu0 %2312
      %2314 = vrot.lane.b32.xlu0 %v850, 64
      %v2315 = vpop.permute.xlu0 %2314
      %2316 = vrot.lane.b32.xlu0 %v851, 64
      %v2317 = vpop.permute.xlu0 %2316
      %2318 = vrot.lane.b32.xlu0 %v852, 64
      %v2319 = vpop.permute.xlu0 %2318
      %2320 = vrot.lane.b32.xlu0 %v853, 64
      %v2321 = vpop.permute.xlu0 %2320
      %2322 = vrot.lane.b32.xlu0 %v854, 64
      %v2323 = vpop.permute.xlu0 %2322
      %2324 = vrot.lane.b32.xlu0 %v855, 64
      %v2325 = vpop.permute.xlu0 %2324
      %2326 = vrot.lane.b32.xlu0 %v856, 64
      %v2327 = vpop.permute.xlu0 %2326
      %2328 = vrot.lane.b32.xlu0 %v857, 64
      %v2329 = vpop.permute.xlu0 %2328
      %2330 = vrot.lane.b32.xlu0 %v858, 64
      %v2331 = vpop.permute.xlu0 %2330
      %2332 = vrot.lane.b32.xlu0 %v859, 64
      %v2333 = vpop.permute.xlu0 %2332
      %2334 = vrot.lane.b32.xlu0 %v860, 64
      %v2335 = vpop.permute.xlu0 %2334
      %2336 = vrot.lane.b32.xlu0 %v861, 64
      %v2337 = vpop.permute.xlu0 %2336
      %2338 = vrot.lane.b32.xlu0 %v862, 64
      %v2339 = vpop.permute.xlu0 %2338
      %2340 = vrot.lane.b32.xlu0 %v863, 64
      %v2341 = vpop.permute.xlu0 %2340
      %v2343 = vsel %vm1113, %v2295, 0
      %v2346 = vsel %vm1113, %v2297, 0
      %v2349 = vsel %vm1113, %v2299, 0
      %v2352 = vsel %vm1113, %v2301, 0
      %v2355 = vsel %vm1113, %v2303, 0
      %v2358 = vsel %vm1113, %v2305, 0
      %v2361 = vsel %vm1113, %v2307, 0
      %v2364 = vsel %vm1113, %v2309, 0
      %v2367 = vsel %vm1113, %v2311, 0
      %v2370 = vsel %vm1113, %v2313, 0
      %v2373 = vsel %vm1113, %v2315, 0
      %v2376 = vsel %vm1113, %v2317, 0
      %v2379 = vsel %vm1113, %v2319, 0
      %v2382 = vsel %vm1113, %v2321, 0
      %v2385 = vsel %vm1113, %v2323, 0
      %v2388 = vsel %vm1113, %v2325, 0
      %v2391 = vsel %vm1113, %v2327, 0
      %v2394 = vsel %vm1113, %v2329, 0
      %v2397 = vsel %vm1113, %v2331, 0
      %v2400 = vsel %vm1113, %v2333, 0
      %v2403 = vsel %vm1113, %v2335, 0
      %v2406 = vsel %vm1113, %v2337, 0
      %v2409 = vsel %vm1113, %v2339, 0
      %v2412 = vsel %vm1113, %v2341, 0
      %2414 = vmatprep.subr.bf16.mxu0 0
      %2415 = vmatpush1.bf16.xpose.msra.mxu0 %v2367
      %2416 = vmatprep.subr.bf16.mxu0 0
      %2417 = vmatpush1.bf16.xpose.msra.mxu0 %v2370
      %2418 = vmatprep.subr.bf16.mxu0 0
      %2419 = vmatpush1.bf16.xpose.msra.mxu0 %v2373
      %2420 = vmatprep.subr.bf16.mxu0 0
      %2421 = vmatpush1.bf16.xpose.msra.mxu0 %v2376
      %2422 = vmatprep.subr.bf16.mxu0 0
      %2423 = vmatpush1.bf16.xpose.msra.mxu0 %v2379
      %2424 = vmatprep.subr.bf16.mxu0 0
      %2425 = vmatpush1.bf16.xpose.msra.mxu0 %v2382
      %2426 = vmatprep.subr.bf16.mxu0 0
      %2427 = vmatpush1.bf16.xpose.msra.mxu0 %v2385
      %2428 = vmatprep.subr.bf16.mxu0 0
      %2429 = vmatpush1.bf16.xpose.msra.mxu0 %v2388
      %2430 = vmatprep.subr.bf16.mxu0 0
      %2431 = vmatpush1.bf16.xpose.msra.mxu0 %v2391
      %2432 = vmatprep.subr.bf16.mxu0 0
      %2433 = vmatpush1.bf16.xpose.msra.mxu0 %v2394
      %2434 = vmatprep.subr.bf16.mxu0 0
      %2435 = vmatpush1.bf16.xpose.msra.mxu0 %v2397
      %2436 = vmatprep.subr.bf16.mxu0 0
      %2437 = vmatpush1.bf16.xpose.msra.mxu0 %v2400
      %2438 = vmatprep.subr.bf16.mxu0 0
      %2439 = vmatpush1.bf16.xpose.msra.mxu0 %v2403
      %2440 = vmatprep.subr.bf16.mxu0 0
      %2441 = vmatpush1.bf16.xpose.msra.mxu0 %v2406
      %2442 = vmatprep.subr.bf16.mxu0 0
      %2443 = vmatpush1.bf16.xpose.msra.mxu0 %v2409
      %2444 = vmatprep.subr.bf16.mxu0 0
      %2445 = vmatpush1.bf16.xpose.msra.mxu0 %v2412
      %2446 = vmatprep.mubr.bf16.mxu0 0
      %2447 = vmatmul.mubr.bf16.gmra.mrb[0].mxu0 %v2343
      %v2448 = vpop.f32.mrb[0].mxu0
      %v2449 = vadd.f32 0.0, %v2448
      %v2450 = vpop.f32.mrb[0].mxu0
      %v2451 = vadd.f32 0.0, %v2450
      %v2452 = vpop.f32.mrb[0].mxu0
      %v2453 = vadd.f32 0.0, %v2452
      %v2454 = vpop.f32.mrb[0].mxu0
      %v2455 = vadd.f32 0.0, %v2454
      %2456 = vmatprep.mubr.bf16.mxu0 0
      %2457 = vmatmul.mubr.bf16.gmra.mrb[0].mxu0 %v2346
      %v2458 = vpop.f32.mrb[0].mxu0
      %v2459 = vadd.f32 0.0, %v2458
      %v2460 = vpop.f32.mrb[0].mxu0
      %v2461 = vadd.f32 0.0, %v2460
      %v2462 = vpop.f32.mrb[0].mxu0
      %v2463 = vadd.f32 0.0, %v2462
      %v2464 = vpop.f32.mrb[0].mxu0
      %v2465 = vadd.f32 0.0, %v2464
      %2466 = vmatprep.mubr.bf16.mxu0 0
      %2467 = vmatmul.mubr.bf16.gmra.mrb[0].mxu0 %v2349
      %v2468 = vpop.f32.mrb[0].mxu0
      %v2469 = vadd.f32 0.0, %v2468
      %v2470 = vpop.f32.mrb[0].mxu0
      %v2471 = vadd.f32 0.0, %v2470
      %v2472 = vpop.f32.mrb[0].mxu0
      %v2473 = vadd.f32 0.0, %v2472
      %v2474 = vpop.f32.mrb[0].mxu0
      %v2475 = vadd.f32 0.0, %v2474
      %2476 = vmatprep.mubr.bf16.mxu0 0
      %2477 = vmatmul.mubr.bf16.gmra.mrb[0].mxu0 %v2352
      %v2478 = vpop.f32.mrb[0].mxu0
      %v2479 = vadd.f32 0.0, %v2478
      %v2480 = vpop.f32.mrb[0].mxu0
      %v2481 = vadd.f32 0.0, %v2480
      %v2482 = vpop.f32.mrb[0].mxu0
      %v2483 = vadd.f32 0.0, %v2482
      %v2484 = vpop.f32.mrb[0].mxu0
      %v2485 = vadd.f32 0.0, %v2484
      %2486 = vmatprep.mubr.bf16.mxu0 0
      %2487 = vmatmul.mubr.bf16.gmra.mrb[0].mxu0 %v2355
      %v2488 = vpop.f32.mrb[0].mxu0
      %v2489 = vadd.f32 0.0, %v2488
      %v2490 = vpop.f32.mrb[0].mxu0
      %v2491 = vadd.f32 0.0, %v2490
      %v2492 = vpop.f32.mrb[0].mxu0
      %v2493 = vadd.f32 0.0, %v2492
      %v2494 = vpop.f32.mrb[0].mxu0
      %v2495 = vadd.f32 0.0, %v2494
      %2496 = vmatprep.mubr.bf16.mxu0 0
      %2497 = vmatmul.mubr.bf16.gmra.mrb[0].mxu0 %v2358
      %v2498 = vpop.f32.mrb[0].mxu0
      %v2499 = vadd.f32 0.0, %v2498
      %v2500 = vpop.f32.mrb[0].mxu0
      %v2501 = vadd.f32 0.0, %v2500
      %v2502 = vpop.f32.mrb[0].mxu0
      %v2503 = vadd.f32 0.0, %v2502
      %v2504 = vpop.f32.mrb[0].mxu0
      %v2505 = vadd.f32 0.0, %v2504
      %2506 = vmatprep.mubr.bf16.mxu0 0
      %2507 = vmatmul.mubr.bf16.gmra.mrb[0].mxu0 %v2361
      %v2508 = vpop.f32.mrb[0].mxu0
      %v2509 = vadd.f32 0.0, %v2508
      %v2510 = vpop.f32.mrb[0].mxu0
      %v2511 = vadd.f32 0.0, %v2510
      %v2512 = vpop.f32.mrb[0].mxu0
      %v2513 = vadd.f32 0.0, %v2512
      %v2514 = vpop.f32.mrb[0].mxu0
      %v2515 = vadd.f32 0.0, %v2514
      %2516 = vmatprep.mubr.bf16.mxu0 0
      %2517 = vmatmul.mubr.bf16.gmra.mrb[0].mxu0 %v2364
      %v2518 = vpop.f32.mrb[0].mxu0
      %v2519 = vadd.f32 0.0, %v2518
      %v2520 = vpop.f32.mrb[0].mxu0
      %v2521 = vadd.f32 0.0, %v2520
      %v2522 = vpop.f32.mrb[0].mxu0
      %v2523 = vadd.f32 0.0, %v2522
      %v2524 = vpop.f32.mrb[0].mxu0
      %v2525 = vadd.f32 0.0, %v2524
      %2526 = vdwg.mxu0
      %v2527 = vmax.f32 %v2449, %v2451
      %2528 = vmax.xlane.f32.xlu0 %v2527
      %v2529 = vpop.xlane.xlu0 %2528
      %v2530 = vmax.f32 %v2453, %v2455
      %2531 = vmax.xlane.f32.xlu0 %v2530
      %v2532 = vpop.xlane.xlu0 %2531
      %v2533 = vmax.f32 %v2459, %v2461
      %2534 = vmax.xlane.f32.xlu0 %v2533
      %v2535 = vpop.xlane.xlu0 %2534
      %v2536 = vmax.f32 %v2463, %v2465
      %2537 = vmax.xlane.f32.xlu0 %v2536
      %v2538 = vpop.xlane.xlu0 %2537
      %v2539 = vmax.f32 %v2469, %v2471
      %2540 = vmax.xlane.f32.xlu0 %v2539
      %v2541 = vpop.xlane.xlu0 %2540
      %v2542 = vmax.f32 %v2473, %v2475
      %2543 = vmax.xlane.f32.xlu0 %v2542
      %v2544 = vpop.xlane.xlu0 %2543
      %v2545 = vmax.f32 %v2479, %v2481
      %2546 = vmax.xlane.f32.xlu0 %v2545
      %v2547 = vpop.xlane.xlu0 %2546
      %v2548 = vmax.f32 %v2483, %v2485
      %2549 = vmax.xlane.f32.xlu0 %v2548
      %v2550 = vpop.xlane.xlu0 %2549
      %v2551 = vmax.f32 %v2489, %v2491
      %2552 = vmax.xlane.f32.xlu0 %v2551
      %v2553 = vpop.xlane.xlu0 %2552
      %v2554 = vmax.f32 %v2493, %v2495
      %2555 = vmax.xlane.f32.xlu0 %v2554
      %v2556 = vpop.xlane.xlu0 %2555
      %v2557 = vmax.f32 %v2499, %v2501
      %2558 = vmax.xlane.f32.xlu0 %v2557
      %v2559 = vpop.xlane.xlu0 %2558
      %v2560 = vmax.f32 %v2503, %v2505
      %2561 = vmax.xlane.f32.xlu0 %v2560
      %v2562 = vpop.xlane.xlu0 %2561
      %v2563 = vmax.f32 %v2509, %v2511
      %2564 = vmax.xlane.f32.xlu0 %v2563
      %v2565 = vpop.xlane.xlu0 %2564
      %v2566 = vmax.f32 %v2513, %v2515
      %2567 = vmax.xlane.f32.xlu0 %v2566
      %v2568 = vpop.xlane.xlu0 %2567
      %v2569 = vmax.f32 %v2519, %v2521
      %2570 = vmax.xlane.f32.xlu0 %v2569
      %v2571 = vpop.xlane.xlu0 %2570
      %v2572 = vmax.f32 %v2523, %v2525
      %2573 = vmax.xlane.f32.xlu0 %v2572
      %v2574 = vpop.xlane.xlu0 %2573
      %v2575 = vsub.f32 %v2449, %v2529
      %v2576 = vsub.f32 %v2451, %v2529
      %v2577 = vsub.f32 %v2453, %v2532
      %v2578 = vsub.f32 %v2455, %v2532
      %v2579 = vsub.f32 %v2459, %v2535
      %v2580 = vsub.f32 %v2461, %v2535
      %v2581 = vsub.f32 %v2463, %v2538
      %v2582 = vsub.f32 %v2465, %v2538
      %v2583 = vsub.f32 %v2469, %v2541
      %v2584 = vsub.f32 %v2471, %v2541
      %v2585 = vsub.f32 %v2473, %v2544
      %v2586 = vsub.f32 %v2475, %v2544
      %v2587 = vsub.f32 %v2479, %v2547
      %v2588 = vsub.f32 %v2481, %v2547
      %v2589 = vsub.f32 %v2483, %v2550
      %v2590 = vsub.f32 %v2485, %v2550
      %v2591 = vsub.f32 %v2489, %v2553
      %v2592 = vsub.f32 %v2491, %v2553
      %v2593 = vsub.f32 %v2493, %v2556
      %v2594 = vsub.f32 %v2495, %v2556
      %v2595 = vsub.f32 %v2499, %v2559
      %v2596 = vsub.f32 %v2501, %v2559
      %v2597 = vsub.f32 %v2503, %v2562
      %v2598 = vsub.f32 %v2505, %v2562
      %v2599 = vsub.f32 %v2509, %v2565
      %v2600 = vsub.f32 %v2511, %v2565
      %v2601 = vsub.f32 %v2513, %v2568
      %v2602 = vsub.f32 %v2515, %v2568
      %v2603 = vsub.f32 %v2519, %v2571
      %v2604 = vsub.f32 %v2521, %v2571
      %v2605 = vsub.f32 %v2523, %v2574
      %v2606 = vsub.f32 %v2525, %v2574
      %v2607 = vmul.f32 %v2575, 1.442695
      %v2608 = vpow.pop %v2607
      %v2609 = vmul.f32 %v2576, 1.442695
      %v2610 = vpow.pop %v2609
      %v2611 = vmul.f32 %v2577, 1.442695
      %v2612 = vpow.pop %v2611
      %v2613 = vmul.f32 %v2578, 1.442695
      %v2614 = vpow.pop %v2613
      %v2615 = vmul.f32 %v2579, 1.442695
      %v2616 = vpow.pop %v2615
      %v2617 = vmul.f32 %v2580, 1.442695
      %v2618 = vpow.pop %v2617
      %v2619 = vmul.f32 %v2581, 1.442695
      %v2620 = vpow.pop %v2619
      %v2621 = vmul.f32 %v2582, 1.442695
      %v2622 = vpow.pop %v2621
      %v2623 = vmul.f32 %v2583, 1.442695
      %v2624 = vpow.pop %v2623
      %v2625 = vmul.f32 %v2584, 1.442695
      %v2626 = vpow.pop %v2625
      %v2627 = vmul.f32 %v2585, 1.442695
      %v2628 = vpow.pop %v2627
      %v2629 = vmul.f32 %v2586, 1.442695
      %v2630 = vpow.pop %v2629
      %v2631 = vmul.f32 %v2587, 1.442695
      %v2632 = vpow.pop %v2631
      %v2633 = vmul.f32 %v2588, 1.442695
      %v2634 = vpow.pop %v2633
      %v2635 = vmul.f32 %v2589, 1.442695
      %v2636 = vpow.pop %v2635
      %v2637 = vmul.f32 %v2590, 1.442695
      %v2638 = vpow.pop %v2637
      %v2639 = vmul.f32 %v2591, 1.442695
      %v2640 = vpow.pop %v2639
      %v2641 = vmul.f32 %v2592, 1.442695
      %v2642 = vpow.pop %v2641
      %v2643 = vmul.f32 %v2593, 1.442695
      %v2644 = vpow.pop %v2643
      %v2645 = vmul.f32 %v2594, 1.442695
      %v2646 = vpow.pop %v2645
      %v2647 = vmul.f32 %v2595, 1.442695
      %v2648 = vpow.pop %v2647
      %v2649 = vmul.f32 %v2596, 1.442695
      %v2650 = vpow.pop %v2649
      %v2651 = vmul.f32 %v2597, 1.442695
      %v2652 = vpow.pop %v2651
      %v2653 = vmul.f32 %v2598, 1.442695
      %v2654 = vpow.pop %v2653
      %v2655 = vmul.f32 %v2599, 1.442695
      %v2656 = vpow.pop %v2655
      %v2657 = vmul.f32 %v2600, 1.442695
      %v2658 = vpow.pop %v2657
      %v2659 = vmul.f32 %v2601, 1.442695
      %v2660 = vpow.pop %v2659
      %v2661 = vmul.f32 %v2602, 1.442695
      %v2662 = vpow.pop %v2661
      %v2663 = vmul.f32 %v2603, 1.442695
      %v2664 = vpow.pop %v2663
      %v2665 = vmul.f32 %v2604, 1.442695
      %v2666 = vpow.pop %v2665
      %v2667 = vmul.f32 %v2605, 1.442695
      %v2668 = vpow.pop %v2667
      %v2669 = vmul.f32 %v2606, 1.442695
      %v2670 = vpow.pop %v2669
      %v2671 = vadd.f32 %v2608, %v2610
      %2672 = vadd.xlane.f32.xlu0 %v2671
      %v2673 = vpop.xlane.xlu0 %2672
      %v2674 = vadd.f32 %v2612, %v2614
      %2675 = vadd.xlane.f32.xlu0 %v2674
      %v2676 = vpop.xlane.xlu0 %2675
      %v2677 = vadd.f32 %v2616, %v2618
      %2678 = vadd.xlane.f32.xlu0 %v2677
      %v2679 = vpop.xlane.xlu0 %2678
      %v2680 = vadd.f32 %v2620, %v2622
      %2681 = vadd.xlane.f32.xlu0 %v2680
      %v2682 = vpop.xlane.xlu0 %2681
      %v2683 = vadd.f32 %v2624, %v2626
      %2684 = vadd.xlane.f32.xlu0 %v2683
      %v2685 = vpop.xlane.xlu0 %2684
      %v2686 = vadd.f32 %v2628, %v2630
      %2687 = vadd.xlane.f32.xlu0 %v2686
      %v2688 = vpop.xlane.xlu0 %2687
      %v2689 = vadd.f32 %v2632, %v2634
      %2690 = vadd.xlane.f32.xlu0 %v2689
      %v2691 = vpop.xlane.xlu0 %2690
      %v2692 = vadd.f32 %v2636, %v2638
      %2693 = vadd.xlane.f32.xlu0 %v2692
      %v2694 = vpop.xlane.xlu0 %2693
      %v2695 = vadd.f32 %v2640, %v2642
      %2696 = vadd.xlane.f32.xlu0 %v2695
      %v2697 = vpop.xlane.xlu0 %2696
      %v2698 = vadd.f32 %v2644, %v2646
      %2699 = vadd.xlane.f32.xlu0 %v2698
      %v2700 = vpop.xlane.xlu0 %2699
      %v2701 = vadd.f32 %v2648, %v2650
      %2702 = vadd.xlane.f32.xlu0 %v2701
      %v2703 = vpop.xlane.xlu0 %2702
      %v2704 = vadd.f32 %v2652, %v2654
      %2705 = vadd.xlane.f32.xlu0 %v2704
      %v2706 = vpop.xlane.xlu0 %2705
      %v2707 = vadd.f32 %v2656, %v2658
      %2708 = vadd.xlane.f32.xlu0 %v2707
      %v2709 = vpop.xlane.xlu0 %2708
      %v2710 = vadd.f32 %v2660, %v2662
      %2711 = vadd.xlane.f32.xlu0 %v2710
      %v2712 = vpop.xlane.xlu0 %2711
      %v2713 = vadd.f32 %v2664, %v2666
      %2714 = vadd.xlane.f32.xlu0 %v2713
      %v2715 = vpop.xlane.xlu0 %2714
      %v2716 = vadd.f32 %v2668, %v2670
      %2717 = vadd.xlane.f32.xlu0 %v2716
      %v2718 = vpop.xlane.xlu0 %2717
      %v2719 = vpack.c.bf16 %v2612, %v2608
      %v2720 = vpack.c.bf16 %v2614, %v2610
      %v2721 = vpack.c.bf16 %v2620, %v2616
      %v2722 = vpack.c.bf16 %v2622, %v2618
      %v2723 = vpack.c.bf16 %v2628, %v2624
      %v2724 = vpack.c.bf16 %v2630, %v2626
      %v2725 = vpack.c.bf16 %v2636, %v2632
      %v2726 = vpack.c.bf16 %v2638, %v2634
      %v2727 = vpack.c.bf16 %v2644, %v2640
      %v2728 = vpack.c.bf16 %v2646, %v2642
      %v2729 = vpack.c.bf16 %v2652, %v2648
      %v2730 = vpack.c.bf16 %v2654, %v2650
      %v2731 = vpack.c.bf16 %v2660, %v2656
      %v2732 = vpack.c.bf16 %v2662, %v2658
      %v2733 = vpack.c.bf16 %v2668, %v2664
      %v2734 = vpack.c.bf16 %v2670, %v2666
      %2735 = vrot.lane.b32.xlu0 %v1089, 64
      %v2736 = vpop.permute.xlu0 %2735
      %2737 = vrot.lane.b32.xlu0 %v1090, 64
      %v2738 = vpop.permute.xlu0 %2737
      %2739 = vrot.lane.b32.xlu0 %v1091, 64
      %v2740 = vpop.permute.xlu0 %2739
      %2741 = vrot.lane.b32.xlu0 %v1092, 64
      %v2742 = vpop.permute.xlu0 %2741
      %2743 = vrot.lane.b32.xlu0 %v1093, 64
      %v2744 = vpop.permute.xlu0 %2743
      %2745 = vrot.lane.b32.xlu0 %v1094, 64
      %v2746 = vpop.permute.xlu0 %2745
      %2747 = vrot.lane.b32.xlu0 %v1095, 64
      %v2748 = vpop.permute.xlu0 %2747
      %2749 = vrot.lane.b32.xlu0 %v1096, 64
      %v2750 = vpop.permute.xlu0 %2749
      %2751 = vrot.lane.b32.xlu0 %v1097, 64
      %v2752 = vpop.permute.xlu0 %2751
      %2753 = vrot.lane.b32.xlu0 %v1098, 64
      %v2754 = vpop.permute.xlu0 %2753
      %2755 = vrot.lane.b32.xlu0 %v1099, 64
      %v2756 = vpop.permute.xlu0 %2755
      %2757 = vrot.lane.b32.xlu0 %v1100, 64
      %v2758 = vpop.permute.xlu0 %2757
      %2759 = vrot.lane.b32.xlu0 %v1101, 64
      %v2760 = vpop.permute.xlu0 %2759
      %2761 = vrot.lane.b32.xlu0 %v1102, 64
      %v2762 = vpop.permute.xlu0 %2761
      %2763 = vrot.lane.b32.xlu0 %v1103, 64
      %v2764 = vpop.permute.xlu0 %2763
      %2765 = vrot.lane.b32.xlu0 %v1104, 64
      %v2766 = vpop.permute.xlu0 %2765
      %2783 = vmatprep.subr.bf16.mxu0 0
      %2784 = vmatpush1.bf16.msra.mxu0 %v2736
      %2785 = vmatprep.subr.bf16.mxu0 0
      %2786 = vmatpush1.bf16.msra.mxu0 %v2738
      %2787 = vmatprep.subr.bf16.mxu0 0
      %2788 = vmatpush1.bf16.msra.mxu0 %v2740
      %2789 = vmatprep.subr.bf16.mxu0 0
      %2790 = vmatpush1.bf16.msra.mxu0 %v2742
      %2791 = vmatprep.subr.bf16.mxu0 0
      %2792 = vmatpush1.bf16.msra.mxu0 %v2744
      %2793 = vmatprep.subr.bf16.mxu0 0
      %2794 = vmatpush1.bf16.msra.mxu0 %v2746
      %2795 = vmatprep.subr.bf16.mxu0 0
      %2796 = vmatpush1.bf16.msra.mxu0 %v2748
      %2797 = vmatprep.subr.bf16.mxu0 0
      %2798 = vmatpush1.bf16.msra.mxu0 %v2750
      %2799 = vmatprep.subr.bf16.mxu0 0
      %2800 = vmatpush1.bf16.msra.mxu0 %v2752
      %2801 = vmatprep.subr.bf16.mxu0 0
      %2802 = vmatpush1.bf16.msra.mxu0 %v2754
      %2803 = vmatprep.subr.bf16.mxu0 0
      %2804 = vmatpush1.bf16.msra.mxu0 %v2756
      %2805 = vmatprep.subr.bf16.mxu0 0
      %2806 = vmatpush1.bf16.msra.mxu0 %v2758
      %2807 = vmatprep.subr.bf16.mxu0 0
      %2808 = vmatpush1.bf16.msra.mxu0 %v2760
      %2809 = vmatprep.subr.bf16.mxu0 0
      %2810 = vmatpush1.bf16.msra.mxu0 %v2762
      %2811 = vmatprep.subr.bf16.mxu0 0
      %2812 = vmatpush1.bf16.msra.mxu0 %v2764
      %2813 = vmatprep.subr.bf16.mxu0 0
      %2814 = vmatpush1.bf16.msra.mxu0 %v2766
      %2815 = vmatprep.mubr.bf16.mxu0 %v2720
      %2816 = vmatmul.mubr.bf16.gmra.mrb[0].mxu0 %v2719
      %v2817 = vpop.f32.mrb[0].mxu0
      %v2818 = vadd.f32 0.0, %v2817
      %v2819 = vpop.f32.mrb[0].mxu0
      %v2820 = vpop.f32.mrb[0].mxu0
      %v2821 = vadd.f32 0.0, %v2820
      %v2822 = vpop.f32.mrb[0].mxu0
      %2823 = vmatprep.mubr.bf16.mxu0 %v2722
      %2824 = vmatmul.mubr.bf16.gmra.mrb[0].mxu0 %v2721
      %v2825 = vpop.f32.mrb[0].mxu0
      %v2826 = vadd.f32 0.0, %v2825
      %v2827 = vpop.f32.mrb[0].mxu0
      %v2828 = vpop.f32.mrb[0].mxu0
      %v2829 = vadd.f32 0.0, %v2828
      %v2830 = vpop.f32.mrb[0].mxu0
      %2831 = vmatprep.mubr.bf16.mxu0 %v2724
      %2832 = vmatmul.mubr.bf16.gmra.mrb[0].mxu0 %v2723
      %v2833 = vpop.f32.mrb[0].mxu0
      %v2834 = vadd.f32 0.0, %v2833
      %v2835 = vpop.f32.mrb[0].mxu0
      %v2836 = vpop.f32.mrb[0].mxu0
      %v2837 = vadd.f32 0.0, %v2836
      %v2838 = vpop.f32.mrb[0].mxu0
      %2839 = vmatprep.mubr.bf16.mxu0 %v2726
      %2840 = vmatmul.mubr.bf16.gmra.mrb[0].mxu0 %v2725
      %v2841 = vpop.f32.mrb[0].mxu0
      %v2842 = vadd.f32 0.0, %v2841
      %v2843 = vpop.f32.mrb[0].mxu0
      %v2844 = vpop.f32.mrb[0].mxu0
      %v2845 = vadd.f32 0.0, %v2844
      %v2846 = vpop.f32.mrb[0].mxu0
      %2847 = vmatprep.mubr.bf16.mxu0 %v2728
      %2848 = vmatmul.mubr.bf16.gmra.mrb[0].mxu0 %v2727
      %v2849 = vpop.f32.mrb[0].mxu0
      %v2850 = vadd.f32 0.0, %v2849
      %v2851 = vpop.f32.mrb[0].mxu0
      %v2852 = vpop.f32.mrb[0].mxu0
      %v2853 = vadd.f32 0.0, %v2852
      %v2854 = vpop.f32.mrb[0].mxu0
      %2855 = vmatprep.mubr.bf16.mxu0 %v2730
      %2856 = vmatmul.mubr.bf16.gmra.mrb[0].mxu0 %v2729
      %v2857 = vpop.f32.mrb[0].mxu0
      %v2858 = vadd.f32 0.0, %v2857
      %v2859 = vpop.f32.mrb[0].mxu0
      %v2860 = vpop.f32.mrb[0].mxu0
      %v2861 = vadd.f32 0.0, %v2860
      %v2862 = vpop.f32.mrb[0].mxu0
      %2863 = vmatprep.mubr.bf16.mxu0 %v2732
      %2864 = vmatmul.mubr.bf16.gmra.mrb[0].mxu0 %v2731
      %v2865 = vpop.f32.mrb[0].mxu0
      %v2866 = vadd.f32 0.0, %v2865
      %v2867 = vpop.f32.mrb[0].mxu0
      %v2868 = vpop.f32.mrb[0].mxu0
      %v2869 = vadd.f32 0.0, %v2868
      %v2870 = vpop.f32.mrb[0].mxu0
      %2871 = vmatprep.mubr.bf16.mxu0 %v2734
      %2872 = vmatmul.mubr.bf16.gmra.mrb[0].mxu0 %v2733
      %v2873 = vpop.f32.mrb[0].mxu0
      %v2874 = vadd.f32 0.0, %v2873
      %v2875 = vpop.f32.mrb[0].mxu0
      %v2876 = vpop.f32.mrb[0].mxu0
      %v2877 = vadd.f32 0.0, %v2876
      %v2878 = vpop.f32.mrb[0].mxu0
      %2879 = vdwg.mxu0
      %v2880 = vrcp.pop %v2673
      %v2881 = vrcp.pop %v2676
      %v2882 = vrcp.pop %v2679
      %v2883 = vrcp.pop %v2682
      %v2884 = vrcp.pop %v2685
      %v2885 = vrcp.pop %v2688
      %v2886 = vrcp.pop %v2691
      %v2887 = vrcp.pop %v2694
      %v2888 = vrcp.pop %v2697
      %v2889 = vrcp.pop %v2700
      %v2890 = vrcp.pop %v2703
      %v2891 = vrcp.pop %v2706
      %v2892 = vrcp.pop %v2709
      %v2893 = vrcp.pop %v2712
      %v2894 = vrcp.pop %v2715
      %v2895 = vrcp.pop %v2718
      %v2896 = vmul.f32 %v2818, %v2880
      %v2897 = vmul.f32 %v2821, %v2881
      %v2898 = vmul.f32 %v2826, %v2882
      %v2899 = vmul.f32 %v2829, %v2883
      %v2900 = vmul.f32 %v2834, %v2884
      %v2901 = vmul.f32 %v2837, %v2885
      %v2902 = vmul.f32 %v2842, %v2886
      %v2903 = vmul.f32 %v2845, %v2887
      %v2904 = vmul.f32 %v2850, %v2888
      %v2905 = vmul.f32 %v2853, %v2889
      %v2906 = vmul.f32 %v2858, %v2890
      %v2907 = vmul.f32 %v2861, %v2891
      %v2908 = vmul.f32 %v2866, %v2892
      %v2909 = vmul.f32 %v2869, %v2893
      %v2910 = vmul.f32 %v2874, %v2894
      %v2911 = vmul.f32 %v2877, %v2895
      %2912 = vrot.lane.b32.xlu0 %v1105, 32
      %v2913 = vpop.permute.xlu0 %2912
      %2914 = vrot.lane.b32.xlu0 %v1106, 32
      %v2915 = vpop.permute.xlu0 %2914
      %2916 = vrot.lane.b32.xlu0 %v1107, 32
      %v2917 = vpop.permute.xlu0 %2916
      %2918 = vrot.lane.b32.xlu0 %v1108, 32
      %v2919 = vpop.permute.xlu0 %2918
      %2920 = vrot.lane.b32.xlu0 %v1109, 32
      %v2921 = vpop.permute.xlu0 %2920
      %2922 = vrot.lane.b32.xlu0 %v1110, 32
      %v2923 = vpop.permute.xlu0 %2922
      %2924 = vrot.lane.b32.xlu0 %v1111, 32
      %v2925 = vpop.permute.xlu0 %2924
      %2926 = vrot.lane.b32.xlu0 %v1112, 32
      %v2927 = vpop.permute.xlu0 %2926
      %2928 = vrot.lane.b32.xlu0 %v848, 32
      %v2929 = vpop.permute.xlu0 %2928
      %2930 = vrot.lane.b32.xlu0 %v849, 32
      %v2931 = vpop.permute.xlu0 %2930
      %2932 = vrot.lane.b32.xlu0 %v850, 32
      %v2933 = vpop.permute.xlu0 %2932
      %2934 = vrot.lane.b32.xlu0 %v851, 32
      %v2935 = vpop.permute.xlu0 %2934
      %2936 = vrot.lane.b32.xlu0 %v852, 32
      %v2937 = vpop.permute.xlu0 %2936
      %2938 = vrot.lane.b32.xlu0 %v853, 32
      %v2939 = vpop.permute.xlu0 %2938
      %2940 = vrot.lane.b32.xlu0 %v854, 32
      %v2941 = vpop.permute.xlu0 %2940
      %2942 = vrot.lane.b32.xlu0 %v855, 32
      %v2943 = vpop.permute.xlu0 %2942
      %2944 = vrot.lane.b32.xlu0 %v856, 32
      %v2945 = vpop.permute.xlu0 %2944
      %2946 = vrot.lane.b32.xlu0 %v857, 32
      %v2947 = vpop.permute.xlu0 %2946
      %2948 = vrot.lane.b32.xlu0 %v858, 32
      %v2949 = vpop.permute.xlu0 %2948
      %2950 = vrot.lane.b32.xlu0 %v859, 32
      %v2951 = vpop.permute.xlu0 %2950
      %2952 = vrot.lane.b32.xlu0 %v860, 32
      %v2953 = vpop.permute.xlu0 %2952
      %2954 = vrot.lane.b32.xlu0 %v861, 32
      %v2955 = vpop.permute.xlu0 %2954
      %2956 = vrot.lane.b32.xlu0 %v862, 32
      %v2957 = vpop.permute.xlu0 %2956
      %2958 = vrot.lane.b32.xlu0 %v863, 32
      %v2959 = vpop.permute.xlu0 %2958
      %v2961 = vsel %vm1113, %v2913, 0
      %v2964 = vsel %vm1113, %v2915, 0
      %v2967 = vsel %vm1113, %v2917, 0
      %v2970 = vsel %vm1113, %v2919, 0
      %v2973 = vsel %vm1113, %v2921, 0
      %v2976 = vsel %vm1113, %v2923, 0
      %v2979 = vsel %vm1113, %v2925, 0
      %v2982 = vsel %vm1113, %v2927, 0
      %v2985 = vsel %vm1113, %v2929, 0
      %v2988 = vsel %vm1113, %v2931, 0
      %v2991 = vsel %vm1113, %v2933, 0
      %v2994 = vsel %vm1113, %v2935, 0
      %v2997 = vsel %vm1113, %v2937, 0
      %v3000 = vsel %vm1113, %v2939, 0
      %v3003 = vsel %vm1113, %v2941, 0
      %v3006 = vsel %vm1113, %v2943, 0
      %v3009 = vsel %vm1113, %v2945, 0
      %v3012 = vsel %vm1113, %v2947, 0
      %v3015 = vsel %vm1113, %v2949, 0
      %v3018 = vsel %vm1113, %v2951, 0
      %v3021 = vsel %vm1113, %v2953, 0
      %v3024 = vsel %vm1113, %v2955, 0
      %v3027 = vsel %vm1113, %v2957, 0
      %v3030 = vsel %vm1113, %v2959, 0
      %3032 = vmatprep.subr.bf16.mxu0 0
      %3033 = vmatpush1.bf16.xpose.msra.mxu0 %v2985
      %3034 = vmatprep.subr.bf16.mxu0 0
      %3035 = vmatpush1.bf16.xpose.msra.mxu0 %v2988
      %3036 = vmatprep.subr.bf16.mxu0 0
      %3037 = vmatpush1.bf16.xpose.msra.mxu0 %v2991
      %3038 = vmatprep.subr.bf16.mxu0 0
      %3039 = vmatpush1.bf16.xpose.msra.mxu0 %v2994
      %3040 = vmatprep.subr.bf16.mxu0 0
      %3041 = vmatpush1.bf16.xpose.msra.mxu0 %v2997
      %3042 = vmatprep.subr.bf16.mxu0 0
      %3043 = vmatpush1.bf16.xpose.msra.mxu0 %v3000
      %3044 = vmatprep.subr.bf16.mxu0 0
      %3045 = vmatpush1.bf16.xpose.msra.mxu0 %v3003
      %3046 = vmatprep.subr.bf16.mxu0 0
      %3047 = vmatpush1.bf16.xpose.msra.mxu0 %v3006
      %3048 = vmatprep.subr.bf16.mxu0 0
      %3049 = vmatpush1.bf16.xpose.msra.mxu0 %v3009
      %3050 = vmatprep.subr.bf16.mxu0 0
      %3051 = vmatpush1.bf16.xpose.msra.mxu0 %v3012
      %3052 = vmatprep.subr.bf16.mxu0 0
      %3053 = vmatpush1.bf16.xpose.msra.mxu0 %v3015
      %3054 = vmatprep.subr.bf16.mxu0 0
      %3055 = vmatpush1.bf16.xpose.msra.mxu0 %v3018
      %3056 = vmatprep.subr.bf16.mxu0 0
      %3057 = vmatpush1.bf16.xpose.msra.mxu0 %v3021
      %3058 = vmatprep.subr.bf16.mxu0 0
      %3059 = vmatpush1.bf16.xpose.msra.mxu0 %v3024
      %3060 = vmatprep.subr.bf16.mxu0 0
      %3061 = vmatpush1.bf16.xpose.msra.mxu0 %v3027
      %3062 = vmatprep.subr.bf16.mxu0 0
      %3063 = vmatpush1.bf16.xpose.msra.mxu0 %v3030
      %3064 = vmatprep.mubr.bf16.mxu0 0
      %3065 = vmatmul.mubr.bf16.gmra.mrb[0].mxu0 %v2961
      %v3066 = vpop.f32.mrb[0].mxu0
      %v3067 = vadd.f32 0.0, %v3066
      %v3068 = vpop.f32.mrb[0].mxu0
      %v3069 = vadd.f32 0.0, %v3068
      %v3070 = vpop.f32.mrb[0].mxu0
      %v3071 = vadd.f32 0.0, %v3070
      %v3072 = vpop.f32.mrb[0].mxu0
      %v3073 = vadd.f32 0.0, %v3072
      %3074 = vmatprep.mubr.bf16.mxu0 0
      %3075 = vmatmul.mubr.bf16.gmra.mrb[0].mxu0 %v2964
      %v3076 = vpop.f32.mrb[0].mxu0
      %v3077 = vadd.f32 0.0, %v3076
      %v3078 = vpop.f32.mrb[0].mxu0
      %v3079 = vadd.f32 0.0, %v3078
      %v3080 = vpop.f32.mrb[0].mxu0
      %v3081 = vadd.f32 0.0, %v3080
      %v3082 = vpop.f32.mrb[0].mxu0
      %v3083 = vadd.f32 0.0, %v3082
      %3084 = vmatprep.mubr.bf16.mxu0 0
      %3085 = vmatmul.mubr.bf16.gmra.mrb[0].mxu0 %v2967
      %v3086 = vpop.f32.mrb[0].mxu0
      %v3087 = vadd.f32 0.0, %v3086
      %v3088 = vpop.f32.mrb[0].mxu0
      %v3089 = vadd.f32 0.0, %v3088
      %v3090 = vpop.f32.mrb[0].mxu0
      %v3091 = vadd.f32 0.0, %v3090
      %v3092 = vpop.f32.mrb[0].mxu0
      %v3093 = vadd.f32 0.0, %v3092
      %3094 = vmatprep.mubr.bf16.mxu0 0
      %3095 = vmatmul.mubr.bf16.gmra.mrb[0].mxu0 %v2970
      %v3096 = vpop.f32.mrb[0].mxu0
      %v3097 = vadd.f32 0.0, %v3096
      %v3098 = vpop.f32.mrb[0].mxu0
      %v3099 = vadd.f32 0.0, %v3098
      %v3100 = vpop.f32.mrb[0].mxu0
      %v3101 = vadd.f32 0.0, %v3100
      %v3102 = vpop.f32.mrb[0].mxu0
      %v3103 = vadd.f32 0.0, %v3102
      %3104 = vmatprep.mubr.bf16.mxu0 0
      %3105 = vmatmul.mubr.bf16.gmra.mrb[0].mxu0 %v2973
      %v3106 = vpop.f32.mrb[0].mxu0
      %v3107 = vadd.f32 0.0, %v3106
      %v3108 = vpop.f32.mrb[0].mxu0
      %v3109 = vadd.f32 0.0, %v3108
      %v3110 = vpop.f32.mrb[0].mxu0
      %v3111 = vadd.f32 0.0, %v3110
      %v3112 = vpop.f32.mrb[0].mxu0
      %v3113 = vadd.f32 0.0, %v3112
      %3114 = vmatprep.mubr.bf16.mxu0 0
      %3115 = vmatmul.mubr.bf16.gmra.mrb[0].mxu0 %v2976
      %v3116 = vpop.f32.mrb[0].mxu0
      %v3117 = vadd.f32 0.0, %v3116
      %v3118 = vpop.f32.mrb[0].mxu0
      %v3119 = vadd.f32 0.0, %v3118
      %v3120 = vpop.f32.mrb[0].mxu0
      %v3121 = vadd.f32 0.0, %v3120
      %v3122 = vpop.f32.mrb[0].mxu0
      %v3123 = vadd.f32 0.0, %v3122
      %3124 = vmatprep.mubr.bf16.mxu0 0
      %3125 = vmatmul.mubr.bf16.gmra.mrb[0].mxu0 %v2979
      %v3126 = vpop.f32.mrb[0].mxu0
      %v3127 = vadd.f32 0.0, %v3126
      %v3128 = vpop.f32.mrb[0].mxu0
      %v3129 = vadd.f32 0.0, %v3128
      %v3130 = vpop.f32.mrb[0].mxu0
      %v3131 = vadd.f32 0.0, %v3130
      %v3132 = vpop.f32.mrb[0].mxu0
      %v3133 = vadd.f32 0.0, %v3132
      %3134 = vmatprep.mubr.bf16.mxu0 0
      %3135 = vmatmul.mubr.bf16.gmra.mrb[0].mxu0 %v2982
      %v3136 = vpop.f32.mrb[0].mxu0
      %v3137 = vadd.f32 0.0, %v3136
      %v3138 = vpop.f32.mrb[0].mxu0
      %v3139 = vadd.f32 0.0, %v3138
      %v3140 = vpop.f32.mrb[0].mxu0
      %v3141 = vadd.f32 0.0, %v3140
      %v3142 = vpop.f32.mrb[0].mxu0
      %v3143 = vadd.f32 0.0, %v3142
      %3144 = vdwg.mxu0
      %v3145 = vmax.f32 %v3067, %v3069
      %3146 = vmax.xlane.f32.xlu0 %v3145
      %v3147 = vpop.xlane.xlu0 %3146
      %v3148 = vmax.f32 %v3071, %v3073
      %3149 = vmax.xlane.f32.xlu0 %v3148
      %v3150 = vpop.xlane.xlu0 %3149
      %v3151 = vmax.f32 %v3077, %v3079
      %3152 = vmax.xlane.f32.xlu0 %v3151
      %v3153 = vpop.xlane.xlu0 %3152
      %v3154 = vmax.f32 %v3081, %v3083
      %3155 = vmax.xlane.f32.xlu0 %v3154
      %v3156 = vpop.xlane.xlu0 %3155
      %v3157 = vmax.f32 %v3087, %v3089
      %3158 = vmax.xlane.f32.xlu0 %v3157
      %v3159 = vpop.xlane.xlu0 %3158
      %v3160 = vmax.f32 %v3091, %v3093
      %3161 = vmax.xlane.f32.xlu0 %v3160
      %v3162 = vpop.xlane.xlu0 %3161
      %v3163 = vmax.f32 %v3097, %v3099
      %3164 = vmax.xlane.f32.xlu0 %v3163
      %v3165 = vpop.xlane.xlu0 %3164
      %v3166 = vmax.f32 %v3101, %v3103
      %3167 = vmax.xlane.f32.xlu0 %v3166
      %v3168 = vpop.xlane.xlu0 %3167
      %v3169 = vmax.f32 %v3107, %v3109
      %3170 = vmax.xlane.f32.xlu0 %v3169
      %v3171 = vpop.xlane.xlu0 %3170
      %v3172 = vmax.f32 %v3111, %v3113
      %3173 = vmax.xlane.f32.xlu0 %v3172
      %v3174 = vpop.xlane.xlu0 %3173
      %v3175 = vmax.f32 %v3117, %v3119
      %3176 = vmax.xlane.f32.xlu0 %v3175
      %v3177 = vpop.xlane.xlu0 %3176
      %v3178 = vmax.f32 %v3121, %v3123
      %3179 = vmax.xlane.f32.xlu0 %v3178
      %v3180 = vpop.xlane.xlu0 %3179
      %v3181 = vmax.f32 %v3127, %v3129
      %3182 = vmax.xlane.f32.xlu0 %v3181
      %v3183 = vpop.xlane.xlu0 %3182
      %v3184 = vmax.f32 %v3131, %v3133
      %3185 = vmax.xlane.f32.xlu0 %v3184
      %v3186 = vpop.xlane.xlu0 %3185
      %v3187 = vmax.f32 %v3137, %v3139
      %3188 = vmax.xlane.f32.xlu0 %v3187
      %v3189 = vpop.xlane.xlu0 %3188
      %v3190 = vmax.f32 %v3141, %v3143
      %3191 = vmax.xlane.f32.xlu0 %v3190
      %v3192 = vpop.xlane.xlu0 %3191
      %v3193 = vsub.f32 %v3067, %v3147
      %v3194 = vsub.f32 %v3069, %v3147
      %v3195 = vsub.f32 %v3071, %v3150
      %v3196 = vsub.f32 %v3073, %v3150
      %v3197 = vsub.f32 %v3077, %v3153
      %v3198 = vsub.f32 %v3079, %v3153
      %v3199 = vsub.f32 %v3081, %v3156
      %v3200 = vsub.f32 %v3083, %v3156
      %v3201 = vsub.f32 %v3087, %v3159
      %v3202 = vsub.f32 %v3089, %v3159
      %v3203 = vsub.f32 %v3091, %v3162
      %v3204 = vsub.f32 %v3093, %v3162
      %v3205 = vsub.f32 %v3097, %v3165
      %v3206 = vsub.f32 %v3099, %v3165
      %v3207 = vsub.f32 %v3101, %v3168
      %v3208 = vsub.f32 %v3103, %v3168
      %v3209 = vsub.f32 %v3107, %v3171
      %v3210 = vsub.f32 %v3109, %v3171
      %v3211 = vsub.f32 %v3111, %v3174
      %v3212 = vsub.f32 %v3113, %v3174
      %v3213 = vsub.f32 %v3117, %v3177
      %v3214 = vsub.f32 %v3119, %v3177
      %v3215 = vsub.f32 %v3121, %v3180
      %v3216 = vsub.f32 %v3123, %v3180
      %v3217 = vsub.f32 %v3127, %v3183
      %v3218 = vsub.f32 %v3129, %v3183
      %v3219 = vsub.f32 %v3131, %v3186
      %v3220 = vsub.f32 %v3133, %v3186
      %v3221 = vsub.f32 %v3137, %v3189
      %v3222 = vsub.f32 %v3139, %v3189
      %v3223 = vsub.f32 %v3141, %v3192
      %v3224 = vsub.f32 %v3143, %v3192
      %v3225 = vmul.f32 %v3193, 1.442695
      %v3226 = vpow.pop %v3225
      %v3227 = vmul.f32 %v3194, 1.442695
      %v3228 = vpow.pop %v3227
      %v3229 = vmul.f32 %v3195, 1.442695
      %v3230 = vpow.pop %v3229
      %v3231 = vmul.f32 %v3196, 1.442695
      %v3232 = vpow.pop %v3231
      %v3233 = vmul.f32 %v3197, 1.442695
      %v3234 = vpow.pop %v3233
      %v3235 = vmul.f32 %v3198, 1.442695
      %v3236 = vpow.pop %v3235
      %v3237 = vmul.f32 %v3199, 1.442695
      %v3238 = vpow.pop %v3237
      %v3239 = vmul.f32 %v3200, 1.442695
      %v3240 = vpow.pop %v3239
      %v3241 = vmul.f32 %v3201, 1.442695
      %v3242 = vpow.pop %v3241
      %v3243 = vmul.f32 %v3202, 1.442695
      %v3244 = vpow.pop %v3243
      %v3245 = vmul.f32 %v3203, 1.442695
      %v3246 = vpow.pop %v3245
      %v3247 = vmul.f32 %v3204, 1.442695
      %v3248 = vpow.pop %v3247
      %v3249 = vmul.f32 %v3205, 1.442695
      %v3250 = vpow.pop %v3249
      %v3251 = vmul.f32 %v3206, 1.442695
      %v3252 = vpow.pop %v3251
      %v3253 = vmul.f32 %v3207, 1.442695
      %v3254 = vpow.pop %v3253
      %v3255 = vmul.f32 %v3208, 1.442695
      %v3256 = vpow.pop %v3255
      %v3257 = vmul.f32 %v3209, 1.442695
      %v3258 = vpow.pop %v3257
      %v3259 = vmul.f32 %v3210, 1.442695
      %v3260 = vpow.pop %v3259
      %v3261 = vmul.f32 %v3211, 1.442695
      %v3262 = vpow.pop %v3261
      %v3263 = vmul.f32 %v3212, 1.442695
      %v3264 = vpow.pop %v3263
      %v3265 = vmul.f32 %v3213, 1.442695
      %v3266 = vpow.pop %v3265
      %v3267 = vmul.f32 %v3214, 1.442695
      %v3268 = vpow.pop %v3267
      %v3269 = vmul.f32 %v3215, 1.442695
      %v3270 = vpow.pop %v3269
      %v3271 = vmul.f32 %v3216, 1.442695
      %v3272 = vpow.pop %v3271
      %v3273 = vmul.f32 %v3217, 1.442695
      %v3274 = vpow.pop %v3273
      %v3275 = vmul.f32 %v3218, 1.442695
      %v3276 = vpow.pop %v3275
      %v3277 = vmul.f32 %v3219, 1.442695
      %v3278 = vpow.pop %v3277
      %v3279 = vmul.f32 %v3220, 1.442695
      %v3280 = vpow.pop %v3279
      %v3281 = vmul.f32 %v3221, 1.442695
      %v3282 = vpow.pop %v3281
      %v3283 = vmul.f32 %v3222, 1.442695
      %v3284 = vpow.pop %v3283
      %v3285 = vmul.f32 %v3223, 1.442695
      %v3286 = vpow.pop %v3285
      %v3287 = vmul.f32 %v3224, 1.442695
      %v3288 = vpow.pop %v3287
      %v3289 = vadd.f32 %v3226, %v3228
      %3290 = vadd.xlane.f32.xlu0 %v3289
      %v3291 = vpop.xlane.xlu0 %3290
      %v3292 = vadd.f32 %v3230, %v3232
      %3293 = vadd.xlane.f32.xlu0 %v3292
      %v3294 = vpop.xlane.xlu0 %3293
      %v3295 = vadd.f32 %v3234, %v3236
      %3296 = vadd.xlane.f32.xlu0 %v3295
      %v3297 = vpop.xlane.xlu0 %3296
      %v3298 = vadd.f32 %v3238, %v3240
      %3299 = vadd.xlane.f32.xlu0 %v3298
      %v3300 = vpop.xlane.xlu0 %3299
      %v3301 = vadd.f32 %v3242, %v3244
      %3302 = vadd.xlane.f32.xlu0 %v3301
      %v3303 = vpop.xlane.xlu0 %3302
      %v3304 = vadd.f32 %v3246, %v3248
      %3305 = vadd.xlane.f32.xlu0 %v3304
      %v3306 = vpop.xlane.xlu0 %3305
      %v3307 = vadd.f32 %v3250, %v3252
      %3308 = vadd.xlane.f32.xlu0 %v3307
      %v3309 = vpop.xlane.xlu0 %3308
      %v3310 = vadd.f32 %v3254, %v3256
      %3311 = vadd.xlane.f32.xlu0 %v3310
      %v3312 = vpop.xlane.xlu0 %3311
      %v3313 = vadd.f32 %v3258, %v3260
      %3314 = vadd.xlane.f32.xlu0 %v3313
      %v3315 = vpop.xlane.xlu0 %3314
      %v3316 = vadd.f32 %v3262, %v3264
      %3317 = vadd.xlane.f32.xlu0 %v3316
      %v3318 = vpop.xlane.xlu0 %3317
      %v3319 = vadd.f32 %v3266, %v3268
      %3320 = vadd.xlane.f32.xlu0 %v3319
      %v3321 = vpop.xlane.xlu0 %3320
      %v3322 = vadd.f32 %v3270, %v3272
      %3323 = vadd.xlane.f32.xlu0 %v3322
      %v3324 = vpop.xlane.xlu0 %3323
      %v3325 = vadd.f32 %v3274, %v3276
      %3326 = vadd.xlane.f32.xlu0 %v3325
      %v3327 = vpop.xlane.xlu0 %3326
      %v3328 = vadd.f32 %v3278, %v3280
      %3329 = vadd.xlane.f32.xlu0 %v3328
      %v3330 = vpop.xlane.xlu0 %3329
      %v3331 = vadd.f32 %v3282, %v3284
      %3332 = vadd.xlane.f32.xlu0 %v3331
      %v3333 = vpop.xlane.xlu0 %3332
      %v3334 = vadd.f32 %v3286, %v3288
      %3335 = vadd.xlane.f32.xlu0 %v3334
      %v3336 = vpop.xlane.xlu0 %3335
      %v3337 = vpack.c.bf16 %v3230, %v3226
      %v3338 = vpack.c.bf16 %v3232, %v3228
      %v3339 = vpack.c.bf16 %v3238, %v3234
      %v3340 = vpack.c.bf16 %v3240, %v3236
      %v3341 = vpack.c.bf16 %v3246, %v3242
      %v3342 = vpack.c.bf16 %v3248, %v3244
      %v3343 = vpack.c.bf16 %v3254, %v3250
      %v3344 = vpack.c.bf16 %v3256, %v3252
      %v3345 = vpack.c.bf16 %v3262, %v3258
      %v3346 = vpack.c.bf16 %v3264, %v3260
      %v3347 = vpack.c.bf16 %v3270, %v3266
      %v3348 = vpack.c.bf16 %v3272, %v3268
      %v3349 = vpack.c.bf16 %v3278, %v3274
      %v3350 = vpack.c.bf16 %v3280, %v3276
      %v3351 = vpack.c.bf16 %v3286, %v3282
      %v3352 = vpack.c.bf16 %v3288, %v3284
      %3353 = vrot.lane.b32.xlu0 %v1089, 32
      %v3354 = vpop.permute.xlu0 %3353
      %3355 = vrot.lane.b32.xlu0 %v1090, 32
      %v3356 = vpop.permute.xlu0 %3355
      %3357 = vrot.lane.b32.xlu0 %v1091, 32
      %v3358 = vpop.permute.xlu0 %3357
      %3359 = vrot.lane.b32.xlu0 %v1092, 32
      %v3360 = vpop.permute.xlu0 %3359
      %3361 = vrot.lane.b32.xlu0 %v1093, 32
      %v3362 = vpop.permute.xlu0 %3361
      %3363 = vrot.lane.b32.xlu0 %v1094, 32
      %v3364 = vpop.permute.xlu0 %3363
      %3365 = vrot.lane.b32.xlu0 %v1095, 32
      %v3366 = vpop.permute.xlu0 %3365
      %3367 = vrot.lane.b32.xlu0 %v1096, 32
      %v3368 = vpop.permute.xlu0 %3367
      %3369 = vrot.lane.b32.xlu0 %v1097, 32
      %v3370 = vpop.permute.xlu0 %3369
      %3371 = vrot.lane.b32.xlu0 %v1098, 32
      %v3372 = vpop.permute.xlu0 %3371
      %3373 = vrot.lane.b32.xlu0 %v1099, 32
      %v3374 = vpop.permute.xlu0 %3373
      %3375 = vrot.lane.b32.xlu0 %v1100, 32
      %v3376 = vpop.permute.xlu0 %3375
      %3377 = vrot.lane.b32.xlu0 %v1101, 32
      %v3378 = vpop.permute.xlu0 %3377
      %3379 = vrot.lane.b32.xlu0 %v1102, 32
      %v3380 = vpop.permute.xlu0 %3379
      %3381 = vrot.lane.b32.xlu0 %v1103, 32
      %v3382 = vpop.permute.xlu0 %3381
      %3383 = vrot.lane.b32.xlu0 %v1104, 32
      %v3384 = vpop.permute.xlu0 %3383
      %3401 = vmatprep.subr.bf16.mxu0 0
      %3402 = vmatpush1.bf16.msra.mxu0 %v3354
      %3403 = vmatprep.subr.bf16.mxu0 0
      %3404 = vmatpush1.bf16.msra.mxu0 %v3356
      %3405 = vmatprep.subr.bf16.mxu0 0
      %3406 = vmatpush1.bf16.msra.mxu0 %v3358
      %3407 = vmatprep.subr.bf16.mxu0 0
      %3408 = vmatpush1.bf16.msra.mxu0 %v3360
      %3409 = vmatprep.subr.bf16.mxu0 0
      %3410 = vmatpush1.bf16.msra.mxu0 %v3362
      %3411 = vmatprep.subr.bf16.mxu0 0
      %3412 = vmatpush1.bf16.msra.mxu0 %v3364
      %3413 = vmatprep.subr.bf16.mxu0 0
      %3414 = vmatpush1.bf16.msra.mxu0 %v3366
      %3415 = vmatprep.subr.bf16.mxu0 0
      %3416 = vmatpush1.bf16.msra.mxu0 %v3368
      %3417 = vmatprep.subr.bf16.mxu0 0
      %3418 = vmatpush1.bf16.msra.mxu0 %v3370
      %3419 = vmatprep.subr.bf16.mxu0 0
      %3420 = vmatpush1.bf16.msra.mxu0 %v3372
      %3421 = vmatprep.subr.bf16.mxu0 0
      %3422 = vmatpush1.bf16.msra.mxu0 %v3374
      %3423 = vmatprep.subr.bf16.mxu0 0
      %3424 = vmatpush1.bf16.msra.mxu0 %v3376
      %3425 = vmatprep.subr.bf16.mxu0 0
      %3426 = vmatpush1.bf16.msra.mxu0 %v3378
      %3427 = vmatprep.subr.bf16.mxu0 0
      %3428 = vmatpush1.bf16.msra.mxu0 %v3380
      %3429 = vmatprep.subr.bf16.mxu0 0
      %3430 = vmatpush1.bf16.msra.mxu0 %v3382
      %3431 = vmatprep.subr.bf16.mxu0 0
      %3432 = vmatpush1.bf16.msra.mxu0 %v3384
      %3433 = vmatprep.mubr.bf16.mxu0 %v3338
      %3434 = vmatmul.mubr.bf16.gmra.mrb[0].mxu0 %v3337
      %v3435 = vpop.f32.mrb[0].mxu0
      %v3436 = vadd.f32 0.0, %v3435
      %v3437 = vpop.f32.mrb[0].mxu0
      %v3438 = vpop.f32.mrb[0].mxu0
      %v3439 = vadd.f32 0.0, %v3438
      %v3440 = vpop.f32.mrb[0].mxu0
      %3441 = vmatprep.mubr.bf16.mxu0 %v3340
      %3442 = vmatmul.mubr.bf16.gmra.mrb[0].mxu0 %v3339
      %v3443 = vpop.f32.mrb[0].mxu0
      %v3444 = vadd.f32 0.0, %v3443
      %v3445 = vpop.f32.mrb[0].mxu0
      %v3446 = vpop.f32.mrb[0].mxu0
      %v3447 = vadd.f32 0.0, %v3446
      %v3448 = vpop.f32.mrb[0].mxu0
      %3449 = vmatprep.mubr.bf16.mxu0 %v3342
      %3450 = vmatmul.mubr.bf16.gmra.mrb[0].mxu0 %v3341
      %v3451 = vpop.f32.mrb[0].mxu0
      %v3452 = vadd.f32 0.0, %v3451
      %v3453 = vpop.f32.mrb[0].mxu0
      %v3454 = vpop.f32.mrb[0].mxu0
      %v3455 = vadd.f32 0.0, %v3454
      %v3456 = vpop.f32.mrb[0].mxu0
      %3457 = vmatprep.mubr.bf16.mxu0 %v3344
      %3458 = vmatmul.mubr.bf16.gmra.mrb[0].mxu0 %v3343
      %v3459 = vpop.f32.mrb[0].mxu0
      %v3460 = vadd.f32 0.0, %v3459
      %v3461 = vpop.f32.mrb[0].mxu0
      %v3462 = vpop.f32.mrb[0].mxu0
      %v3463 = vadd.f32 0.0, %v3462
      %v3464 = vpop.f32.mrb[0].mxu0
      %3465 = vmatprep.mubr.bf16.mxu0 %v3346
      %3466 = vmatmul.mubr.bf16.gmra.mrb[0].mxu0 %v3345
      %v3467 = vpop.f32.mrb[0].mxu0
      %v3468 = vadd.f32 0.0, %v3467
      %v3469 = vpop.f32.mrb[0].mxu0
      %v3470 = vpop.f32.mrb[0].mxu0
      %v3471 = vadd.f32 0.0, %v3470
      %v3472 = vpop.f32.mrb[0].mxu0
      %3473 = vmatprep.mubr.bf16.mxu0 %v3348
      %3474 = vmatmul.mubr.bf16.gmra.mrb[0].mxu0 %v3347
      %v3475 = vpop.f32.mrb[0].mxu0
      %v3476 = vadd.f32 0.0, %v3475
      %v3477 = vpop.f32.mrb[0].mxu0
      %v3478 = vpop.f32.mrb[0].mxu0
      %v3479 = vadd.f32 0.0, %v3478
      %v3480 = vpop.f32.mrb[0].mxu0
      %3481 = vmatprep.mubr.bf16.mxu0 %v3350
      %3482 = vmatmul.mubr.bf16.gmra.mrb[0].mxu0 %v3349
      %v3483 = vpop.f32.mrb[0].mxu0
      %v3484 = vadd.f32 0.0, %v3483
      %v3485 = vpop.f32.mrb[0].mxu0
      %v3486 = vpop.f32.mrb[0].mxu0
      %v3487 = vadd.f32 0.0, %v3486
      %v3488 = vpop.f32.mrb[0].mxu0
      %3489 = vmatprep.mubr.bf16.mxu0 %v3352
      %3490 = vmatmul.mubr.bf16.gmra.mrb[0].mxu0 %v3351
      %v3491 = vpop.f32.mrb[0].mxu0
      %v3492 = vadd.f32 0.0, %v3491
      %v3493 = vpop.f32.mrb[0].mxu0
      %v3494 = vpop.f32.mrb[0].mxu0
      %v3495 = vadd.f32 0.0, %v3494
      %v3496 = vpop.f32.mrb[0].mxu0
      %3497 = vdwg.mxu0
      %v3498 = vrcp.pop %v3291
      %v3499 = vrcp.pop %v3294
      %v3500 = vrcp.pop %v3297
      %v3501 = vrcp.pop %v3300
      %v3502 = vrcp.pop %v3303
      %v3503 = vrcp.pop %v3306
      %v3504 = vrcp.pop %v3309
      %v3505 = vrcp.pop %v3312
      %v3506 = vrcp.pop %v3315
      %v3507 = vrcp.pop %v3318
      %v3508 = vrcp.pop %v3321
      %v3509 = vrcp.pop %v3324
      %v3510 = vrcp.pop %v3327
      %v3511 = vrcp.pop %v3330
      %v3512 = vrcp.pop %v3333
      %v3513 = vrcp.pop %v3336
      %v3514 = vmul.f32 %v3436, %v3498
      %v3515 = vmul.f32 %v3439, %v3499
      %v3516 = vmul.f32 %v3444, %v3500
      %v3517 = vmul.f32 %v3447, %v3501
      %v3518 = vmul.f32 %v3452, %v3502
      %v3519 = vmul.f32 %v3455, %v3503
      %v3520 = vmul.f32 %v3460, %v3504
      %v3521 = vmul.f32 %v3463, %v3505
      %v3522 = vmul.f32 %v3468, %v3506
      %v3523 = vmul.f32 %v3471, %v3507
      %v3524 = vmul.f32 %v3476, %v3508
      %v3525 = vmul.f32 %v3479, %v3509
      %v3526 = vmul.f32 %v3484, %v3510
      %v3527 = vmul.f32 %v3487, %v3511
      %v3528 = vmul.f32 %v3492, %v3512
      %v3529 = vmul.f32 %v3495, %v3513
      %3546 = vrot.lane.b32.xlu0 %v2278, 32
      %v3547 = vpop.permute.xlu0 %3546
      %3548 = vrot.lane.b32.xlu0 %v2279, 32
      %v3549 = vpop.permute.xlu0 %3548
      %3550 = vrot.lane.b32.xlu0 %v2280, 32
      %v3551 = vpop.permute.xlu0 %3550
      %3552 = vrot.lane.b32.xlu0 %v2281, 32
      %v3553 = vpop.permute.xlu0 %3552
      %3554 = vrot.lane.b32.xlu0 %v2282, 32
      %v3555 = vpop.permute.xlu0 %3554
      %3556 = vrot.lane.b32.xlu0 %v2283, 32
      %v3557 = vpop.permute.xlu0 %3556
      %3558 = vrot.lane.b32.xlu0 %v2284, 32
      %v3559 = vpop.permute.xlu0 %3558
      %3560 = vrot.lane.b32.xlu0 %v2285, 32
      %v3561 = vpop.permute.xlu0 %3560
      %3562 = vrot.lane.b32.xlu0 %v2286, 32
      %v3563 = vpop.permute.xlu0 %3562
      %3564 = vrot.lane.b32.xlu0 %v2287, 32
      %v3565 = vpop.permute.xlu0 %3564
      %3566 = vrot.lane.b32.xlu0 %v2288, 32
      %v3567 = vpop.permute.xlu0 %3566
      %3568 = vrot.lane.b32.xlu0 %v2289, 32
      %v3569 = vpop.permute.xlu0 %3568
      %3570 = vrot.lane.b32.xlu0 %v2290, 32
      %v3571 = vpop.permute.xlu0 %3570
      %3572 = vrot.lane.b32.xlu0 %v2291, 32
      %v3573 = vpop.permute.xlu0 %3572
      %3574 = vrot.lane.b32.xlu0 %v2292, 32
      %v3575 = vpop.permute.xlu0 %3574
      %3576 = vrot.lane.b32.xlu0 %v2293, 32
      %v3577 = vpop.permute.xlu0 %3576
      %3610 = vrot.lane.b32.xlu0 %v2896, 64
      %v3611 = vpop.permute.xlu0 %3610
      %3612 = vrot.lane.b32.xlu0 %v2897, 64
      %v3613 = vpop.permute.xlu0 %3612
      %3614 = vrot.lane.b32.xlu0 %v2898, 64
      %v3615 = vpop.permute.xlu0 %3614
      %3616 = vrot.lane.b32.xlu0 %v2899, 64
      %v3617 = vpop.permute.xlu0 %3616
      %3618 = vrot.lane.b32.xlu0 %v2900, 64
      %v3619 = vpop.permute.xlu0 %3618
      %3620 = vrot.lane.b32.xlu0 %v2901, 64
      %v3621 = vpop.permute.xlu0 %3620
      %3622 = vrot.lane.b32.xlu0 %v2902, 64
      %v3623 = vpop.permute.xlu0 %3622
      %3624 = vrot.lane.b32.xlu0 %v2903, 64
      %v3625 = vpop.permute.xlu0 %3624
      %3626 = vrot.lane.b32.xlu0 %v2904, 64
      %v3627 = vpop.permute.xlu0 %3626
      %3628 = vrot.lane.b32.xlu0 %v2905, 64
      %v3629 = vpop.permute.xlu0 %3628
      %3630 = vrot.lane.b32.xlu0 %v2906, 64
      %v3631 = vpop.permute.xlu0 %3630
      %3632 = vrot.lane.b32.xlu0 %v2907, 64
      %v3633 = vpop.permute.xlu0 %3632
      %3634 = vrot.lane.b32.xlu0 %v2908, 64
      %v3635 = vpop.permute.xlu0 %3634
      %3636 = vrot.lane.b32.xlu0 %v2909, 64
      %v3637 = vpop.permute.xlu0 %3636
      %3638 = vrot.lane.b32.xlu0 %v2910, 64
      %v3639 = vpop.permute.xlu0 %3638
      %3640 = vrot.lane.b32.xlu0 %v2911, 64
      %v3641 = vpop.permute.xlu0 %3640
      %3674 = vrot.lane.b32.xlu0 %v3514, 96
      %v3675 = vpop.permute.xlu0 %3674
      %3676 = vrot.lane.b32.xlu0 %v3515, 96
      %v3677 = vpop.permute.xlu0 %3676
      %3678 = vrot.lane.b32.xlu0 %v3516, 96
      %v3679 = vpop.permute.xlu0 %3678
      %3680 = vrot.lane.b32.xlu0 %v3517, 96
      %v3681 = vpop.permute.xlu0 %3680
      %3682 = vrot.lane.b32.xlu0 %v3518, 96
      %v3683 = vpop.permute.xlu0 %3682
      %3684 = vrot.lane.b32.xlu0 %v3519, 96
      %v3685 = vpop.permute.xlu0 %3684
      %3686 = vrot.lane.b32.xlu0 %v3520, 96
      %v3687 = vpop.permute.xlu0 %3686
      %3688 = vrot.lane.b32.xlu0 %v3521, 96
      %v3689 = vpop.permute.xlu0 %3688
      %3690 = vrot.lane.b32.xlu0 %v3522, 96
      %v3691 = vpop.permute.xlu0 %3690
      %3692 = vrot.lane.b32.xlu0 %v3523, 96
      %v3693 = vpop.permute.xlu0 %3692
      %3694 = vrot.lane.b32.xlu0 %v3524, 96
      %v3695 = vpop.permute.xlu0 %3694
      %3696 = vrot.lane.b32.xlu0 %v3525, 96
      %v3697 = vpop.permute.xlu0 %3696
      %3698 = vrot.lane.b32.xlu0 %v3526, 96
      %v3699 = vpop.permute.xlu0 %3698
      %3700 = vrot.lane.b32.xlu0 %v3527, 96
      %v3701 = vpop.permute.xlu0 %3700
      %3702 = vrot.lane.b32.xlu0 %v3528, 96
      %v3703 = vpop.permute.xlu0 %3702
      %3704 = vrot.lane.b32.xlu0 %v3529, 96
      %v3705 = vpop.permute.xlu0 %3704
      %v3722 = vsel %vm1113, %v1620, %v3547
      %v3723 = vsel %vm1113, %v1621, %v3549
      %v3724 = vsel %vm1113, %v1622, %v3551
      %v3725 = vsel %vm1113, %v1623, %v3553
      %v3726 = vsel %vm1113, %v1624, %v3555
      %v3727 = vsel %vm1113, %v1625, %v3557
      %v3728 = vsel %vm1113, %v1626, %v3559
      %v3729 = vsel %vm1113, %v1627, %v3561
      %v3730 = vsel %vm1113, %v1628, %v3563
      %v3731 = vsel %vm1113, %v1629, %v3565
      %v3732 = vsel %vm1113, %v1630, %v3567
      %v3733 = vsel %vm1113, %v1631, %v3569
      %v3734 = vsel %vm1113, %v1632, %v3571
      %v3735 = vsel %vm1113, %v1633, %v3573
      %v3736 = vsel %vm1113, %v1634, %v3575
      %v3737 = vsel %vm1113, %v1635, %v3577
      %vm3738 = vcmask 523264
      %v3739 = vsel %vm3738, %v3722, %v3611
      %v3740 = vsel %vm3738, %v3723, %v3613
      %v3741 = vsel %vm3738, %v3724, %v3615
      %v3742 = vsel %vm3738, %v3725, %v3617
      %v3743 = vsel %vm3738, %v3726, %v3619
      %v3744 = vsel %vm3738, %v3727, %v3621
      %v3745 = vsel %vm3738, %v3728, %v3623
      %v3746 = vsel %vm3738, %v3729, %v3625
      %v3747 = vsel %vm3738, %v3730, %v3627
      %v3748 = vsel %vm3738, %v3731, %v3629
      %v3749 = vsel %vm3738, %v3732, %v3631
      %v3750 = vsel %vm3738, %v3733, %v3633
      %v3751 = vsel %vm3738, %v3734, %v3635
      %v3752 = vsel %vm3738, %v3735, %v3637
      %v3753 = vsel %vm3738, %v3736, %v3639
      %v3754 = vsel %vm3738, %v3737, %v3641
      %vm3755 = vcmask 785408
      %v3756 = vsel %vm3755, %v3739, %v3675
      %v3757 = vsel %vm3755, %v3740, %v3677
      %v3758 = vsel %vm3755, %v3741, %v3679
      %v3759 = vsel %vm3755, %v3742, %v3681
      %v3760 = vsel %vm3755, %v3743, %v3683
      %v3761 = vsel %vm3755, %v3744, %v3685
      %v3762 = vsel %vm3755, %v3745, %v3687
      %v3763 = vsel %vm3755, %v3746, %v3689
      %v3764 = vsel %vm3755, %v3747, %v3691
      %v3765 = vsel %vm3755, %v3748, %v3693
      %v3766 = vsel %vm3755, %v3749, %v3695
      %v3767 = vsel %vm3755, %v3750, %v3697
      %v3768 = vsel %vm3755, %v3751, %v3699
      %v3769 = vsel %vm3755, %v3752, %v3701
      %v3770 = vsel %vm3755, %v3753, %v3703
      %v3771 = vsel %vm3755, %v3754, %v3705
      %v3772 = vld [vmem:[%s3] sm:$0xff]
      %v3773 = vld [vmem:[%s4] sm:$0xff]
      %3775 = vset.pattern.permute.xlu0 0
      %3776 = vperm.xlu0 %3775, %v3773
      %v3777 = vpop.permute.xlu0 %3776
      %3779 = vmatprep.subr.mxu0 0.0
      %3780 = vmatpush1.xpose.msra.mxu0 %v3756
      %3781 = vmatprep.subr.mxu0 0.0
      %3782 = vmatpush1.xpose.msra.mxu0 %v3757
      %3783 = vmatprep.subr.mxu0 0.0
      %3784 = vmatpush1.xpose.msra.mxu0 %v3758
      %3785 = vmatprep.subr.mxu0 0.0
      %3786 = vmatpush1.xpose.msra.mxu0 %v3759
      %3787 = vmatprep.subr.mxu0 0.0
      %3788 = vmatpush1.xpose.msra.mxu0 %v3760
      %3789 = vmatprep.subr.mxu0 0.0
      %3790 = vmatpush1.xpose.msra.mxu0 %v3761
      %3791 = vmatprep.subr.mxu0 0.0
      %3792 = vmatpush1.xpose.msra.mxu0 %v3762
      %3793 = vmatprep.subr.mxu0 0.0
      %3794 = vmatpush1.xpose.msra.mxu0 %v3763
      %3795 = vmatprep.subr.mxu0 0.0
      %3796 = vmatpush1.xpose.msra.mxu0 %v3764
      %3797 = vmatprep.subr.mxu0 0.0
      %3798 = vmatpush1.xpose.msra.mxu0 %v3765
      %3799 = vmatprep.subr.mxu0 0.0
      %3800 = vmatpush1.xpose.msra.mxu0 %v3766
      %3801 = vmatprep.subr.mxu0 0.0
      %3802 = vmatpush1.xpose.msra.mxu0 %v3767
      %3803 = vmatprep.subr.mxu0 0.0
      %3804 = vmatpush1.xpose.msra.mxu0 %v3768
      %3805 = vmatprep.subr.mxu0 0.0
      %3806 = vmatpush1.xpose.msra.mxu0 %v3769
      %3807 = vmatprep.subr.mxu0 0.0
      %3808 = vmatpush1.xpose.msra.mxu0 %v3770
      %3809 = vmatprep.subr.mxu0 0.0
      %3810 = vmatpush1.xpose.msra.mxu0 %v3771
      %3811 = vmatprep.subr.mxu0 0.0
      %3812 = vmatpush1.xpose.msra.mxu0 0.0
      %3813 = vmatprep.subr.mxu0 0.0
      %3814 = vmatpush1.xpose.msra.mxu0 0.0
      %3815 = vmatprep.subr.mxu0 0.0
      %3816 = vmatpush1.xpose.msra.mxu0 0.0
      %3817 = vmatprep.subr.mxu0 0.0
      %3818 = vmatpush1.xpose.msra.mxu0 0.0
      %3819 = vmatprep.subr.mxu0 0.0
      %3820 = vmatpush1.xpose.msra.mxu0 0.0
      %3821 = vmatprep.subr.mxu0 0.0
      %3822 = vmatpush1.xpose.msra.mxu0 0.0
      %3823 = vmatprep.subr.mxu0 0.0
      %3824 = vmatpush1.xpose.msra.mxu0 0.0
      %3825 = vmatprep.subr.mxu0 0.0
      %3826 = vmatpush1.xpose.msra.mxu0 0.0
      %3827 = vmatprep.subr.mxu0 0.0
      %3828 = vmatpush1.xpose.msra.mxu0 0.0
      %3829 = vmatprep.subr.mxu0 0.0
      %3830 = vmatpush1.xpose.msra.mxu0 0.0
      %3831 = vmatprep.subr.mxu0 0.0
      %3832 = vmatpush1.xpose.msra.mxu0 0.0
      %3833 = vmatprep.subr.mxu0 0.0
      %3834 = vmatpush1.xpose.msra.mxu0 0.0
      %3835 = vmatprep.subr.mxu0 0.0
      %3836 = vmatpush1.xpose.msra.mxu0 0.0
      %3837 = vmatprep.subr.mxu0 0.0
      %3838 = vmatpush1.xpose.msra.mxu0 0.0
      %3839 = vmatprep.subr.mxu0 0.0
      %3840 = vmatpush1.xpose.msra.mxu0 0.0
      %3841 = vmatprep.subr.mxu0 0.0
      %3842 = vmatpush1.xpose.msra.mxu0 0.0
      %3843 = vmatprep.mubr.f32.mxu0 0.0
      %3844 = vmatmul.mubr.f32.gmra.mrb[0].mxu0 %v3772
      %v3845 = vpop.f32.mrb[0].mxu0
      %v3846 = vadd.f32 %v3777, %v3845
      %v3847 = vpop.f32.mrb[0].mxu0
      %3848 = vdwg.mxu0
      %3849 = vst [vmem:[%s280] sm:$0xff] %v3846
      %p3850 = scmp.lt.s32.totalorder %s20, 1
      %s3851 = scalar_select %p3850, %s20, 1
      %p3852 = scmp.lt.s32.totalorder %s21, 1
      %s3853 = scalar_select %p3852, %s21, 1
      %s3854 = smul.addr %s3851, 2
      %s3855 = sadd.s32 %s3853, %s3854
      %s3856 = smul.addr %s3855, 8
      %s3857 = scalar_lea.vmem %s5, %s3856
      // Predicated region
      $region41: #{attention_forward.1} parent=39 // pred_check
        %p3858 = pneg %p165
      $region42: #{attention_forward.1} parent=39 // pred_check_branch
        %3860 = sbr.rel (%p3858) target = $region44
      $region43: #{attention_forward.1} parent=39 // pred_region
        _
      $region44: #{attention_forward.1} parent=39 // pred_fallthru
        _
    $region40: #{attention_forward.1} parent=5 // pred_fallthru
      _
    %p3861 = scmp.le.s32.totalorder 2, %s11
    // Predicated region
    $region45: #{attention_forward.1} parent=5 // pred_check
      %p3862 = pneg %p3861
    $region46: #{attention_forward.1} parent=5 // pred_check_branch
      %3864 = sbr.rel (%p3862) target = $region48
    $region47: #{attention_forward.1} parent=5 // pred_region
      %s3865 = ssub.s32 %s11, 2
      // Predicated region
      $region49: #{attention_forward.1} parent=47 // pred_check
        %p3866 = pneg %p171
      $region50: #{attention_forward.1} parent=47 // pred_check_branch
        %3868 = sbr.rel (%p3866) target = $region52
      $region51: #{attention_forward.1} parent=47 // pred_region
        %p3869 = scmp.lt.s32.totalorder %s22, 1
        %s3870 = scalar_select %p3869, %s22, 1
        %p3871 = scmp.lt.s32.totalorder %s23, 1
        %s3872 = scalar_select %p3871, %s23, 1
        %s3873 = smul.addr %s3870, 2
        %s3874 = sadd.s32 %s3872, %s3873
        %s3875 = smul.addr %s3874, 8
        %s3876 = scalar_lea.vmem %s5, %s3875
      $region52: #{attention_forward.1} parent=47 // pred_fallthru
        _
    $region48: #{attention_forward.1} parent=5 // pred_fallthru
      _
  $region6: #{attention_forward.1} parent=0 // loop_footer
    %s15 = sadd.s32 1, %s11
  $region7: #{attention_forward.1} parent=0 // loop_footer_branch
    %10 = sbr.rel target = $region3
  $region8: #{attention_forward.1} parent=0 // loop_exit
    _

</llo_original>
